<compile_context>
chip_gen: v7x
topology: tpu7x:2x2x1
jax: 0.10.0
libtpu: 0.0.40
codegen_flags: <defaults>
</compile_context>

<pallas_src>
import functools

import jax
import jax.numpy as jnp
import numpy as np
from jax.experimental import pallas as pl
from jax.experimental.pallas import tpu as pltpu

# ---- Config (SketchRNN decoder hyper-parameters, small synthetic sizes) ----
NZ = 32                 # config.Nz
DEC_HIDDEN = 128        # config.dec_hidden_size
M = 8                   # config.M (GMM components)
DIN = NZ + 5            # LSTM input size (37)
DIN_PAD = 40            # DIN / NZ padded to a sublane multiple for packed slabs
NOUT = 6 * M + 3        # fc_params output size (51)
HEAD_PAD = 128          # lane-dense head slab width (NOUT padded to 128)


def _sigmoid(x):
    # tanh-based sigmoid: runs on the EUP, no exp overflow for large |x|.
    return 0.5 * (jnp.tanh(0.5 * x) + 1.0)


# ----------------- Fused kernel: LSTM recurrence + mixture head -------------
def fused_kernel(zx_ref, win_ref, wrec_ref, bias_ref,
                 y_ref, hid_ref, cell_ref,
                 xw_s, outs_s, *, T, B_pad):
    H = DEC_HIDDEN

    # Unpack the packed bias slab with static lane-aligned slices.
    bhc = bias_ref[:, 0:2 * H]          # (1, 2H)
    b_lstm = bias_ref[:, 2 * H:6 * H]   # (1, 4H)
    bp = bias_ref[:, 6 * H:]            # (1, HEAD_PAD)

    # hidden_cell is None: (h0, c0) = split(tanh(fc_hc(z)), H, dim=1)
    # zx rows [0, B_pad) hold z (zero-padded to DIN_PAD cols; extra whc rows are 0).
    hc = jnp.tanh(
        jnp.dot(zx_ref[0:B_pad, :], win_ref[:, 0:2 * H],
                preferred_element_type=jnp.float32) + bhc)
    h = hc[:, :H]
    c = hc[:, H:]

    # Hoisted input projection for all T steps:
    # one (T*B_pad, DIN_PAD) @ (DIN_PAD, 4H) matmul + bias.
    xw_s[...] = (jnp.dot(zx_ref[B_pad:, :], win_ref[:, 2 * H:],
                         preferred_element_type=jnp.float32) + b_lstm)

    def step(t, carry):
        h, c = carry
        lo = pl.multiple_of(t * B_pad, 8)
        gates = (xw_s[pl.ds(lo, B_pad), :]
                 + jnp.dot(h, wrec_ref[:, 0:4 * H],
                           preferred_element_type=jnp.float32))
        # PyTorch LSTM gate order: i, f, g, o
        i = _sigmoid(gates[:, 0:H])
        f = _sigmoid(gates[:, H:2 * H])
        g = jnp.tanh(gates[:, 2 * H:3 * H])
        o = _sigmoid(gates[:, 3 * H:4 * H])
        c = f * c + i * g
        h = o * jnp.tanh(c)
        outs_s[pl.ds(lo, B_pad), :] = h
        return (h, c)

    h, c = jax.lax.fori_loop(0, T, step, (h, c), unroll=True)

    hid_ref[...] = h
    cell_ref[...] = c

    # Mixture head on all timesteps (training branch), single lane-dense slab.
    # Columns are param-major: [pi | mu_x | mu_y | sigma_x | sigma_y | rho |
    # pen(3) | zero pad to 128].
    y = (jnp.dot(outs_s[...], wrec_ref[:, 4 * H:],
                 preferred_element_type=jnp.float32) + bp)
    col = jax.lax.broadcasted_iota(jnp.int32, y.shape, 1)

    pi_mask = col < M
    exp_mask = (col >= 3 * M) & (col < 5 * M)
    tanh_mask = (col >= 5 * M) & (col < 6 * M)
    q_mask = (col >= 6 * M) & (col < 6 * M + 3)

    # Single shared exp pass: shift = per-group max on pi / q lanes, 0 elsewhere
    # (so sigma lanes get plain exp(y) from the same pass).
    neg_inf = jnp.float32(-jnp.inf)
    mx_pi = jnp.max(jnp.where(pi_mask, y, neg_inf), axis=-1, keepdims=True)
    mx_q = jnp.max(jnp.where(q_mask, y, neg_inf), axis=-1, keepdims=True)
    shift = jnp.where(pi_mask, mx_pi, jnp.where(q_mask, mx_q, 0.0))
    e = jnp.exp(y - shift)
    s_pi = jnp.sum(jnp.where(pi_mask, e, 0.0), axis=-1, keepdims=True)
    s_q = jnp.sum(jnp.where(q_mask, e, 0.0), axis=-1, keepdims=True)

    out = y                                          # mu_x, mu_y lanes: raw
    out = jnp.where(exp_mask, e, out)                # sigma_x, sigma_y: exp(y)
    out = jnp.where(tanh_mask, jnp.tanh(y), out)     # rho_xy
    out = jnp.where(pi_mask, e / s_pi, out)          # pi softmax
    out = jnp.where(q_mask, e / s_q, out)            # q (pen states) softmax
    y_ref[...] = out


# ----------------- Parameter preparation (once, outside jit) ----------------
def prepare_params(params):
    """Pack the 7 parameters into 3 DMA slabs:
      W_in  (DIN_PAD, 6H)        = [ whc (NZ rows, zero-padded) | wih (DIN rows, zero-padded) ]
      W_rec (H, 4H + HEAD_PAD)   = [ whh | wp permuted to param-major + zero pad ]
      bias  (1, 6H + HEAD_PAD)   = [ bhc | b_lstm | bp permuted + zero pad ]
    The fc_params column permutation (PyTorch-interleaved -> param-major) and all
    zero padding happen here, once, outside jit."""
    whc, bhc, wih, whh, b_lstm, wp, bp = params
    H = DEC_HIDDEN
    perm = np.concatenate(
        [6 * np.arange(M) + k for k in range(6)] + [np.arange(6 * M, 6 * M + 3)])

    win = np.zeros((DIN_PAD, 6 * H), np.float32)
    win[:NZ, :2 * H] = np.asarray(whc)
    win[:DIN, 2 * H:] = np.asarray(wih)

    wrec = np.zeros((H, 4 * H + HEAD_PAD), np.float32)
    wrec[:, :4 * H] = np.asarray(whh)
    wrec[:, 4 * H:4 * H + NOUT] = np.asarray(wp)[:, perm]

    bias = np.zeros((1, 6 * H + HEAD_PAD), np.float32)
    bias[0, :2 * H] = np.asarray(bhc)[0]
    bias[0, 2 * H:6 * H] = np.asarray(b_lstm)[0]
    bias[0, 6 * H:6 * H + NOUT] = np.asarray(bp)[perm]

    return (jnp.asarray(win), jnp.asarray(wrec), jnp.asarray(bias))


# ------------------------------- Wrapper ------------------------------------
@functools.partial(jax.jit, static_argnames=("Nmax",))
def decoder_rnn_forward(inputs, z, kparams, Nmax):
    """inputs: (Nmax+1, B, NZ+5)  z: (B, NZ).  kparams from prepare_params().
    Returns the 9-tuple of the PyTorch module (training mode)."""
    T, B, _ = inputs.shape
    H = DEC_HIDDEN
    B_pad = ((B + 7) // 8) * 8  # pad batch to full sublane occupancy
    win, wrec, bias = kparams

    # Pack z (rows 0:B_pad) and the flattened inputs (rows B_pad:) into one
    # activation slab, both zero-padded to DIN_PAD columns (the matching weight
    # rows in the W_in slab are zero, so the matmuls are exact).
    zp = jnp.pad(z, ((0, B_pad - B), (0, DIN_PAD - NZ)))
    xp = jnp.pad(inputs, ((0, 0), (0, B_pad - B), (0, DIN_PAD - DIN)))
    zx = jnp.concatenate([zp, xp.reshape(T * B_pad, DIN_PAD)], axis=0)

    slab, hidden, cell = pl.pallas_call(
        functools.partial(fused_kernel, T=T, B_pad=B_pad),
        out_shape=(jax.ShapeDtypeStruct((T * B_pad, HEAD_PAD), jnp.float32),
                   jax.ShapeDtypeStruct((B_pad, H), jnp.float32),
                   jax.ShapeDtypeStruct((B_pad, H), jnp.float32)),
        grid_spec=pltpu.PrefetchScalarGridSpec(
            num_scalar_prefetch=0,
            grid=(1,),
            in_specs=[
                pl.BlockSpec((B_pad + T * B_pad, DIN_PAD), lambda i: (0, 0)),
                pl.BlockSpec((DIN_PAD, 6 * H), lambda i: (0, 0)),
                pl.BlockSpec((H, 4 * H + HEAD_PAD), lambda i: (0, 0)),
                pl.BlockSpec((1, 6 * H + HEAD_PAD), lambda i: (0, 0)),
            ],
            out_specs=[
                pl.BlockSpec((T * B_pad, HEAD_PAD), lambda i: (0, 0)),
                pl.BlockSpec((B_pad, H), lambda i: (0, 0)),
                pl.BlockSpec((B_pad, H), lambda i: (0, 0)),
            ],
            scratch_shapes=[pltpu.VMEM((T * B_pad, 4 * H), jnp.float32),
                            pltpu.VMEM((T * B_pad, H), jnp.float32)]),
        compiler_params=pltpu.CompilerParams(
            dimension_semantics=("arbitrary",)),
    )(zx, win, wrec, bias)

    # Drop batch padding and split the param-major lane-dense slab.
    y = slab.reshape(T, B_pad, HEAD_PAD)[:, :B, :]
    pi = y[..., 0:M]
    mu_x = y[..., M:2 * M]
    mu_y = y[..., 2 * M:3 * M]
    sigma_x = y[..., 3 * M:4 * M]
    sigma_y = y[..., 4 * M:5 * M]
    rho_xy = y[..., 5 * M:6 * M]
    q = y[..., 6 * M:6 * M + 3]

    hidden = hidden[:B][None]
    cell = cell[:B][None]
    return (pi, mu_x, mu_y, sigma_x, sigma_y, rho_xy, q, hidden, cell)


# -------------------- Pure-JAX reference for validation ---------------------
def decoder_rnn_reference(inputs, z, params, Nmax):
    whc, bhc, wih, whh, b_lstm, wp, bp = params
    H = DEC_HIDDEN
    hc = jnp.tanh(z @ whc + bhc[0])
    h, c = hc[:, :H], hc[:, H:]

    def step(carry, x):
        h, c = carry
        gates = x @ wih + h @ whh + b_lstm[0]
        i = jax.nn.sigmoid(gates[:, 0:H])
        f = jax.nn.sigmoid(gates[:, H:2 * H])
        g = jnp.tanh(gates[:, 2 * H:3 * H])
        o = jax.nn.sigmoid(gates[:, 3 * H:4 * H])
        c = f * c + i * g
        h = o * jnp.tanh(c)
        return (h, c), h

    (h, c), outs = jax.lax.scan(step, (h, c), inputs)
    T, B, _ = inputs.shape
    y = outs.reshape(T * B, H) @ wp + bp            # interleaved layout
    mix = y[:, :6 * M].reshape(-1, M, 6)
    pi = jax.nn.softmax(mix[:, :, 0], axis=-1)
    mu_x, mu_y = mix[:, :, 1], mix[:, :, 2]
    sx, sy = jnp.exp(mix[:, :, 3]), jnp.exp(mix[:, :, 4])
    rho = jnp.tanh(mix[:, :, 5])
    q = jax.nn.softmax(y[:, 6 * M:], axis=-1)
    r = lambda a, d: a.reshape(Nmax + 1, -1, d)
    return (r(pi, M), r(mu_x, M), r(mu_y, M), r(sx, M), r(sy, M), r(rho, M),
            r(q, 3), h[None], c[None])


if __name__ == "__main__":
    batch = 2
    Nmax = 8
    T = Nmax + 1

    key = jax.random.PRNGKey(0)
    ks = jax.random.split(key, 9)
    scale = 0.1
    # Parameters (deterministic synthetic init; shapes follow the module __init__)
    whc = scale * jax.random.normal(ks[0], (NZ, 2 * DEC_HIDDEN), jnp.float32)
    bhc = scale * jax.random.normal(ks[1], (1, 2 * DEC_HIDDEN), jnp.float32)
    wih = scale * jax.random.normal(ks[2], (DIN, 4 * DEC_HIDDEN), jnp.float32)
    whh = scale * jax.random.normal(ks[3], (DEC_HIDDEN, 4 * DEC_HIDDEN), jnp.float32)
    b_lstm = scale * jax.random.normal(ks[4], (1, 4 * DEC_HIDDEN), jnp.float32)  # b_ih + b_hh
    wp = scale * jax.random.normal(ks[5], (DEC_HIDDEN, NOUT), jnp.float32)
    bp = scale * jax.random.normal(ks[6], (NOUT,), jnp.float32)
    params = (whc, bhc, wih, whh, b_lstm, wp, bp)
    kparams = prepare_params(params)   # slab packing + permutation: once, outside jit

    # Inputs: seq-first, like PyTorch LSTM default
    inputs = jax.random.normal(ks[7], (T, batch, DIN), jnp.float32)
    z = jax.random.normal(ks[8], (batch, NZ), jnp.float32)

    outs = decoder_rnn_forward(inputs, z, kparams, Nmax)
    outs = jax.block_until_ready(outs)

    refs = decoder_rnn_reference(inputs, z, params, Nmax)
    for o, r_ in zip(outs, refs):
        np.testing.assert_allclose(np.asarray(o), np.asarray(r_),
                                   rtol=1e-3, atol=1e-3)

    print("KERNEL_OK")
</pallas_src>

<mosaic_0001>
module attributes {stable_mosaic.version = 11 : i64} {
  func.func @fused_kernel(%arg0: i32, %arg1: memref<80x40xf32, #tpu.memory_space<vmem>>, %arg2: memref<40x768xf32, #tpu.memory_space<vmem>>, %arg3: memref<128x640xf32, #tpu.memory_space<vmem>>, %arg4: memref<1x896xf32, #tpu.memory_space<vmem>>, %arg5: memref<72x128xf32, #tpu.memory_space<vmem>>, %arg6: memref<8x128xf32, #tpu.memory_space<vmem>>, %arg7: memref<8x128xf32, #tpu.memory_space<vmem>>, %arg8: memref<72x512xf32, #tpu.memory_space<vmem>>, %arg9: memref<72x128xf32, #tpu.memory_space<vmem>>) attributes {dimension_semantics = [#tpu.dimension_semantics<arbitrary>], iteration_bounds = array<i64: 1>, scalar_prefetch = 0 : i64, scratch_operands = 2 : i64, tpu.core_type = #tpu.core_type<tc>, window_params = [{pipeline_mode = #tpu.pipeline_mode<synchronous>, transform_indices = @transform_0, window_bounds = array<i64: 80, 40>}, {pipeline_mode = #tpu.pipeline_mode<synchronous>, transform_indices = @transform_1, window_bounds = array<i64: 40, 768>}, {pipeline_mode = #tpu.pipeline_mode<synchronous>, transform_indices = @transform_2, window_bounds = array<i64: 128, 640>}, {pipeline_mode = #tpu.pipeline_mode<synchronous>, transform_indices = @transform_3, window_bounds = array<i64: 1, 896>}, {pipeline_mode = #tpu.pipeline_mode<synchronous>, transform_indices = @transform_4, window_bounds = array<i64: 72, 128>}, {pipeline_mode = #tpu.pipeline_mode<synchronous>, transform_indices = @transform_5, window_bounds = array<i64: 8, 128>}, {pipeline_mode = #tpu.pipeline_mode<synchronous>, transform_indices = @transform_6, window_bounds = array<i64: 8, 128>}]} {
    %c0 = arith.constant 0 : index
    %c0_0 = arith.constant 0 : index
    %0 = vector.load %arg4[%c0, %c0_0] : memref<1x896xf32, #tpu.memory_space<vmem>>, vector<1x256xf32>
    %c0_1 = arith.constant 0 : index
    %c256 = arith.constant 256 : index
    %1 = vector.load %arg4[%c0_1, %c256] : memref<1x896xf32, #tpu.memory_space<vmem>>, vector<1x512xf32>
    %c0_2 = arith.constant 0 : index
    %c768 = arith.constant 768 : index
    %2 = vector.load %arg4[%c0_2, %c768] : memref<1x896xf32, #tpu.memory_space<vmem>>, vector<1x128xf32>
    %c0_3 = arith.constant 0 : index
    %c0_4 = arith.constant 0 : index
    %3 = vector.load %arg1[%c0_3, %c0_4] : memref<80x40xf32, #tpu.memory_space<vmem>>, vector<8x40xf32>
    %c0_5 = arith.constant 0 : index
    %c0_6 = arith.constant 0 : index
    %4 = vector.load %arg2[%c0_5, %c0_6] : memref<40x768xf32, #tpu.memory_space<vmem>>, vector<40x256xf32>
    %cst = arith.constant dense<0.000000e+00> : vector<8x256xf32>
    %5 = tpu.matmul %3, %4, %cst {dimension_numbers = #tpu.dot_dimension_numbers<[1], [0], [0], [1], [0, 0, 1, 1], [], []>} : vector<8x40xf32>, vector<40x256xf32>, vector<8x256xf32> -> vector<8x256xf32>
    %6 = vector.broadcast %0 : vector<1x256xf32> to vector<8x256xf32>
    %7 = arith.addf %5, %6 : vector<8x256xf32>
    %8 = math.tanh %7 : vector<8x256xf32>
    %9 = vector.extract_strided_slice %8 {offsets = [0, 0], sizes = [8, 128], strides = [1, 1]} : vector<8x256xf32> to vector<8x128xf32>
    %10 = vector.extract_strided_slice %8 {offsets = [0, 128], sizes = [8, 128], strides = [1, 1]} : vector<8x256xf32> to vector<8x128xf32>
    %c8 = arith.constant 8 : index
    %c0_7 = arith.constant 0 : index
    %11 = vector.load %arg1[%c8, %c0_7] : memref<80x40xf32, #tpu.memory_space<vmem>>, vector<72x40xf32>
    %c0_8 = arith.constant 0 : index
    %c256_9 = arith.constant 256 : index
    %12 = vector.load %arg2[%c0_8, %c256_9] : memref<40x768xf32, #tpu.memory_space<vmem>>, vector<40x512xf32>
    %cst_10 = arith.constant dense<0.000000e+00> : vector<72x512xf32>
    %13 = tpu.matmul %11, %12, %cst_10 {dimension_numbers = #tpu.dot_dimension_numbers<[1], [0], [0], [1], [0, 0, 1, 1], [], []>} : vector<72x40xf32>, vector<40x512xf32>, vector<72x512xf32> -> vector<72x512xf32>
    %14 = vector.broadcast %1 : vector<1x512xf32> to vector<72x512xf32>
    %15 = arith.addf %13, %14 : vector<72x512xf32>
    %c0_11 = arith.constant 0 : index
    %c0_12 = arith.constant 0 : index
    %16 = vector.load %arg8[%c0_11, %c0_12] : memref<72x512xf32, #tpu.memory_space<vmem>>, vector<72x512xf32>
    tpu.vector_store %arg8[%c0_11, %c0_12], %15 {strides = array<i32>} : memref<72x512xf32, #tpu.memory_space<vmem>>, vector<72x512xf32>,
    %c0_i32 = arith.constant 0 : i32
    %c8_i32 = arith.constant 8 : i32
    %17 = arith.muli %c0_i32, %c8_i32 : i32
    %18 = tpu.assume_multiple %17, 8 : i32
    %19 = arith.index_cast %18 : i32 to index
    %c0_13 = arith.constant 0 : index
    %20 = vector.load %arg8[%19, %c0_13] : memref<72x512xf32, #tpu.memory_space<vmem>>, vector<8x512xf32>
    %c0_14 = arith.constant 0 : index
    %c0_15 = arith.constant 0 : index
    %21 = vector.load %arg3[%c0_14, %c0_15] : memref<128x640xf32, #tpu.memory_space<vmem>>, vector<128x512xf32>
    %cst_16 = arith.constant dense<0.000000e+00> : vector<8x512xf32>
    %22 = tpu.matmul %9, %21, %cst_16 {dimension_numbers = #tpu.dot_dimension_numbers<[1], [0], [0], [1], [0, 0, 1, 1], [], []>} : vector<8x128xf32>, vector<128x512xf32>, vector<8x512xf32> -> vector<8x512xf32>
    %23 = arith.addf %20, %22 : vector<8x512xf32>
    %24 = vector.extract_strided_slice %23 {offsets = [0, 0], sizes = [8, 128], strides = [1, 1]} : vector<8x512xf32> to vector<8x128xf32>
    %cst_17 = arith.constant 5.000000e-01 : f32
    %25 = vector.broadcast %cst_17 : f32 to vector<8x128xf32>
    %26 = arith.mulf %25, %24 : vector<8x128xf32>
    %27 = math.tanh %26 : vector<8x128xf32>
    %cst_18 = arith.constant 1.000000e+00 : f32
    %28 = vector.broadcast %cst_18 : f32 to vector<8x128xf32>
    %29 = arith.addf %27, %28 : vector<8x128xf32>
    %cst_19 = arith.constant 5.000000e-01 : f32
    %30 = vector.broadcast %cst_19 : f32 to vector<8x128xf32>
    %31 = arith.mulf %30, %29 : vector<8x128xf32>
    %32 = vector.extract_strided_slice %23 {offsets = [0, 128], sizes = [8, 128], strides = [1, 1]} : vector<8x512xf32> to vector<8x128xf32>
    %cst_20 = arith.constant 5.000000e-01 : f32
    %33 = vector.broadcast %cst_20 : f32 to vector<8x128xf32>
    %34 = arith.mulf %33, %32 : vector<8x128xf32>
    %35 = math.tanh %34 : vector<8x128xf32>
    %cst_21 = arith.constant 1.000000e+00 : f32
    %36 = vector.broadcast %cst_21 : f32 to vector<8x128xf32>
    %37 = arith.addf %35, %36 : vector<8x128xf32>
    %cst_22 = arith.constant 5.000000e-01 : f32
    %38 = vector.broadcast %cst_22 : f32 to vector<8x128xf32>
    %39 = arith.mulf %38, %37 : vector<8x128xf32>
    %40 = vector.extract_strided_slice %23 {offsets = [0, 256], sizes = [8, 128], strides = [1, 1]} : vector<8x512xf32> to vector<8x128xf32>
    %41 = math.tanh %40 : vector<8x128xf32>
    %42 = vector.extract_strided_slice %23 {offsets = [0, 384], sizes = [8, 128], strides = [1, 1]} : vector<8x512xf32> to vector<8x128xf32>
    %cst_23 = arith.constant 5.000000e-01 : f32
    %43 = vector.broadcast %cst_23 : f32 to vector<8x128xf32>
    %44 = arith.mulf %43, %42 : vector<8x128xf32>
    %45 = math.tanh %44 : vector<8x128xf32>
    %cst_24 = arith.constant 1.000000e+00 : f32
    %46 = vector.broadcast %cst_24 : f32 to vector<8x128xf32>
    %47 = arith.addf %45, %46 : vector<8x128xf32>
    %cst_25 = arith.constant 5.000000e-01 : f32
    %48 = vector.broadcast %cst_25 : f32 to vector<8x128xf32>
    %49 = arith.mulf %48, %47 : vector<8x128xf32>
    %50 = arith.mulf %39, %10 : vector<8x128xf32>
    %51 = arith.mulf %31, %41 : vector<8x128xf32>
    %52 = arith.addf %50, %51 : vector<8x128xf32>
    %53 = math.tanh %52 : vector<8x128xf32>
    %54 = arith.mulf %49, %53 : vector<8x128xf32>
    %55 = arith.index_cast %18 : i32 to index
    %c0_26 = arith.constant 0 : index
    %56 = vector.load %arg9[%55, %c0_26] : memref<72x128xf32, #tpu.memory_space<vmem>>, vector<8x128xf32>
    tpu.vector_store %arg9[%55, %c0_26], %54 {strides = array<i32>} : memref<72x128xf32, #tpu.memory_space<vmem>>, vector<8x128xf32>,
    %c1_i32 = arith.constant 1 : i32
    %c8_i32_27 = arith.constant 8 : i32
    %57 = arith.muli %c1_i32, %c8_i32_27 : i32
    %58 = tpu.assume_multiple %57, 8 : i32
    %59 = arith.index_cast %58 : i32 to index
    %c0_28 = arith.constant 0 : index
    %60 = vector.load %arg8[%59, %c0_28] : memref<72x512xf32, #tpu.memory_space<vmem>>, vector<8x512xf32>
    %c0_29 = arith.constant 0 : index
    %c0_30 = arith.constant 0 : index
    %61 = vector.load %arg3[%c0_29, %c0_30] : memref<128x640xf32, #tpu.memory_space<vmem>>, vector<128x512xf32>
    %cst_31 = arith.constant dense<0.000000e+00> : vector<8x512xf32>
    %62 = tpu.matmul %54, %61, %cst_31 {dimension_numbers = #tpu.dot_dimension_numbers<[1], [0], [0], [1], [0, 0, 1, 1], [], []>} : vector<8x128xf32>, vector<128x512xf32>, vector<8x512xf32> -> vector<8x512xf32>
    %63 = arith.addf %60, %62 : vector<8x512xf32>
    %64 = vector.extract_strided_slice %63 {offsets = [0, 0], sizes = [8, 128], strides = [1, 1]} : vector<8x512xf32> to vector<8x128xf32>
    %cst_32 = arith.constant 5.000000e-01 : f32
    %65 = vector.broadcast %cst_32 : f32 to vector<8x128xf32>
    %66 = arith.mulf %65, %64 : vector<8x128xf32>
    %67 = math.tanh %66 : vector<8x128xf32>
    %cst_33 = arith.constant 1.000000e+00 : f32
    %68 = vector.broadcast %cst_33 : f32 to vector<8x128xf32>
    %69 = arith.addf %67, %68 : vector<8x128xf32>
    %cst_34 = arith.constant 5.000000e-01 : f32
    %70 = vector.broadcast %cst_34 : f32 to vector<8x128xf32>
    %71 = arith.mulf %70, %69 : vector<8x128xf32>
    %72 = vector.extract_strided_slice %63 {offsets = [0, 128], sizes = [8, 128], strides = [1, 1]} : vector<8x512xf32> to vector<8x128xf32>
    %cst_35 = arith.constant 5.000000e-01 : f32
    %73 = vector.broadcast %cst_35 : f32 to vector<8x128xf32>
    %74 = arith.mulf %73, %72 : vector<8x128xf32>
    %75 = math.tanh %74 : vector<8x128xf32>
    %cst_36 = arith.constant 1.000000e+00 : f32
    %76 = vector.broadcast %cst_36 : f32 to vector<8x128xf32>
    %77 = arith.addf %75, %76 : vector<8x128xf32>
    %cst_37 = arith.constant 5.000000e-01 : f32
    %78 = vector.broadcast %cst_37 : f32 to vector<8x128xf32>
    %79 = arith.mulf %78, %77 : vector<8x128xf32>
    %80 = vector.extract_strided_slice %63 {offsets = [0, 256], sizes = [8, 128], strides = [1, 1]} : vector<8x512xf32> to vector<8x128xf32>
    %81 = math.tanh %80 : vector<8x128xf32>
    %82 = vector.extract_strided_slice %63 {offsets = [0, 384], sizes = [8, 128], strides = [1, 1]} : vector<8x512xf32> to vector<8x128xf32>
    %cst_38 = arith.constant 5.000000e-01 : f32
    %83 = vector.broadcast %cst_38 : f32 to vector<8x128xf32>
    %84 = arith.mulf %83, %82 : vector<8x128xf32>
    %85 = math.tanh %84 : vector<8x128xf32>
    %cst_39 = arith.constant 1.000000e+00 : f32
    %86 = vector.broadcast %cst_39 : f32 to vector<8x128xf32>
    %87 = arith.addf %85, %86 : vector<8x128xf32>
    %cst_40 = arith.constant 5.000000e-01 : f32
    %88 = vector.broadcast %cst_40 : f32 to vector<8x128xf32>
    %89 = arith.mulf %88, %87 : vector<8x128xf32>
    %90 = arith.mulf %79, %52 : vector<8x128xf32>
    %91 = arith.mulf %71, %81 : vector<8x128xf32>
    %92 = arith.addf %90, %91 : vector<8x128xf32>
    %93 = math.tanh %92 : vector<8x128xf32>
    %94 = arith.mulf %89, %93 : vector<8x128xf32>
    %95 = arith.index_cast %58 : i32 to index
    %c0_41 = arith.constant 0 : index
    %96 = vector.load %arg9[%95, %c0_41] : memref<72x128xf32, #tpu.memory_space<vmem>>, vector<8x128xf32>
    tpu.vector_store %arg9[%95, %c0_41], %94 {strides = array<i32>} : memref<72x128xf32, #tpu.memory_space<vmem>>, vector<8x128xf32>,
    %c2_i32 = arith.constant 2 : i32
    %c8_i32_42 = arith.constant 8 : i32
    %97 = arith.muli %c2_i32, %c8_i32_42 : i32
    %98 = tpu.assume_multiple %97, 8 : i32
    %99 = arith.index_cast %98 : i32 to index
    %c0_43 = arith.constant 0 : index
    %100 = vector.load %arg8[%99, %c0_43] : memref<72x512xf32, #tpu.memory_space<vmem>>, vector<8x512xf32>
    %c0_44 = arith.constant 0 : index
    %c0_45 = arith.constant 0 : index
    %101 = vector.load %arg3[%c0_44, %c0_45] : memref<128x640xf32, #tpu.memory_space<vmem>>, vector<128x512xf32>
    %cst_46 = arith.constant dense<0.000000e+00> : vector<8x512xf32>
    %102 = tpu.matmul %94, %101, %cst_46 {dimension_numbers = #tpu.dot_dimension_numbers<[1], [0], [0], [1], [0, 0, 1, 1], [], []>} : vector<8x128xf32>, vector<128x512xf32>, vector<8x512xf32> -> vector<8x512xf32>
    %103 = arith.addf %100, %102 : vector<8x512xf32>
    %104 = vector.extract_strided_slice %103 {offsets = [0, 0], sizes = [8, 128], strides = [1, 1]} : vector<8x512xf32> to vector<8x128xf32>
    %cst_47 = arith.constant 5.000000e-01 : f32
    %105 = vector.broadcast %cst_47 : f32 to vector<8x128xf32>
    %106 = arith.mulf %105, %104 : vector<8x128xf32>
    %107 = math.tanh %106 : vector<8x128xf32>
    %cst_48 = arith.constant 1.000000e+00 : f32
    %108 = vector.broadcast %cst_48 : f32 to vector<8x128xf32>
    %109 = arith.addf %107, %108 : vector<8x128xf32>
    %cst_49 = arith.constant 5.000000e-01 : f32
    %110 = vector.broadcast %cst_49 : f32 to vector<8x128xf32>
    %111 = arith.mulf %110, %109 : vector<8x128xf32>
    %112 = vector.extract_strided_slice %103 {offsets = [0, 128], sizes = [8, 128], strides = [1, 1]} : vector<8x512xf32> to vector<8x128xf32>
    %cst_50 = arith.constant 5.000000e-01 : f32
    %113 = vector.broadcast %cst_50 : f32 to vector<8x128xf32>
    %114 = arith.mulf %113, %112 : vector<8x128xf32>
    %115 = math.tanh %114 : vector<8x128xf32>
    %cst_51 = arith.constant 1.000000e+00 : f32
    %116 = vector.broadcast %cst_51 : f32 to vector<8x128xf32>
    %117 = arith.addf %115, %116 : vector<8x128xf32>
    %cst_52 = arith.constant 5.000000e-01 : f32
    %118 = vector.broadcast %cst_52 : f32 to vector<8x128xf32>
    %119 = arith.mulf %118, %117 : vector<8x128xf32>
    %120 = vector.extract_strided_slice %103 {offsets = [0, 256], sizes = [8, 128], strides = [1, 1]} : vector<8x512xf32> to vector<8x128xf32>
    %121 = math.tanh %120 : vector<8x128xf32>
    %122 = vector.extract_strided_slice %103 {offsets = [0, 384], sizes = [8, 128], strides = [1, 1]} : vector<8x512xf32> to vector<8x128xf32>
    %cst_53 = arith.constant 5.000000e-01 : f32
    %123 = vector.broadcast %cst_53 : f32 to vector<8x128xf32>
    %124 = arith.mulf %123, %122 : vector<8x128xf32>
    %125 = math.tanh %124 : vector<8x128xf32>
    %cst_54 = arith.constant 1.000000e+00 : f32
    %126 = vector.broadcast %cst_54 : f32 to vector<8x128xf32>
    %127 = arith.addf %125, %126 : vector<8x128xf32>
    %cst_55 = arith.constant 5.000000e-01 : f32
    %128 = vector.broadcast %cst_55 : f32 to vector<8x128xf32>
    %129 = arith.mulf %128, %127 : vector<8x128xf32>
    %130 = arith.mulf %119, %92 : vector<8x128xf32>
    %131 = arith.mulf %111, %121 : vector<8x128xf32>
    %132 = arith.addf %130, %131 : vector<8x128xf32>
    %133 = math.tanh %132 : vector<8x128xf32>
    %134 = arith.mulf %129, %133 : vector<8x128xf32>
    %135 = arith.index_cast %98 : i32 to index
    %c0_56 = arith.constant 0 : index
    %136 = vector.load %arg9[%135, %c0_56] : memref<72x128xf32, #tpu.memory_space<vmem>>, vector<8x128xf32>
    tpu.vector_store %arg9[%135, %c0_56], %134 {strides = array<i32>} : memref<72x128xf32, #tpu.memory_space<vmem>>, vector<8x128xf32>,
    %c3_i32 = arith.constant 3 : i32
    %c8_i32_57 = arith.constant 8 : i32
    %137 = arith.muli %c3_i32, %c8_i32_57 : i32
    %138 = tpu.assume_multiple %137, 8 : i32
    %139 = arith.index_cast %138 : i32 to index
    %c0_58 = arith.constant 0 : index
    %140 = vector.load %arg8[%139, %c0_58] : memref<72x512xf32, #tpu.memory_space<vmem>>, vector<8x512xf32>
    %c0_59 = arith.constant 0 : index
    %c0_60 = arith.constant 0 : index
    %141 = vector.load %arg3[%c0_59, %c0_60] : memref<128x640xf32, #tpu.memory_space<vmem>>, vector<128x512xf32>
    %cst_61 = arith.constant dense<0.000000e+00> : vector<8x512xf32>
    %142 = tpu.matmul %134, %141, %cst_61 {dimension_numbers = #tpu.dot_dimension_numbers<[1], [0], [0], [1], [0, 0, 1, 1], [], []>} : vector<8x128xf32>, vector<128x512xf32>, vector<8x512xf32> -> vector<8x512xf32>
    %143 = arith.addf %140, %142 : vector<8x512xf32>
    %144 = vector.extract_strided_slice %143 {offsets = [0, 0], sizes = [8, 128], strides = [1, 1]} : vector<8x512xf32> to vector<8x128xf32>
    %cst_62 = arith.constant 5.000000e-01 : f32
    %145 = vector.broadcast %cst_62 : f32 to vector<8x128xf32>
    %146 = arith.mulf %145, %144 : vector<8x128xf32>
    %147 = math.tanh %146 : vector<8x128xf32>
    %cst_63 = arith.constant 1.000000e+00 : f32
    %148 = vector.broadcast %cst_63 : f32 to vector<8x128xf32>
    %149 = arith.addf %147, %148 : vector<8x128xf32>
    %cst_64 = arith.constant 5.000000e-01 : f32
    %150 = vector.broadcast %cst_64 : f32 to vector<8x128xf32>
    %151 = arith.mulf %150, %149 : vector<8x128xf32>
    %152 = vector.extract_strided_slice %143 {offsets = [0, 128], sizes = [8, 128], strides = [1, 1]} : vector<8x512xf32> to vector<8x128xf32>
    %cst_65 = arith.constant 5.000000e-01 : f32
    %153 = vector.broadcast %cst_65 : f32 to vector<8x128xf32>
    %154 = arith.mulf %153, %152 : vector<8x128xf32>
    %155 = math.tanh %154 : vector<8x128xf32>
    %cst_66 = arith.constant 1.000000e+00 : f32
    %156 = vector.broadcast %cst_66 : f32 to vector<8x128xf32>
    %157 = arith.addf %155, %156 : vector<8x128xf32>
    %cst_67 = arith.constant 5.000000e-01 : f32
    %158 = vector.broadcast %cst_67 : f32 to vector<8x128xf32>
    %159 = arith.mulf %158, %157 : vector<8x128xf32>
    %160 = vector.extract_strided_slice %143 {offsets = [0, 256], sizes = [8, 128], strides = [1, 1]} : vector<8x512xf32> to vector<8x128xf32>
    %161 = math.tanh %160 : vector<8x128xf32>
    %162 = vector.extract_strided_slice %143 {offsets = [0, 384], sizes = [8, 128], strides = [1, 1]} : vector<8x512xf32> to vector<8x128xf32>
    %cst_68 = arith.constant 5.000000e-01 : f32
    %163 = vector.broadcast %cst_68 : f32 to vector<8x128xf32>
    %164 = arith.mulf %163, %162 : vector<8x128xf32>
    %165 = math.tanh %164 : vector<8x128xf32>
    %cst_69 = arith.constant 1.000000e+00 : f32
    %166 = vector.broadcast %cst_69 : f32 to vector<8x128xf32>
    %167 = arith.addf %165, %166 : vector<8x128xf32>
    %cst_70 = arith.constant 5.000000e-01 : f32
    %168 = vector.broadcast %cst_70 : f32 to vector<8x128xf32>
    %169 = arith.mulf %168, %167 : vector<8x128xf32>
    %170 = arith.mulf %159, %132 : vector<8x128xf32>
    %171 = arith.mulf %151, %161 : vector<8x128xf32>
    %172 = arith.addf %170, %171 : vector<8x128xf32>
    %173 = math.tanh %172 : vector<8x128xf32>
    %174 = arith.mulf %169, %173 : vector<8x128xf32>
    %175 = arith.index_cast %138 : i32 to index
    %c0_71 = arith.constant 0 : index
    %176 = vector.load %arg9[%175, %c0_71] : memref<72x128xf32, #tpu.memory_space<vmem>>, vector<8x128xf32>
    tpu.vector_store %arg9[%175, %c0_71], %174 {strides = array<i32>} : memref<72x128xf32, #tpu.memory_space<vmem>>, vector<8x128xf32>,
    %c4_i32 = arith.constant 4 : i32
    %c8_i32_72 = arith.constant 8 : i32
    %177 = arith.muli %c4_i32, %c8_i32_72 : i32
    %178 = tpu.assume_multiple %177, 8 : i32
    %179 = arith.index_cast %178 : i32 to index
    %c0_73 = arith.constant 0 : index
    %180 = vector.load %arg8[%179, %c0_73] : memref<72x512xf32, #tpu.memory_space<vmem>>, vector<8x512xf32>
    %c0_74 = arith.constant 0 : index
    %c0_75 = arith.constant 0 : index
    %181 = vector.load %arg3[%c0_74, %c0_75] : memref<128x640xf32, #tpu.memory_space<vmem>>, vector<128x512xf32>
    %cst_76 = arith.constant dense<0.000000e+00> : vector<8x512xf32>
    %182 = tpu.matmul %174, %181, %cst_76 {dimension_numbers = #tpu.dot_dimension_numbers<[1], [0], [0], [1], [0, 0, 1, 1], [], []>} : vector<8x128xf32>, vector<128x512xf32>, vector<8x512xf32> -> vector<8x512xf32>
    %183 = arith.addf %180, %182 : vector<8x512xf32>
    %184 = vector.extract_strided_slice %183 {offsets = [0, 0], sizes = [8, 128], strides = [1, 1]} : vector<8x512xf32> to vector<8x128xf32>
    %cst_77 = arith.constant 5.000000e-01 : f32
    %185 = vector.broadcast %cst_77 : f32 to vector<8x128xf32>
    %186 = arith.mulf %185, %184 : vector<8x128xf32>
    %187 = math.tanh %186 : vector<8x128xf32>
    %cst_78 = arith.constant 1.000000e+00 : f32
    %188 = vector.broadcast %cst_78 : f32 to vector<8x128xf32>
    %189 = arith.addf %187, %188 : vector<8x128xf32>
    %cst_79 = arith.constant 5.000000e-01 : f32
    %190 = vector.broadcast %cst_79 : f32 to vector<8x128xf32>
    %191 = arith.mulf %190, %189 : vector<8x128xf32>
    %192 = vector.extract_strided_slice %183 {offsets = [0, 128], sizes = [8, 128], strides = [1, 1]} : vector<8x512xf32> to vector<8x128xf32>
    %cst_80 = arith.constant 5.000000e-01 : f32
    %193 = vector.broadcast %cst_80 : f32 to vector<8x128xf32>
    %194 = arith.mulf %193, %192 : vector<8x128xf32>
    %195 = math.tanh %194 : vector<8x128xf32>
    %cst_81 = arith.constant 1.000000e+00 : f32
    %196 = vector.broadcast %cst_81 : f32 to vector<8x128xf32>
    %197 = arith.addf %195, %196 : vector<8x128xf32>
    %cst_82 = arith.constant 5.000000e-01 : f32
    %198 = vector.broadcast %cst_82 : f32 to vector<8x128xf32>
    %199 = arith.mulf %198, %197 : vector<8x128xf32>
    %200 = vector.extract_strided_slice %183 {offsets = [0, 256], sizes = [8, 128], strides = [1, 1]} : vector<8x512xf32> to vector<8x128xf32>
    %201 = math.tanh %200 : vector<8x128xf32>
    %202 = vector.extract_strided_slice %183 {offsets = [0, 384], sizes = [8, 128], strides = [1, 1]} : vector<8x512xf32> to vector<8x128xf32>
    %cst_83 = arith.constant 5.000000e-01 : f32
    %203 = vector.broadcast %cst_83 : f32 to vector<8x128xf32>
    %204 = arith.mulf %203, %202 : vector<8x128xf32>
    %205 = math.tanh %204 : vector<8x128xf32>
    %cst_84 = arith.constant 1.000000e+00 : f32
    %206 = vector.broadcast %cst_84 : f32 to vector<8x128xf32>
    %207 = arith.addf %205, %206 : vector<8x128xf32>
    %cst_85 = arith.constant 5.000000e-01 : f32
    %208 = vector.broadcast %cst_85 : f32 to vector<8x128xf32>
    %209 = arith.mulf %208, %207 : vector<8x128xf32>
    %210 = arith.mulf %199, %172 : vector<8x128xf32>
    %211 = arith.mulf %191, %201 : vector<8x128xf32>
    %212 = arith.addf %210, %211 : vector<8x128xf32>
    %213 = math.tanh %212 : vector<8x128xf32>
    %214 = arith.mulf %209, %213 : vector<8x128xf32>
    %215 = arith.index_cast %178 : i32 to index
    %c0_86 = arith.constant 0 : index
    %216 = vector.load %arg9[%215, %c0_86] : memref<72x128xf32, #tpu.memory_space<vmem>>, vector<8x128xf32>
    tpu.vector_store %arg9[%215, %c0_86], %214 {strides = array<i32>} : memref<72x128xf32, #tpu.memory_space<vmem>>, vector<8x128xf32>,
    %c5_i32 = arith.constant 5 : i32
    %c8_i32_87 = arith.constant 8 : i32
    %217 = arith.muli %c5_i32, %c8_i32_87 : i32
    %218 = tpu.assume_multiple %217, 8 : i32
    %219 = arith.index_cast %218 : i32 to index
    %c0_88 = arith.constant 0 : index
    %220 = vector.load %arg8[%219, %c0_88] : memref<72x512xf32, #tpu.memory_space<vmem>>, vector<8x512xf32>
    %c0_89 = arith.constant 0 : index
    %c0_90 = arith.constant 0 : index
    %221 = vector.load %arg3[%c0_89, %c0_90] : memref<128x640xf32, #tpu.memory_space<vmem>>, vector<128x512xf32>
    %cst_91 = arith.constant dense<0.000000e+00> : vector<8x512xf32>
    %222 = tpu.matmul %214, %221, %cst_91 {dimension_numbers = #tpu.dot_dimension_numbers<[1], [0], [0], [1], [0, 0, 1, 1], [], []>} : vector<8x128xf32>, vector<128x512xf32>, vector<8x512xf32> -> vector<8x512xf32>
    %223 = arith.addf %220, %222 : vector<8x512xf32>
    %224 = vector.extract_strided_slice %223 {offsets = [0, 0], sizes = [8, 128], strides = [1, 1]} : vector<8x512xf32> to vector<8x128xf32>
    %cst_92 = arith.constant 5.000000e-01 : f32
    %225 = vector.broadcast %cst_92 : f32 to vector<8x128xf32>
    %226 = arith.mulf %225, %224 : vector<8x128xf32>
    %227 = math.tanh %226 : vector<8x128xf32>
    %cst_93 = arith.constant 1.000000e+00 : f32
    %228 = vector.broadcast %cst_93 : f32 to vector<8x128xf32>
    %229 = arith.addf %227, %228 : vector<8x128xf32>
    %cst_94 = arith.constant 5.000000e-01 : f32
    %230 = vector.broadcast %cst_94 : f32 to vector<8x128xf32>
    %231 = arith.mulf %230, %229 : vector<8x128xf32>
    %232 = vector.extract_strided_slice %223 {offsets = [0, 128], sizes = [8, 128], strides = [1, 1]} : vector<8x512xf32> to vector<8x128xf32>
    %cst_95 = arith.constant 5.000000e-01 : f32
    %233 = vector.broadcast %cst_95 : f32 to vector<8x128xf32>
    %234 = arith.mulf %233, %232 : vector<8x128xf32>
    %235 = math.tanh %234 : vector<8x128xf32>
    %cst_96 = arith.constant 1.000000e+00 : f32
    %236 = vector.broadcast %cst_96 : f32 to vector<8x128xf32>
    %237 = arith.addf %235, %236 : vector<8x128xf32>
    %cst_97 = arith.constant 5.000000e-01 : f32
    %238 = vector.broadcast %cst_97 : f32 to vector<8x128xf32>
    %239 = arith.mulf %238, %237 : vector<8x128xf32>
    %240 = vector.extract_strided_slice %223 {offsets = [0, 256], sizes = [8, 128], strides = [1, 1]} : vector<8x512xf32> to vector<8x128xf32>
    %241 = math.tanh %240 : vector<8x128xf32>
    %242 = vector.extract_strided_slice %223 {offsets = [0, 384], sizes = [8, 128], strides = [1, 1]} : vector<8x512xf32> to vector<8x128xf32>
    %cst_98 = arith.constant 5.000000e-01 : f32
    %243 = vector.broadcast %cst_98 : f32 to vector<8x128xf32>
    %244 = arith.mulf %243, %242 : vector<8x128xf32>
    %245 = math.tanh %244 : vector<8x128xf32>
    %cst_99 = arith.constant 1.000000e+00 : f32
    %246 = vector.broadcast %cst_99 : f32 to vector<8x128xf32>
    %247 = arith.addf %245, %246 : vector<8x128xf32>
    %cst_100 = arith.constant 5.000000e-01 : f32
    %248 = vector.broadcast %cst_100 : f32 to vector<8x128xf32>
    %249 = arith.mulf %248, %247 : vector<8x128xf32>
    %250 = arith.mulf %239, %212 : vector<8x128xf32>
    %251 = arith.mulf %231, %241 : vector<8x128xf32>
    %252 = arith.addf %250, %251 : vector<8x128xf32>
    %253 = math.tanh %252 : vector<8x128xf32>
    %254 = arith.mulf %249, %253 : vector<8x128xf32>
    %255 = arith.index_cast %218 : i32 to index
    %c0_101 = arith.constant 0 : index
    %256 = vector.load %arg9[%255, %c0_101] : memref<72x128xf32, #tpu.memory_space<vmem>>, vector<8x128xf32>
    tpu.vector_store %arg9[%255, %c0_101], %254 {strides = array<i32>} : memref<72x128xf32, #tpu.memory_space<vmem>>, vector<8x128xf32>,
    %c6_i32 = arith.constant 6 : i32
    %c8_i32_102 = arith.constant 8 : i32
    %257 = arith.muli %c6_i32, %c8_i32_102 : i32
    %258 = tpu.assume_multiple %257, 8 : i32
    %259 = arith.index_cast %258 : i32 to index
    %c0_103 = arith.constant 0 : index
    %260 = vector.load %arg8[%259, %c0_103] : memref<72x512xf32, #tpu.memory_space<vmem>>, vector<8x512xf32>
    %c0_104 = arith.constant 0 : index
    %c0_105 = arith.constant 0 : index
    %261 = vector.load %arg3[%c0_104, %c0_105] : memref<128x640xf32, #tpu.memory_space<vmem>>, vector<128x512xf32>
    %cst_106 = arith.constant dense<0.000000e+00> : vector<8x512xf32>
    %262 = tpu.matmul %254, %261, %cst_106 {dimension_numbers = #tpu.dot_dimension_numbers<[1], [0], [0], [1], [0, 0, 1, 1], [], []>} : vector<8x128xf32>, vector<128x512xf32>, vector<8x512xf32> -> vector<8x512xf32>
    %263 = arith.addf %260, %262 : vector<8x512xf32>
    %264 = vector.extract_strided_slice %263 {offsets = [0, 0], sizes = [8, 128], strides = [1, 1]} : vector<8x512xf32> to vector<8x128xf32>
    %cst_107 = arith.constant 5.000000e-01 : f32
    %265 = vector.broadcast %cst_107 : f32 to vector<8x128xf32>
    %266 = arith.mulf %265, %264 : vector<8x128xf32>
    %267 = math.tanh %266 : vector<8x128xf32>
    %cst_108 = arith.constant 1.000000e+00 : f32
    %268 = vector.broadcast %cst_108 : f32 to vector<8x128xf32>
    %269 = arith.addf %267, %268 : vector<8x128xf32>
    %cst_109 = arith.constant 5.000000e-01 : f32
    %270 = vector.broadcast %cst_109 : f32 to vector<8x128xf32>
    %271 = arith.mulf %270, %269 : vector<8x128xf32>
    %272 = vector.extract_strided_slice %263 {offsets = [0, 128], sizes = [8, 128], strides = [1, 1]} : vector<8x512xf32> to vector<8x128xf32>
    %cst_110 = arith.constant 5.000000e-01 : f32
    %273 = vector.broadcast %cst_110 : f32 to vector<8x128xf32>
    %274 = arith.mulf %273, %272 : vector<8x128xf32>
    %275 = math.tanh %274 : vector<8x128xf32>
    %cst_111 = arith.constant 1.000000e+00 : f32
    %276 = vector.broadcast %cst_111 : f32 to vector<8x128xf32>
    %277 = arith.addf %275, %276 : vector<8x128xf32>
    %cst_112 = arith.constant 5.000000e-01 : f32
    %278 = vector.broadcast %cst_112 : f32 to vector<8x128xf32>
    %279 = arith.mulf %278, %277 : vector<8x128xf32>
    %280 = vector.extract_strided_slice %263 {offsets = [0, 256], sizes = [8, 128], strides = [1, 1]} : vector<8x512xf32> to vector<8x128xf32>
    %281 = math.tanh %280 : vector<8x128xf32>
    %282 = vector.extract_strided_slice %263 {offsets = [0, 384], sizes = [8, 128], strides = [1, 1]} : vector<8x512xf32> to vector<8x128xf32>
    %cst_113 = arith.constant 5.000000e-01 : f32
    %283 = vector.broadcast %cst_113 : f32 to vector<8x128xf32>
    %284 = arith.mulf %283, %282 : vector<8x128xf32>
    %285 = math.tanh %284 : vector<8x128xf32>
    %cst_114 = arith.constant 1.000000e+00 : f32
    %286 = vector.broadcast %cst_114 : f32 to vector<8x128xf32>
    %287 = arith.addf %285, %286 : vector<8x128xf32>
    %cst_115 = arith.constant 5.000000e-01 : f32
    %288 = vector.broadcast %cst_115 : f32 to vector<8x128xf32>
    %289 = arith.mulf %288, %287 : vector<8x128xf32>
    %290 = arith.mulf %279, %252 : vector<8x128xf32>
    %291 = arith.mulf %271, %281 : vector<8x128xf32>
    %292 = arith.addf %290, %291 : vector<8x128xf32>
    %293 = math.tanh %292 : vector<8x128xf32>
    %294 = arith.mulf %289, %293 : vector<8x128xf32>
    %295 = arith.index_cast %258 : i32 to index
    %c0_116 = arith.constant 0 : index
    %296 = vector.load %arg9[%295, %c0_116] : memref<72x128xf32, #tpu.memory_space<vmem>>, vector<8x128xf32>
    tpu.vector_store %arg9[%295, %c0_116], %294 {strides = array<i32>} : memref<72x128xf32, #tpu.memory_space<vmem>>, vector<8x128xf32>,
    %c7_i32 = arith.constant 7 : i32
    %c8_i32_117 = arith.constant 8 : i32
    %297 = arith.muli %c7_i32, %c8_i32_117 : i32
    %298 = tpu.assume_multiple %297, 8 : i32
    %299 = arith.index_cast %298 : i32 to index
    %c0_118 = arith.constant 0 : index
    %300 = vector.load %arg8[%299, %c0_118] : memref<72x512xf32, #tpu.memory_space<vmem>>, vector<8x512xf32>
    %c0_119 = arith.constant 0 : index
    %c0_120 = arith.constant 0 : index
    %301 = vector.load %arg3[%c0_119, %c0_120] : memref<128x640xf32, #tpu.memory_space<vmem>>, vector<128x512xf32>
    %cst_121 = arith.constant dense<0.000000e+00> : vector<8x512xf32>
    %302 = tpu.matmul %294, %301, %cst_121 {dimension_numbers = #tpu.dot_dimension_numbers<[1], [0], [0], [1], [0, 0, 1, 1], [], []>} : vector<8x128xf32>, vector<128x512xf32>, vector<8x512xf32> -> vector<8x512xf32>
    %303 = arith.addf %300, %302 : vector<8x512xf32>
    %304 = vector.extract_strided_slice %303 {offsets = [0, 0], sizes = [8, 128], strides = [1, 1]} : vector<8x512xf32> to vector<8x128xf32>
    %cst_122 = arith.constant 5.000000e-01 : f32
    %305 = vector.broadcast %cst_122 : f32 to vector<8x128xf32>
    %306 = arith.mulf %305, %304 : vector<8x128xf32>
    %307 = math.tanh %306 : vector<8x128xf32>
    %cst_123 = arith.constant 1.000000e+00 : f32
    %308 = vector.broadcast %cst_123 : f32 to vector<8x128xf32>
    %309 = arith.addf %307, %308 : vector<8x128xf32>
    %cst_124 = arith.constant 5.000000e-01 : f32
    %310 = vector.broadcast %cst_124 : f32 to vector<8x128xf32>
    %311 = arith.mulf %310, %309 : vector<8x128xf32>
    %312 = vector.extract_strided_slice %303 {offsets = [0, 128], sizes = [8, 128], strides = [1, 1]} : vector<8x512xf32> to vector<8x128xf32>
    %cst_125 = arith.constant 5.000000e-01 : f32
    %313 = vector.broadcast %cst_125 : f32 to vector<8x128xf32>
    %314 = arith.mulf %313, %312 : vector<8x128xf32>
    %315 = math.tanh %314 : vector<8x128xf32>
    %cst_126 = arith.constant 1.000000e+00 : f32
    %316 = vector.broadcast %cst_126 : f32 to vector<8x128xf32>
    %317 = arith.addf %315, %316 : vector<8x128xf32>
    %cst_127 = arith.constant 5.000000e-01 : f32
    %318 = vector.broadcast %cst_127 : f32 to vector<8x128xf32>
    %319 = arith.mulf %318, %317 : vector<8x128xf32>
    %320 = vector.extract_strided_slice %303 {offsets = [0, 256], sizes = [8, 128], strides = [1, 1]} : vector<8x512xf32> to vector<8x128xf32>
    %321 = math.tanh %320 : vector<8x128xf32>
    %322 = vector.extract_strided_slice %303 {offsets = [0, 384], sizes = [8, 128], strides = [1, 1]} : vector<8x512xf32> to vector<8x128xf32>
    %cst_128 = arith.constant 5.000000e-01 : f32
    %323 = vector.broadcast %cst_128 : f32 to vector<8x128xf32>
    %324 = arith.mulf %323, %322 : vector<8x128xf32>
    %325 = math.tanh %324 : vector<8x128xf32>
    %cst_129 = arith.constant 1.000000e+00 : f32
    %326 = vector.broadcast %cst_129 : f32 to vector<8x128xf32>
    %327 = arith.addf %325, %326 : vector<8x128xf32>
    %cst_130 = arith.constant 5.000000e-01 : f32
    %328 = vector.broadcast %cst_130 : f32 to vector<8x128xf32>
    %329 = arith.mulf %328, %327 : vector<8x128xf32>
    %330 = arith.mulf %319, %292 : vector<8x128xf32>
    %331 = arith.mulf %311, %321 : vector<8x128xf32>
    %332 = arith.addf %330, %331 : vector<8x128xf32>
    %333 = math.tanh %332 : vector<8x128xf32>
    %334 = arith.mulf %329, %333 : vector<8x128xf32>
    %335 = arith.index_cast %298 : i32 to index
    %c0_131 = arith.constant 0 : index
    %336 = vector.load %arg9[%335, %c0_131] : memref<72x128xf32, #tpu.memory_space<vmem>>, vector<8x128xf32>
    tpu.vector_store %arg9[%335, %c0_131], %334 {strides = array<i32>} : memref<72x128xf32, #tpu.memory_space<vmem>>, vector<8x128xf32>,
    %c8_i32_132 = arith.constant 8 : i32
    %c8_i32_133 = arith.constant 8 : i32
    %337 = arith.muli %c8_i32_132, %c8_i32_133 : i32
    %338 = tpu.assume_multiple %337, 8 : i32
    %339 = arith.index_cast %338 : i32 to index
    %c0_134 = arith.constant 0 : index
    %340 = vector.load %arg8[%339, %c0_134] : memref<72x512xf32, #tpu.memory_space<vmem>>, vector<8x512xf32>
    %c0_135 = arith.constant 0 : index
    %c0_136 = arith.constant 0 : index
    %341 = vector.load %arg3[%c0_135, %c0_136] : memref<128x640xf32, #tpu.memory_space<vmem>>, vector<128x512xf32>
    %cst_137 = arith.constant dense<0.000000e+00> : vector<8x512xf32>
    %342 = tpu.matmul %334, %341, %cst_137 {dimension_numbers = #tpu.dot_dimension_numbers<[1], [0], [0], [1], [0, 0, 1, 1], [], []>} : vector<8x128xf32>, vector<128x512xf32>, vector<8x512xf32> -> vector<8x512xf32>
    %343 = arith.addf %340, %342 : vector<8x512xf32>
    %344 = vector.extract_strided_slice %343 {offsets = [0, 0], sizes = [8, 128], strides = [1, 1]} : vector<8x512xf32> to vector<8x128xf32>
    %cst_138 = arith.constant 5.000000e-01 : f32
    %345 = vector.broadcast %cst_138 : f32 to vector<8x128xf32>
    %346 = arith.mulf %345, %344 : vector<8x128xf32>
    %347 = math.tanh %346 : vector<8x128xf32>
    %cst_139 = arith.constant 1.000000e+00 : f32
    %348 = vector.broadcast %cst_139 : f32 to vector<8x128xf32>
    %349 = arith.addf %347, %348 : vector<8x128xf32>
    %cst_140 = arith.constant 5.000000e-01 : f32
    %350 = vector.broadcast %cst_140 : f32 to vector<8x128xf32>
    %351 = arith.mulf %350, %349 : vector<8x128xf32>
    %352 = vector.extract_strided_slice %343 {offsets = [0, 128], sizes = [8, 128], strides = [1, 1]} : vector<8x512xf32> to vector<8x128xf32>
    %cst_141 = arith.constant 5.000000e-01 : f32
    %353 = vector.broadcast %cst_141 : f32 to vector<8x128xf32>
    %354 = arith.mulf %353, %352 : vector<8x128xf32>
    %355 = math.tanh %354 : vector<8x128xf32>
    %cst_142 = arith.constant 1.000000e+00 : f32
    %356 = vector.broadcast %cst_142 : f32 to vector<8x128xf32>
    %357 = arith.addf %355, %356 : vector<8x128xf32>
    %cst_143 = arith.constant 5.000000e-01 : f32
    %358 = vector.broadcast %cst_143 : f32 to vector<8x128xf32>
    %359 = arith.mulf %358, %357 : vector<8x128xf32>
    %360 = vector.extract_strided_slice %343 {offsets = [0, 256], sizes = [8, 128], strides = [1, 1]} : vector<8x512xf32> to vector<8x128xf32>
    %361 = math.tanh %360 : vector<8x128xf32>
    %362 = vector.extract_strided_slice %343 {offsets = [0, 384], sizes = [8, 128], strides = [1, 1]} : vector<8x512xf32> to vector<8x128xf32>
    %cst_144 = arith.constant 5.000000e-01 : f32
    %363 = vector.broadcast %cst_144 : f32 to vector<8x128xf32>
    %364 = arith.mulf %363, %362 : vector<8x128xf32>
    %365 = math.tanh %364 : vector<8x128xf32>
    %cst_145 = arith.constant 1.000000e+00 : f32
    %366 = vector.broadcast %cst_145 : f32 to vector<8x128xf32>
    %367 = arith.addf %365, %366 : vector<8x128xf32>
    %cst_146 = arith.constant 5.000000e-01 : f32
    %368 = vector.broadcast %cst_146 : f32 to vector<8x128xf32>
    %369 = arith.mulf %368, %367 : vector<8x128xf32>
    %370 = arith.mulf %359, %332 : vector<8x128xf32>
    %371 = arith.mulf %351, %361 : vector<8x128xf32>
    %372 = arith.addf %370, %371 : vector<8x128xf32>
    %373 = math.tanh %372 : vector<8x128xf32>
    %374 = arith.mulf %369, %373 : vector<8x128xf32>
    %375 = arith.index_cast %338 : i32 to index
    %c0_147 = arith.constant 0 : index
    %376 = vector.load %arg9[%375, %c0_147] : memref<72x128xf32, #tpu.memory_space<vmem>>, vector<8x128xf32>
    tpu.vector_store %arg9[%375, %c0_147], %374 {strides = array<i32>} : memref<72x128xf32, #tpu.memory_space<vmem>>, vector<8x128xf32>,
    %c9_i32 = arith.constant 9 : i32
    %c0_148 = arith.constant 0 : index
    %c0_149 = arith.constant 0 : index
    %377 = vector.load %arg6[%c0_148, %c0_149] : memref<8x128xf32, #tpu.memory_space<vmem>>, vector<8x128xf32>
    tpu.vector_store %arg6[%c0_148, %c0_149], %374 {strides = array<i32>} : memref<8x128xf32, #tpu.memory_space<vmem>>, vector<8x128xf32>,
    %c0_150 = arith.constant 0 : index
    %c0_151 = arith.constant 0 : index
    %378 = vector.load %arg7[%c0_150, %c0_151] : memref<8x128xf32, #tpu.memory_space<vmem>>, vector<8x128xf32>
    tpu.vector_store %arg7[%c0_150, %c0_151], %372 {strides = array<i32>} : memref<8x128xf32, #tpu.memory_space<vmem>>, vector<8x128xf32>,
    %c0_152 = arith.constant 0 : index
    %c0_153 = arith.constant 0 : index
    %379 = vector.load %arg9[%c0_152, %c0_153] : memref<72x128xf32, #tpu.memory_space<vmem>>, vector<72x128xf32>
    %c0_154 = arith.constant 0 : index
    %c512 = arith.constant 512 : index
    %380 = vector.load %arg3[%c0_154, %c512] : memref<128x640xf32, #tpu.memory_space<vmem>>, vector<128x128xf32>
    %cst_155 = arith.constant dense<0.000000e+00> : vector<72x128xf32>
    %381 = tpu.matmul %379, %380, %cst_155 {dimension_numbers = #tpu.dot_dimension_numbers<[1], [0], [0], [1], [0, 0, 1, 1], [], []>} : vector<72x128xf32>, vector<128x128xf32>, vector<72x128xf32> -> vector<72x128xf32>
    %382 = vector.broadcast %2 : vector<1x128xf32> to vector<72x128xf32>
    %383 = arith.addf %381, %382 : vector<72x128xf32>
    %384 = tpu.iota {dimensions = array<i32: 1>} : vector<72x128xi32>
    %c8_i32_156 = arith.constant 8 : i32
    %385 = vector.broadcast %c8_i32_156 : i32 to vector<72x128xi32>
    %386 = arith.cmpi slt, %384, %385 : vector<72x128xi32>
    %c24_i32 = arith.constant 24 : i32
    %387 = vector.broadcast %c24_i32 : i32 to vector<72x128xi32>
    %388 = arith.cmpi sge, %384, %387 : vector<72x128xi32>
    %c40_i32 = arith.constant 40 : i32
    %389 = vector.broadcast %c40_i32 : i32 to vector<72x128xi32>
    %390 = arith.cmpi slt, %384, %389 : vector<72x128xi32>
    %391 = arith.andi %388, %390 : vector<72x128xi1>
    %c40_i32_157 = arith.constant 40 : i32
    %392 = vector.broadcast %c40_i32_157 : i32 to vector<72x128xi32>
    %393 = arith.cmpi sge, %384, %392 : vector<72x128xi32>
    %c48_i32 = arith.constant 48 : i32
    %394 = vector.broadcast %c48_i32 : i32 to vector<72x128xi32>
    %395 = arith.cmpi slt, %384, %394 : vector<72x128xi32>
    %396 = arith.andi %393, %395 : vector<72x128xi1>
    %c48_i32_158 = arith.constant 48 : i32
    %397 = vector.broadcast %c48_i32_158 : i32 to vector<72x128xi32>
    %398 = arith.cmpi sge, %384, %397 : vector<72x128xi32>
    %c51_i32 = arith.constant 51 : i32
    %399 = vector.broadcast %c51_i32 : i32 to vector<72x128xi32>
    %400 = arith.cmpi slt, %384, %399 : vector<72x128xi32>
    %401 = arith.andi %398, %400 : vector<72x128xi1>
    %cst_159 = arith.constant 0xFF800000 : f32
    %402 = vector.broadcast %cst_159 : f32 to vector<72x128xf32>
    %403 = arith.select %386, %383, %402 : vector<72x128xi1>, vector<72x128xf32>
    %cst_160 = arith.constant dense<0xFF800000> : vector<72xf32>
    %404 = vector.multi_reduction <maximumf>, %403, %cst_160 [1] : vector<72x128xf32> to vector<72xf32>
    %405 = vector.shape_cast %404 : vector<72xf32> to vector<72x1xf32>
    %cst_161 = arith.constant 0xFF800000 : f32
    %406 = vector.broadcast %cst_161 : f32 to vector<72x128xf32>
    %407 = arith.select %401, %383, %406 : vector<72x128xi1>, vector<72x128xf32>
    %cst_162 = arith.constant dense<0xFF800000> : vector<72xf32>
    %408 = vector.multi_reduction <maximumf>, %407, %cst_162 [1] : vector<72x128xf32> to vector<72xf32>
    %409 = vector.shape_cast %408 : vector<72xf32> to vector<72x1xf32>
    %cst_163 = arith.constant 0.000000e+00 : f32
    %410 = vector.shape_cast %409 : vector<72x1xf32> to vector<72x1xf32>
    %411 = vector.broadcast %410 : vector<72x1xf32> to vector<72x128xf32>
    %412 = vector.broadcast %cst_163 : f32 to vector<72x128xf32>
    %413 = arith.select %401, %411, %412 : vector<72x128xi1>, vector<72x128xf32>
    %414 = vector.shape_cast %405 : vector<72x1xf32> to vector<72x1xf32>
    %415 = vector.broadcast %414 : vector<72x1xf32> to vector<72x128xf32>
    %416 = arith.select %386, %415, %413 : vector<72x128xi1>, vector<72x128xf32>
    %417 = arith.subf %383, %416 : vector<72x128xf32>
    %418 = math.exp %417 : vector<72x128xf32>
    %cst_164 = arith.constant 0.000000e+00 : f32
    %419 = vector.broadcast %cst_164 : f32 to vector<72x128xf32>
    %420 = arith.select %386, %418, %419 : vector<72x128xi1>, vector<72x128xf32>
    %cst_165 = arith.constant dense<0.000000e+00> : vector<72xf32>
    %421 = vector.multi_reduction <add>, %420, %cst_165 [1] : vector<72x128xf32> to vector<72xf32>
    %422 = vector.shape_cast %421 : vector<72xf32> to vector<72x1xf32>
    %cst_166 = arith.constant 0.000000e+00 : f32
    %423 = vector.broadcast %cst_166 : f32 to vector<72x128xf32>
    %424 = arith.select %401, %418, %423 : vector<72x128xi1>, vector<72x128xf32>
    %cst_167 = arith.constant dense<0.000000e+00> : vector<72xf32>
    %425 = vector.multi_reduction <add>, %424, %cst_167 [1] : vector<72x128xf32> to vector<72xf32>
    %426 = vector.shape_cast %425 : vector<72xf32> to vector<72x1xf32>
    %427 = arith.select %391, %418, %383 : vector<72x128xi1>, vector<72x128xf32>
    %428 = math.tanh %383 : vector<72x128xf32>
    %429 = arith.select %396, %428, %427 : vector<72x128xi1>, vector<72x128xf32>
    %430 = vector.broadcast %422 : vector<72x1xf32> to vector<72x128xf32>
    %431 = arith.divf %418, %430 : vector<72x128xf32>
    %432 = arith.select %386, %431, %429 : vector<72x128xi1>, vector<72x128xf32>
    %433 = vector.broadcast %426 : vector<72x1xf32> to vector<72x128xf32>
    %434 = arith.divf %418, %433 : vector<72x128xf32>
    %435 = arith.select %401, %434, %432 : vector<72x128xi1>, vector<72x128xf32>
    %c0_168 = arith.constant 0 : index
    %c0_169 = arith.constant 0 : index
    %436 = vector.load %arg5[%c0_168, %c0_169] : memref<72x128xf32, #tpu.memory_space<vmem>>, vector<72x128xf32>
    tpu.vector_store %arg5[%c0_168, %c0_169], %435 {strides = array<i32>} : memref<72x128xf32, #tpu.memory_space<vmem>>, vector<72x128xf32>,
    return
  }
  func.func @transform_0(%arg0: i32) -> (i32, i32) {
    %c0_i32 = arith.constant 0 : i32
    %c0_i32_0 = arith.constant 0 : i32
    %c0_i32_1 = arith.constant 0 : i32
    return %c0_i32, %c0_i32_0 : i32, i32
  }
  func.func @transform_1(%arg0: i32) -> (i32, i32) {
    %c0_i32 = arith.constant 0 : i32
    %c0_i32_0 = arith.constant 0 : i32
    %c0_i32_1 = arith.constant 0 : i32
    return %c0_i32, %c0_i32_0 : i32, i32
  }
  func.func @transform_2(%arg0: i32) -> (i32, i32) {
    %c0_i32 = arith.constant 0 : i32
    %c0_i32_0 = arith.constant 0 : i32
    %c0_i32_1 = arith.constant 0 : i32
    return %c0_i32, %c0_i32_0 : i32, i32
  }
  func.func @transform_3(%arg0: i32) -> (i32, i32) {
    %c0_i32 = arith.constant 0 : i32
    %c0_i32_0 = arith.constant 0 : i32
    %c0_i32_1 = arith.constant 0 : i32
    return %c0_i32, %c0_i32_0 : i32, i32
  }
  func.func @transform_4(%arg0: i32) -> (i32, i32) {
    %c0_i32 = arith.constant 0 : i32
    %c0_i32_0 = arith.constant 0 : i32
    %c0_i32_1 = arith.constant 0 : i32
    return %c0_i32, %c0_i32_0 : i32, i32
  }
  func.func @transform_5(%arg0: i32) -> (i32, i32) {
    %c0_i32 = arith.constant 0 : i32
    %c0_i32_0 = arith.constant 0 : i32
    %c0_i32_1 = arith.constant 0 : i32
    return %c0_i32, %c0_i32_0 : i32, i32
  }
  func.func @transform_6(%arg0: i32) -> (i32, i32) {
    %c0_i32 = arith.constant 0 : i32
    %c0_i32_0 = arith.constant 0 : i32
    %c0_i32_1 = arith.constant 0 : i32
    return %c0_i32, %c0_i32_0 : i32, i32
  }
}

</mosaic_0001>

<llo_original>
// kernel: decoder_rnn_forward.1
$region0: #{decoder_rnn_forward.1}
  #allocation0 [shape = 'u32[]', space=smem, size = 0x4, offset = 0x4, fixed_abs, tag = 'smem constant byte address 0x4 - core index']
  #allocation1 [shape = 'u32[144,128]{1,0:T(1,128)}', space=vmem, size = 0x12000, scoped, tag = 'internal scratch']
  #allocation2 [shape = 'f32[72,512]{1,0:T(8,128)}', space=vmem, size = 0x24000, scoped, tag = 'scratch operand']
  #allocation3 [shape = 'f32[72,128]{1,0:T(8,128)}', space=vmem, size = 0x9000, scoped, tag = 'scratch operand']
  %s0 = inlined_call_operand.vmem [shape: f32[80,40], index: 0, kind: input, shape index: {}]
  %s1 = inlined_call_operand.vmem [shape: f32[40,768], index: 1, kind: input, shape index: {}]
  %s2 = inlined_call_operand.hbm [shape: f32[128,640], index: 2, kind: input, shape index: {}]
  %s3 = inlined_call_operand.vmem [shape: f32[1,896], index: 3, kind: input, shape index: {}]
  %s4 = inlined_call_operand.vmem [shape: f32[72,128], index: 4, kind: output, shape index: {0}]
  %s5 = inlined_call_operand.vmem [shape: f32[8,128], index: 5, kind: output, shape index: {1}]
  %s6 = inlined_call_operand.vmem [shape: f32[8,128], index: 6, kind: output, shape index: {2}]
  %7 = xla_tuple %s4, %s5, %s6
  %s8 = sld [smem:[#allocation0]]
  $region46: #{decoder_rnn_forward.1} parent=0
    _
  %s10 = ssub.s32 1, %s8
  %s11 = scalar_select 0, %s10, %s8
  $region1: #{decoder_rnn_forward.1} parent=0
    #allocation4 [shape = 'u8[327680]{0}', space=vmem, size = 0x50000, scoped, tag = 'input window, operand 2, single buffered']
    #allocation5 [shape = 's32[1]{0}', space=sflag, size = 0x4, scoped, tag = 'scoped memory for decoder_rnn_forward.1']
    %12 = vsyncpa [#allocation5], 0
    // Predicated region
    $region2: #{decoder_rnn_forward.1} parent=1 // pred_check
      _
    $region3: #{decoder_rnn_forward.1} parent=1 // pred_check_branch
      %14 = sbr.rel (0) target = $region5
    $region4: #{decoder_rnn_forward.1} parent=1 // pred_region
      _
    $region5: #{decoder_rnn_forward.1} parent=1 // pred_fallthru
      _
    // Predicated region
    $region6: #{decoder_rnn_forward.1} parent=1 // pred_check
      _
    $region7: #{decoder_rnn_forward.1} parent=1 // pred_check_branch
      %16 = sbr.rel (0) target = $region9
    $region8: #{decoder_rnn_forward.1} parent=1 // pred_region
      _
    $region9: #{decoder_rnn_forward.1} parent=1 // pred_fallthru
      _
    // Predicated region
    $region10: #{decoder_rnn_forward.1} parent=1 // pred_check
      _
    $region11: #{decoder_rnn_forward.1} parent=1 // pred_check_branch
      %18 = sbr.rel (0) target = $region13
    $region12: #{decoder_rnn_forward.1} parent=1 // pred_region
      %s20 = ssub.s32 10240, 10240
      %21 = vsyncadd [#allocation5], %s20
      %s22 = sshll.u32 [#allocation4], 4
      %s23 = int_to_ptr.vmem [resolvable:$true] %s22
      %28 = dma.hbm_to_vmem [thread:$0]  %s2, 10240, %s23, [#allocation5], 640, 640, 40
    $region13: #{decoder_rnn_forward.1} parent=1 // pred_fallthru
      _
    // Predicated region
    $region14: #{decoder_rnn_forward.1} parent=1 // pred_check
      _
    $region15: #{decoder_rnn_forward.1} parent=1 // pred_check_branch
      %30 = sbr.rel (0) target = $region17
    $region16: #{decoder_rnn_forward.1} parent=1 // pred_region
      _
    $region17: #{decoder_rnn_forward.1} parent=1 // pred_fallthru
      _
    // Predicated region
    $region18: #{decoder_rnn_forward.1} parent=1 // pred_check
      _
    $region19: #{decoder_rnn_forward.1} parent=1 // pred_check_branch
      %32 = sbr.rel (0) target = $region21
    $region20: #{decoder_rnn_forward.1} parent=1 // pred_region
      %33 = dma.done [#allocation5], 10240
    $region21: #{decoder_rnn_forward.1} parent=1 // pred_fallthru
      _
    %v34 = vld [vmem:[%s3] sm:$0x3]
    %v35 = vld [vmem:[%s3 + $0x2] sm:$0xf]
    %v36 = vld [vmem:[%s3 + $0x6] sm:$0x1]
    %v37 = vld [vmem:[%s0] sm:$0xff]
    %v38 = vld [vmem:[%s1] sm:$0xff]
    %v39 = vld [vmem:[%s1 + $0x8] sm:$0xff]
    %v40 = vld [vmem:[%s1 + $0x30] sm:$0xff]
    %v41 = vld [vmem:[%s1 + $0x38] sm:$0xff]
    %v42 = vld [vmem:[%s1 + $0x60] sm:$0xff]
    %v43 = vld [vmem:[%s1 + $0x68] sm:$0xff]
    %v44 = vld [vmem:[%s1 + $0x90] sm:$0xff]
    %v45 = vld [vmem:[%s1 + $0x98] sm:$0xff]
    %v46 = vld [vmem:[%s1 + $0xc0] sm:$0xff]
    %v47 = vld [vmem:[%s1 + $0xc8] sm:$0xff]
    %v49 = vlaneseq
    %v50 = vshrl.u32 %v49, 7
    %v51 = vsub.s32 0, %v50
    %v52 = vrot.slane %v34, %v51
    %v53 = vlaneseq
    %v54 = vshrl.u32 %v53, 7
    %v55 = vsub.s32 1, %v54
    %v56 = vrot.slane %v34, %v55
    %vm59 = vcmask 326656
    %v61 = vsel %vm59, %v37, 0
    %63 = vmatprep.subr.mxu0 %v39
    %64 = vmatpush1.msra.mxu0 %v38
    %65 = vmatprep.subr.mxu0 %v41
    %66 = vmatpush1.msra.mxu0 %v40
    %67 = vmatprep.subr.mxu0 %v43
    %68 = vmatpush1.msra.mxu0 %v42
    %69 = vmatprep.subr.mxu0 %v45
    %70 = vmatpush1.msra.mxu0 %v44
    %71 = vmatprep.subr.mxu0 %v47
    %72 = vmatpush1.msra.mxu0 %v46
    %73 = vmatprep.subr.mxu0 0.0
    %74 = vmatpush1.msra.mxu0 0.0
    %75 = vmatprep.subr.mxu0 0.0
    %76 = vmatpush1.msra.mxu0 0.0
    %77 = vmatprep.subr.mxu0 0.0
    %78 = vmatpush1.msra.mxu0 0.0
    %79 = vmatprep.subr.mxu0 0.0
    %80 = vmatpush1.msra.mxu0 0.0
    %81 = vmatprep.subr.mxu0 0.0
    %82 = vmatpush1.msra.mxu0 0.0
    %83 = vmatprep.subr.mxu0 0.0
    %84 = vmatpush1.msra.mxu0 0.0
    %85 = vmatprep.subr.mxu0 0.0
    %86 = vmatpush1.msra.mxu0 0.0
    %87 = vmatprep.subr.mxu0 0.0
    %88 = vmatpush1.msra.mxu0 0.0
    %89 = vmatprep.subr.mxu0 0.0
    %90 = vmatpush1.msra.mxu0 0.0
    %91 = vmatprep.subr.mxu0 0.0
    %92 = vmatpush1.msra.mxu0 0.0
    %93 = vmatprep.subr.mxu0 0.0
    %94 = vmatpush1.msra.mxu0 0.0
    %95 = vmatprep.subr.mxu0 0.0
    %96 = vmatpush1.msra.mxu0 0.0
    %97 = vmatprep.subr.mxu0 0.0
    %98 = vmatpush1.msra.mxu0 0.0
    %99 = vmatprep.subr.mxu0 0.0
    %100 = vmatpush1.msra.mxu0 0.0
    %101 = vmatprep.subr.mxu0 0.0
    %102 = vmatpush1.msra.mxu0 0.0
    %103 = vmatprep.subr.mxu0 0.0
    %104 = vmatpush1.msra.mxu0 0.0
    %105 = vmatprep.subr.mxu0 0.0
    %106 = vmatpush1.msra.mxu0 0.0
    %107 = vmatprep.subr.mxu0 0.0
    %108 = vmatpush1.msra.mxu0 0.0
    %109 = vmatprep.subr.mxu0 0.0
    %110 = vmatpush1.msra.mxu0 0.0
    %111 = vmatprep.subr.mxu0 0.0
    %112 = vmatpush1.msra.mxu0 0.0
    %113 = vmatprep.subr.mxu0 0.0
    %114 = vmatpush1.msra.mxu0 0.0
    %115 = vmatprep.subr.mxu0 0.0
    %116 = vmatpush1.msra.mxu0 0.0
    %117 = vmatprep.subr.mxu0 0.0
    %118 = vmatpush1.msra.mxu0 0.0
    %119 = vmatprep.subr.mxu0 0.0
    %120 = vmatpush1.msra.mxu0 0.0
    %121 = vmatprep.subr.mxu0 0.0
    %122 = vmatpush1.msra.mxu0 0.0
    %123 = vmatprep.subr.mxu0 0.0
    %124 = vmatpush1.msra.mxu0 0.0
    %125 = vmatprep.subr.mxu0 0.0
    %126 = vmatpush1.msra.mxu0 0.0
    %127 = vmatprep.mubr.f32.mxu0 0.0
    %128 = vmatmul.mubr.f32.gmra.mrb[0].mxu0 %v61
    %v129 = vpop.f32.mrb[0].mxu0
    %v130 = vadd.f32 %v52, %v129
    %v131 = vpop.f32.mrb[0].mxu0
    %v132 = vadd.f32 %v56, %v131
    %133 = vdwg.mxu0
    %v134 = vtanh.pop %v130
    %v135 = vtanh.pop %v132
    %v136 = vld [vmem:[%s0 + $0x8] sm:$0xff]
    %v137 = vld [vmem:[%s0 + $0x10] sm:$0xff]
    %v138 = vld [vmem:[%s0 + $0x18] sm:$0xff]
    %v139 = vld [vmem:[%s0 + $0x20] sm:$0xff]
    %v140 = vld [vmem:[%s0 + $0x28] sm:$0xff]
    %v141 = vld [vmem:[%s0 + $0x30] sm:$0xff]
    %v142 = vld [vmem:[%s0 + $0x38] sm:$0xff]
    %v143 = vld [vmem:[%s0 + $0x40] sm:$0xff]
    %v144 = vld [vmem:[%s0 + $0x48] sm:$0xff]
    %v145 = vld [vmem:[%s1 + $0x10] sm:$0xff]
    %v146 = vld [vmem:[%s1 + $0x18] sm:$0xff]
    %v147 = vld [vmem:[%s1 + $0x20] sm:$0xff]
    %v148 = vld [vmem:[%s1 + $0x28] sm:$0xff]
    %v149 = vld [vmem:[%s1 + $0x40] sm:$0xff]
    %v150 = vld [vmem:[%s1 + $0x48] sm:$0xff]
    %v151 = vld [vmem:[%s1 + $0x50] sm:$0xff]
    %v152 = vld [vmem:[%s1 + $0x58] sm:$0xff]
    %v153 = vld [vmem:[%s1 + $0x70] sm:$0xff]
    %v154 = vld [vmem:[%s1 + $0x78] sm:$0xff]
    %v155 = vld [vmem:[%s1 + $0x80] sm:$0xff]
    %v156 = vld [vmem:[%s1 + $0x88] sm:$0xff]
    %v157 = vld [vmem:[%s1 + $0xa0] sm:$0xff]
    %v158 = vld [vmem:[%s1 + $0xa8] sm:$0xff]
    %v159 = vld [vmem:[%s1 + $0xb0] sm:$0xff]
    %v160 = vld [vmem:[%s1 + $0xb8] sm:$0xff]
    %v161 = vld [vmem:[%s1 + $0xd0] sm:$0xff]
    %v162 = vld [vmem:[%s1 + $0xd8] sm:$0xff]
    %v163 = vld [vmem:[%s1 + $0xe0] sm:$0xff]
    %v164 = vld [vmem:[%s1 + $0xe8] sm:$0xff]
    %v166 = vlaneseq
    %v167 = vshrl.u32 %v166, 7
    %v168 = vsub.s32 0, %v167
    %v169 = vrot.slane %v35, %v168
    %v170 = vlaneseq
    %v171 = vshrl.u32 %v170, 7
    %v172 = vsub.s32 1, %v171
    %v173 = vrot.slane %v35, %v172
    %v174 = vlaneseq
    %v175 = vshrl.u32 %v174, 7
    %v176 = vsub.s32 2, %v175
    %v177 = vrot.slane %v35, %v176
    %v178 = vlaneseq
    %v179 = vshrl.u32 %v178, 7
    %v180 = vsub.s32 3, %v179
    %v181 = vrot.slane %v35, %v180
    %v187 = vsel %vm59, %v136, 0
    %v190 = vsel %vm59, %v137, 0
    %v193 = vsel %vm59, %v138, 0
    %v196 = vsel %vm59, %v139, 0
    %v199 = vsel %vm59, %v140, 0
    %v202 = vsel %vm59, %v141, 0
    %v205 = vsel %vm59, %v142, 0
    %v208 = vsel %vm59, %v143, 0
    %v211 = vsel %vm59, %v144, 0
    %213 = vmatprep.subr.mxu0 %v146
    %214 = vmatpush1.msra.mxu0 %v145
    %215 = vmatprep.subr.mxu0 %v150
    %216 = vmatpush1.msra.mxu0 %v149
    %217 = vmatprep.subr.mxu0 %v154
    %218 = vmatpush1.msra.mxu0 %v153
    %219 = vmatprep.subr.mxu0 %v158
    %220 = vmatpush1.msra.mxu0 %v157
    %221 = vmatprep.subr.mxu0 %v162
    %222 = vmatpush1.msra.mxu0 %v161
    %223 = vmatprep.subr.mxu0 0.0
    %224 = vmatpush1.msra.mxu0 0.0
    %225 = vmatprep.subr.mxu0 0.0
    %226 = vmatpush1.msra.mxu0 0.0
    %227 = vmatprep.subr.mxu0 0.0
    %228 = vmatpush1.msra.mxu0 0.0
    %229 = vmatprep.subr.mxu0 0.0
    %230 = vmatpush1.msra.mxu0 0.0
    %231 = vmatprep.subr.mxu0 0.0
    %232 = vmatpush1.msra.mxu0 0.0
    %233 = vmatprep.subr.mxu0 0.0
    %234 = vmatpush1.msra.mxu0 0.0
    %235 = vmatprep.subr.mxu0 0.0
    %236 = vmatpush1.msra.mxu0 0.0
    %237 = vmatprep.subr.mxu0 0.0
    %238 = vmatpush1.msra.mxu0 0.0
    %239 = vmatprep.subr.mxu0 0.0
    %240 = vmatpush1.msra.mxu0 0.0
    %241 = vmatprep.subr.mxu0 0.0
    %242 = vmatpush1.msra.mxu0 0.0
    %243 = vmatprep.subr.mxu0 0.0
    %244 = vmatpush1.msra.mxu0 0.0
    %245 = vmatprep.subr.mxu0 0.0
    %246 = vmatpush1.msra.mxu0 0.0
    %247 = vmatprep.subr.mxu0 0.0
    %248 = vmatpush1.msra.mxu0 0.0
    %249 = vmatprep.subr.mxu0 0.0
    %250 = vmatpush1.msra.mxu0 0.0
    %251 = vmatprep.subr.mxu0 0.0
    %252 = vmatpush1.msra.mxu0 0.0
    %253 = vmatprep.subr.mxu0 0.0
    %254 = vmatpush1.msra.mxu0 0.0
    %255 = vmatprep.subr.mxu0 0.0
    %256 = vmatpush1.msra.mxu0 0.0
    %257 = vmatprep.subr.mxu0 0.0
    %258 = vmatpush1.msra.mxu0 0.0
    %259 = vmatprep.subr.mxu0 0.0
    %260 = vmatpush1.msra.mxu0 0.0
    %261 = vmatprep.subr.mxu0 0.0
    %262 = vmatpush1.msra.mxu0 0.0
    %263 = vmatprep.subr.mxu0 0.0
    %264 = vmatpush1.msra.mxu0 0.0
    %265 = vmatprep.subr.mxu0 0.0
    %266 = vmatpush1.msra.mxu0 0.0
    %267 = vmatprep.subr.mxu0 0.0
    %268 = vmatpush1.msra.mxu0 0.0
    %269 = vmatprep.subr.mxu0 0.0
    %270 = vmatpush1.msra.mxu0 0.0
    %271 = vmatprep.subr.mxu0 0.0
    %272 = vmatpush1.msra.mxu0 0.0
    %273 = vmatprep.subr.mxu0 0.0
    %274 = vmatpush1.msra.mxu0 0.0
    %275 = vmatprep.subr.mxu0 0.0
    %276 = vmatpush1.msra.mxu0 0.0
    %277 = vmatprep.mubr.f32.mxu0 0.0
    %278 = vmatmul.mubr.f32.gmra.mrb[0].mxu0 %v187
    %v279 = vpop.f32.mrb[0].mxu0
    %v280 = vadd.f32 %v169, %v279
    %v281 = vpop.f32.mrb[0].mxu0
    %v282 = vadd.f32 %v173, %v281
    %283 = vmatprep.mubr.f32.mxu0 0.0
    %284 = vmatmul.mubr.f32.gmra.mrb[0].mxu0 %v190
    %v285 = vpop.f32.mrb[0].mxu0
    %v286 = vadd.f32 %v169, %v285
    %v287 = vpop.f32.mrb[0].mxu0
    %v288 = vadd.f32 %v173, %v287
    %289 = vmatprep.mubr.f32.mxu0 0.0
    %290 = vmatmul.mubr.f32.gmra.mrb[0].mxu0 %v193
    %v291 = vpop.f32.mrb[0].mxu0
    %v292 = vadd.f32 %v169, %v291
    %v293 = vpop.f32.mrb[0].mxu0
    %v294 = vadd.f32 %v173, %v293
    %295 = vmatprep.mubr.f32.mxu0 0.0
    %296 = vmatmul.mubr.f32.gmra.mrb[0].mxu0 %v196
    %v297 = vpop.f32.mrb[0].mxu0
    %v298 = vadd.f32 %v169, %v297
    %v299 = vpop.f32.mrb[0].mxu0
    %v300 = vadd.f32 %v173, %v299
    %301 = vmatprep.mubr.f32.mxu0 0.0
    %302 = vmatmul.mubr.f32.gmra.mrb[0].mxu0 %v199
    %v303 = vpop.f32.mrb[0].mxu0
    %v304 = vadd.f32 %v169, %v303
    %v305 = vpop.f32.mrb[0].mxu0
    %v306 = vadd.f32 %v173, %v305
    %307 = vmatprep.mubr.f32.mxu0 0.0
    %308 = vmatmul.mubr.f32.gmra.mrb[0].mxu0 %v202
    %v309 = vpop.f32.mrb[0].mxu0
    %v310 = vadd.f32 %v169, %v309
    %v311 = vpop.f32.mrb[0].mxu0
    %v312 = vadd.f32 %v173, %v311
    %313 = vmatprep.mubr.f32.mxu0 0.0
    %314 = vmatmul.mubr.f32.gmra.mrb[0].mxu0 %v205
    %v315 = vpop.f32.mrb[0].mxu0
    %v316 = vadd.f32 %v169, %v315
    %v317 = vpop.f32.mrb[0].mxu0
    %v318 = vadd.f32 %v173, %v317
    %319 = vmatprep.mubr.f32.mxu0 0.0
    %320 = vmatmul.mubr.f32.gmra.mrb[0].mxu0 %v208
    %v321 = vpop.f32.mrb[0].mxu0
    %v322 = vadd.f32 %v169, %v321
    %v323 = vpop.f32.mrb[0].mxu0
    %v324 = vadd.f32 %v173, %v323
    %325 = vmatprep.mubr.f32.mxu0 0.0
    %326 = vmatmul.mubr.f32.gmra.mrb[0].mxu0 %v211
    %v327 = vpop.f32.mrb[0].mxu0
    %v328 = vadd.f32 %v169, %v327
    %v329 = vpop.f32.mrb[0].mxu0
    %v330 = vadd.f32 %v173, %v329
    %331 = vdwg.mxu0
    %332 = vmatprep.subr.mxu0 %v148
    %333 = vmatpush1.msra.mxu0 %v147
    %334 = vmatprep.subr.mxu0 %v152
    %335 = vmatpush1.msra.mxu0 %v151
    %336 = vmatprep.subr.mxu0 %v156
    %337 = vmatpush1.msra.mxu0 %v155
    %338 = vmatprep.subr.mxu0 %v160
    %339 = vmatpush1.msra.mxu0 %v159
    %340 = vmatprep.subr.mxu0 %v164
    %341 = vmatpush1.msra.mxu0 %v163
    %342 = vmatprep.subr.mxu0 0.0
    %343 = vmatpush1.msra.mxu0 0.0
    %344 = vmatprep.subr.mxu0 0.0
    %345 = vmatpush1.msra.mxu0 0.0
    %346 = vmatprep.subr.mxu0 0.0
    %347 = vmatpush1.msra.mxu0 0.0
    %348 = vmatprep.subr.mxu0 0.0
    %349 = vmatpush1.msra.mxu0 0.0
    %350 = vmatprep.subr.mxu0 0.0
    %351 = vmatpush1.msra.mxu0 0.0
    %352 = vmatprep.subr.mxu0 0.0
    %353 = vmatpush1.msra.mxu0 0.0
    %354 = vmatprep.subr.mxu0 0.0
    %355 = vmatpush1.msra.mxu0 0.0
    %356 = vmatprep.subr.mxu0 0.0
    %357 = vmatpush1.msra.mxu0 0.0
    %358 = vmatprep.subr.mxu0 0.0
    %359 = vmatpush1.msra.mxu0 0.0
    %360 = vmatprep.subr.mxu0 0.0
    %361 = vmatpush1.msra.mxu0 0.0
    %362 = vmatprep.subr.mxu0 0.0
    %363 = vmatpush1.msra.mxu0 0.0
    %364 = vmatprep.subr.mxu0 0.0
    %365 = vmatpush1.msra.mxu0 0.0
    %366 = vmatprep.subr.mxu0 0.0
    %367 = vmatpush1.msra.mxu0 0.0
    %368 = vmatprep.subr.mxu0 0.0
    %369 = vmatpush1.msra.mxu0 0.0
    %370 = vmatprep.subr.mxu0 0.0
    %371 = vmatpush1.msra.mxu0 0.0
    %372 = vmatprep.subr.mxu0 0.0
    %373 = vmatpush1.msra.mxu0 0.0
    %374 = vmatprep.subr.mxu0 0.0
    %375 = vmatpush1.msra.mxu0 0.0
    %376 = vmatprep.subr.mxu0 0.0
    %377 = vmatpush1.msra.mxu0 0.0
    %378 = vmatprep.subr.mxu0 0.0
    %379 = vmatpush1.msra.mxu0 0.0
    %380 = vmatprep.subr.mxu0 0.0
    %381 = vmatpush1.msra.mxu0 0.0
    %382 = vmatprep.subr.mxu0 0.0
    %383 = vmatpush1.msra.mxu0 0.0
    %384 = vmatprep.subr.mxu0 0.0
    %385 = vmatpush1.msra.mxu0 0.0
    %386 = vmatprep.subr.mxu0 0.0
    %387 = vmatpush1.msra.mxu0 0.0
    %388 = vmatprep.subr.mxu0 0.0
    %389 = vmatpush1.msra.mxu0 0.0
    %390 = vmatprep.subr.mxu0 0.0
    %391 = vmatpush1.msra.mxu0 0.0
    %392 = vmatprep.subr.mxu0 0.0
    %393 = vmatpush1.msra.mxu0 0.0
    %394 = vmatprep.subr.mxu0 0.0
    %395 = vmatpush1.msra.mxu0 0.0
    %396 = vmatprep.mubr.f32.mxu0 0.0
    %397 = vmatmul.mubr.f32.gmra.mrb[0].mxu0 %v187
    %v398 = vpop.f32.mrb[0].mxu0
    %v399 = vadd.f32 %v177, %v398
    %v400 = vpop.f32.mrb[0].mxu0
    %v401 = vadd.f32 %v181, %v400
    %402 = vmatprep.mubr.f32.mxu0 0.0
    %403 = vmatmul.mubr.f32.gmra.mrb[0].mxu0 %v190
    %v404 = vpop.f32.mrb[0].mxu0
    %v405 = vadd.f32 %v177, %v404
    %v406 = vpop.f32.mrb[0].mxu0
    %v407 = vadd.f32 %v181, %v406
    %408 = vmatprep.mubr.f32.mxu0 0.0
    %409 = vmatmul.mubr.f32.gmra.mrb[0].mxu0 %v193
    %v410 = vpop.f32.mrb[0].mxu0
    %v411 = vadd.f32 %v177, %v410
    %v412 = vpop.f32.mrb[0].mxu0
    %v413 = vadd.f32 %v181, %v412
    %414 = vmatprep.mubr.f32.mxu0 0.0
    %415 = vmatmul.mubr.f32.gmra.mrb[0].mxu0 %v196
    %v416 = vpop.f32.mrb[0].mxu0
    %v417 = vadd.f32 %v177, %v416
    %v418 = vpop.f32.mrb[0].mxu0
    %v419 = vadd.f32 %v181, %v418
    %420 = vmatprep.mubr.f32.mxu0 0.0
    %421 = vmatmul.mubr.f32.gmra.mrb[0].mxu0 %v199
    %v422 = vpop.f32.mrb[0].mxu0
    %v423 = vadd.f32 %v177, %v422
    %v424 = vpop.f32.mrb[0].mxu0
    %v425 = vadd.f32 %v181, %v424
    %426 = vmatprep.mubr.f32.mxu0 0.0
    %427 = vmatmul.mubr.f32.gmra.mrb[0].mxu0 %v202
    %v428 = vpop.f32.mrb[0].mxu0
    %v429 = vadd.f32 %v177, %v428
    %v430 = vpop.f32.mrb[0].mxu0
    %v431 = vadd.f32 %v181, %v430
    %432 = vmatprep.mubr.f32.mxu0 0.0
    %433 = vmatmul.mubr.f32.gmra.mrb[0].mxu0 %v205
    %v434 = vpop.f32.mrb[0].mxu0
    %v435 = vadd.f32 %v177, %v434
    %v436 = vpop.f32.mrb[0].mxu0
    %v437 = vadd.f32 %v181, %v436
    %438 = vmatprep.mubr.f32.mxu0 0.0
    %439 = vmatmul.mubr.f32.gmra.mrb[0].mxu0 %v208
    %v440 = vpop.f32.mrb[0].mxu0
    %v441 = vadd.f32 %v177, %v440
    %v442 = vpop.f32.mrb[0].mxu0
    %v443 = vadd.f32 %v181, %v442
    %444 = vmatprep.mubr.f32.mxu0 0.0
    %445 = vmatmul.mubr.f32.gmra.mrb[0].mxu0 %v211
    %v446 = vpop.f32.mrb[0].mxu0
    %v447 = vadd.f32 %v177, %v446
    %v448 = vpop.f32.mrb[0].mxu0
    %v449 = vadd.f32 %v181, %v448
    %450 = vdwg.mxu0
    %451 = vst [vmem:[#allocation2] sm:$0xff] %v280
    %452 = vst [vmem:[#allocation2 + $0x8] sm:$0xff] %v282
    %453 = vst [vmem:[#allocation2 + $0x10] sm:$0xff] %v399
    %454 = vst [vmem:[#allocation2 + $0x18] sm:$0xff] %v401
    %455 = vst [vmem:[#allocation2 + $0x20] sm:$0xff] %v286
    %456 = vst [vmem:[#allocation2 + $0x28] sm:$0xff] %v288
    %457 = vst [vmem:[#allocation2 + $0x30] sm:$0xff] %v405
    %458 = vst [vmem:[#allocation2 + $0x38] sm:$0xff] %v407
    %459 = vst [vmem:[#allocation2 + $0x40] sm:$0xff] %v292
    %460 = vst [vmem:[#allocation2 + $0x48] sm:$0xff] %v294
    %461 = vst [vmem:[#allocation2 + $0x50] sm:$0xff] %v411
    %462 = vst [vmem:[#allocation2 + $0x58] sm:$0xff] %v413
    %463 = vst [vmem:[#allocation2 + $0x60] sm:$0xff] %v298
    %464 = vst [vmem:[#allocation2 + $0x68] sm:$0xff] %v300
    %465 = vst [vmem:[#allocation2 + $0x70] sm:$0xff] %v417
    %466 = vst [vmem:[#allocation2 + $0x78] sm:$0xff] %v419
    %467 = vst [vmem:[#allocation2 + $0x80] sm:$0xff] %v304
    %468 = vst [vmem:[#allocation2 + $0x88] sm:$0xff] %v306
    %469 = vst [vmem:[#allocation2 + $0x90] sm:$0xff] %v423
    %470 = vst [vmem:[#allocation2 + $0x98] sm:$0xff] %v425
    %471 = vst [vmem:[#allocation2 + $0xa0] sm:$0xff] %v310
    %472 = vst [vmem:[#allocation2 + $0xa8] sm:$0xff] %v312
    %473 = vst [vmem:[#allocation2 + $0xb0] sm:$0xff] %v429
    %474 = vst [vmem:[#allocation2 + $0xb8] sm:$0xff] %v431
    %475 = vst [vmem:[#allocation2 + $0xc0] sm:$0xff] %v316
    %476 = vst [vmem:[#allocation2 + $0xc8] sm:$0xff] %v318
    %477 = vst [vmem:[#allocation2 + $0xd0] sm:$0xff] %v435
    %478 = vst [vmem:[#allocation2 + $0xd8] sm:$0xff] %v437
    %479 = vst [vmem:[#allocation2 + $0xe0] sm:$0xff] %v322
    %480 = vst [vmem:[#allocation2 + $0xe8] sm:$0xff] %v324
    %481 = vst [vmem:[#allocation2 + $0xf0] sm:$0xff] %v441
    %482 = vst [vmem:[#allocation2 + $0xf8] sm:$0xff] %v443
    %483 = vst [vmem:[#allocation2 + $0x100] sm:$0xff] %v328
    %484 = vst [vmem:[#allocation2 + $0x108] sm:$0xff] %v330
    %485 = vst [vmem:[#allocation2 + $0x110] sm:$0xff] %v447
    %486 = vst [vmem:[#allocation2 + $0x118] sm:$0xff] %v449
    %s487 = smul.u32 0, 4
    %s488 = smul.addr %s487, 8
    %s489 = scalar_lea.vmem [#allocation2], %s488
    %v490 = vld [vmem:[%s489] sm:$0xff]
    %v491 = vld [vmem:[%s489 + $0x8] sm:$0xff]
    %v492 = vld [vmem:[%s489 + $0x10] sm:$0xff]
    %v493 = vld [vmem:[%s489 + $0x18] sm:$0xff]
    %v494 = vld [vmem:[#allocation4] sm:$0xff]
    %v495 = vld [vmem:[#allocation4 + $0x8] sm:$0xff]
    %v496 = vld [vmem:[#allocation4 + $0x10] sm:$0xff]
    %v497 = vld [vmem:[#allocation4 + $0x18] sm:$0xff]
    %v498 = vld [vmem:[#allocation4 + $0x28] sm:$0xff]
    %v499 = vld [vmem:[#allocation4 + $0x30] sm:$0xff]
    %v500 = vld [vmem:[#allocation4 + $0x38] sm:$0xff]
    %v501 = vld [vmem:[#allocation4 + $0x40] sm:$0xff]
    %v502 = vld [vmem:[#allocation4 + $0x50] sm:$0xff]
    %v503 = vld [vmem:[#allocation4 + $0x58] sm:$0xff]
    %v504 = vld [vmem:[#allocation4 + $0x60] sm:$0xff]
    %v505 = vld [vmem:[#allocation4 + $0x68] sm:$0xff]
    %v506 = vld [vmem:[#allocation4 + $0x78] sm:$0xff]
    %v507 = vld [vmem:[#allocation4 + $0x80] sm:$0xff]
    %v508 = vld [vmem:[#allocation4 + $0x88] sm:$0xff]
    %v509 = vld [vmem:[#allocation4 + $0x90] sm:$0xff]
    %v510 = vld [vmem:[#allocation4 + $0xa0] sm:$0xff]
    %v511 = vld [vmem:[#allocation4 + $0xa8] sm:$0xff]
    %v512 = vld [vmem:[#allocation4 + $0xb0] sm:$0xff]
    %v513 = vld [vmem:[#allocation4 + $0xb8] sm:$0xff]
    %v514 = vld [vmem:[#allocation4 + $0xc8] sm:$0xff]
    %v515 = vld [vmem:[#allocation4 + $0xd0] sm:$0xff]
    %v516 = vld [vmem:[#allocation4 + $0xd8] sm:$0xff]
    %v517 = vld [vmem:[#allocation4 + $0xe0] sm:$0xff]
    %v518 = vld [vmem:[#allocation4 + $0xf0] sm:$0xff]
    %v519 = vld [vmem:[#allocation4 + $0xf8] sm:$0xff]
    %v520 = vld [vmem:[#allocation4 + $0x100] sm:$0xff]
    %v521 = vld [vmem:[#allocation4 + $0x108] sm:$0xff]
    %v522 = vld [vmem:[#allocation4 + $0x118] sm:$0xff]
    %v523 = vld [vmem:[#allocation4 + $0x120] sm:$0xff]
    %v524 = vld [vmem:[#allocation4 + $0x128] sm:$0xff]
    %v525 = vld [vmem:[#allocation4 + $0x130] sm:$0xff]
    %v526 = vld [vmem:[#allocation4 + $0x140] sm:$0xff]
    %v527 = vld [vmem:[#allocation4 + $0x148] sm:$0xff]
    %v528 = vld [vmem:[#allocation4 + $0x150] sm:$0xff]
    %v529 = vld [vmem:[#allocation4 + $0x158] sm:$0xff]
    %v530 = vld [vmem:[#allocation4 + $0x168] sm:$0xff]
    %v531 = vld [vmem:[#allocation4 + $0x170] sm:$0xff]
    %v532 = vld [vmem:[#allocation4 + $0x178] sm:$0xff]
    %v533 = vld [vmem:[#allocation4 + $0x180] sm:$0xff]
    %v534 = vld [vmem:[#allocation4 + $0x190] sm:$0xff]
    %v535 = vld [vmem:[#allocation4 + $0x198] sm:$0xff]
    %v536 = vld [vmem:[#allocation4 + $0x1a0] sm:$0xff]
    %v537 = vld [vmem:[#allocation4 + $0x1a8] sm:$0xff]
    %v538 = vld [vmem:[#allocation4 + $0x1b8] sm:$0xff]
    %v539 = vld [vmem:[#allocation4 + $0x1c0] sm:$0xff]
    %v540 = vld [vmem:[#allocation4 + $0x1c8] sm:$0xff]
    %v541 = vld [vmem:[#allocation4 + $0x1d0] sm:$0xff]
    %v542 = vld [vmem:[#allocation4 + $0x1e0] sm:$0xff]
    %v543 = vld [vmem:[#allocation4 + $0x1e8] sm:$0xff]
    %v544 = vld [vmem:[#allocation4 + $0x1f0] sm:$0xff]
    %v545 = vld [vmem:[#allocation4 + $0x1f8] sm:$0xff]
    %v546 = vld [vmem:[#allocation4 + $0x208] sm:$0xff]
    %v547 = vld [vmem:[#allocation4 + $0x210] sm:$0xff]
    %v548 = vld [vmem:[#allocation4 + $0x218] sm:$0xff]
    %v549 = vld [vmem:[#allocation4 + $0x220] sm:$0xff]
    %v550 = vld [vmem:[#allocation4 + $0x230] sm:$0xff]
    %v551 = vld [vmem:[#allocation4 + $0x238] sm:$0xff]
    %v552 = vld [vmem:[#allocation4 + $0x240] sm:$0xff]
    %v553 = vld [vmem:[#allocation4 + $0x248] sm:$0xff]
    %v554 = vld [vmem:[#allocation4 + $0x258] sm:$0xff]
    %v555 = vld [vmem:[#allocation4 + $0x260] sm:$0xff]
    %v556 = vld [vmem:[#allocation4 + $0x268] sm:$0xff]
    %v557 = vld [vmem:[#allocation4 + $0x270] sm:$0xff]
    %558 = vmatprep.subr.mxu0 %v495
    %559 = vmatpush1.msra.mxu0 %v494
    %560 = vmatprep.subr.mxu0 %v499
    %561 = vmatpush1.msra.mxu0 %v498
    %562 = vmatprep.subr.mxu0 %v503
    %563 = vmatpush1.msra.mxu0 %v502
    %564 = vmatprep.subr.mxu0 %v507
    %565 = vmatpush1.msra.mxu0 %v506
    %566 = vmatprep.subr.mxu0 %v511
    %567 = vmatpush1.msra.mxu0 %v510
    %568 = vmatprep.subr.mxu0 %v515
    %569 = vmatpush1.msra.mxu0 %v514
    %570 = vmatprep.subr.mxu0 %v519
    %571 = vmatpush1.msra.mxu0 %v518
    %572 = vmatprep.subr.mxu0 %v523
    %573 = vmatpush1.msra.mxu0 %v522
    %574 = vmatprep.subr.mxu0 %v527
    %575 = vmatpush1.msra.mxu0 %v526
    %576 = vmatprep.subr.mxu0 %v531
    %577 = vmatpush1.msra.mxu0 %v530
    %578 = vmatprep.subr.mxu0 %v535
    %579 = vmatpush1.msra.mxu0 %v534
    %580 = vmatprep.subr.mxu0 %v539
    %581 = vmatpush1.msra.mxu0 %v538
    %582 = vmatprep.subr.mxu0 %v543
    %583 = vmatpush1.msra.mxu0 %v542
    %584 = vmatprep.subr.mxu0 %v547
    %585 = vmatpush1.msra.mxu0 %v546
    %586 = vmatprep.subr.mxu0 %v551
    %587 = vmatpush1.msra.mxu0 %v550
    %588 = vmatprep.subr.mxu0 %v555
    %589 = vmatpush1.msra.mxu0 %v554
    %590 = vmatprep.subr.mxu0 0.0
    %591 = vmatpush1.msra.mxu0 0.0
    %592 = vmatprep.subr.mxu0 0.0
    %593 = vmatpush1.msra.mxu0 0.0
    %594 = vmatprep.subr.mxu0 0.0
    %595 = vmatpush1.msra.mxu0 0.0
    %596 = vmatprep.subr.mxu0 0.0
    %597 = vmatpush1.msra.mxu0 0.0
    %598 = vmatprep.subr.mxu0 0.0
    %599 = vmatpush1.msra.mxu0 0.0
    %600 = vmatprep.subr.mxu0 0.0
    %601 = vmatpush1.msra.mxu0 0.0
    %602 = vmatprep.subr.mxu0 0.0
    %603 = vmatpush1.msra.mxu0 0.0
    %604 = vmatprep.subr.mxu0 0.0
    %605 = vmatpush1.msra.mxu0 0.0
    %606 = vmatprep.subr.mxu0 0.0
    %607 = vmatpush1.msra.mxu0 0.0
    %608 = vmatprep.subr.mxu0 0.0
    %609 = vmatpush1.msra.mxu0 0.0
    %610 = vmatprep.subr.mxu0 0.0
    %611 = vmatpush1.msra.mxu0 0.0
    %612 = vmatprep.subr.mxu0 0.0
    %613 = vmatpush1.msra.mxu0 0.0
    %614 = vmatprep.subr.mxu0 0.0
    %615 = vmatpush1.msra.mxu0 0.0
    %616 = vmatprep.subr.mxu0 0.0
    %617 = vmatpush1.msra.mxu0 0.0
    %618 = vmatprep.subr.mxu0 0.0
    %619 = vmatpush1.msra.mxu0 0.0
    %620 = vmatprep.subr.mxu0 0.0
    %621 = vmatpush1.msra.mxu0 0.0
    %622 = vmatprep.mubr.f32.mxu0 0.0
    %623 = vmatmul.mubr.f32.gmra.mrb[0].mxu0 %v134
    %v624 = vpop.f32.mrb[0].mxu0
    %v625 = vadd.f32 0.0, %v624
    %v626 = vpop.f32.mrb[0].mxu0
    %v627 = vadd.f32 0.0, %v626
    %628 = vdwg.mxu0
    %629 = vmatprep.subr.mxu0 %v497
    %630 = vmatpush1.msra.mxu0 %v496
    %631 = vmatprep.subr.mxu0 %v501
    %632 = vmatpush1.msra.mxu0 %v500
    %633 = vmatprep.subr.mxu0 %v505
    %634 = vmatpush1.msra.mxu0 %v504
    %635 = vmatprep.subr.mxu0 %v509
    %636 = vmatpush1.msra.mxu0 %v508
    %637 = vmatprep.subr.mxu0 %v513
    %638 = vmatpush1.msra.mxu0 %v512
    %639 = vmatprep.subr.mxu0 %v517
    %640 = vmatpush1.msra.mxu0 %v516
    %641 = vmatprep.subr.mxu0 %v521
    %642 = vmatpush1.msra.mxu0 %v520
    %643 = vmatprep.subr.mxu0 %v525
    %644 = vmatpush1.msra.mxu0 %v524
    %645 = vmatprep.subr.mxu0 %v529
    %646 = vmatpush1.msra.mxu0 %v528
    %647 = vmatprep.subr.mxu0 %v533
    %648 = vmatpush1.msra.mxu0 %v532
    %649 = vmatprep.subr.mxu0 %v537
    %650 = vmatpush1.msra.mxu0 %v536
    %651 = vmatprep.subr.mxu0 %v541
    %652 = vmatpush1.msra.mxu0 %v540
    %653 = vmatprep.subr.mxu0 %v545
    %654 = vmatpush1.msra.mxu0 %v544
    %655 = vmatprep.subr.mxu0 %v549
    %656 = vmatpush1.msra.mxu0 %v548
    %657 = vmatprep.subr.mxu0 %v553
    %658 = vmatpush1.msra.mxu0 %v552
    %659 = vmatprep.subr.mxu0 %v557
    %660 = vmatpush1.msra.mxu0 %v556
    %661 = vmatprep.subr.mxu0 0.0
    %662 = vmatpush1.msra.mxu0 0.0
    %663 = vmatprep.subr.mxu0 0.0
    %664 = vmatpush1.msra.mxu0 0.0
    %665 = vmatprep.subr.mxu0 0.0
    %666 = vmatpush1.msra.mxu0 0.0
    %667 = vmatprep.subr.mxu0 0.0
    %668 = vmatpush1.msra.mxu0 0.0
    %669 = vmatprep.subr.mxu0 0.0
    %670 = vmatpush1.msra.mxu0 0.0
    %671 = vmatprep.subr.mxu0 0.0
    %672 = vmatpush1.msra.mxu0 0.0
    %673 = vmatprep.subr.mxu0 0.0
    %674 = vmatpush1.msra.mxu0 0.0
    %675 = vmatprep.subr.mxu0 0.0
    %676 = vmatpush1.msra.mxu0 0.0
    %677 = vmatprep.subr.mxu0 0.0
    %678 = vmatpush1.msra.mxu0 0.0
    %679 = vmatprep.subr.mxu0 0.0
    %680 = vmatpush1.msra.mxu0 0.0
    %681 = vmatprep.subr.mxu0 0.0
    %682 = vmatpush1.msra.mxu0 0.0
    %683 = vmatprep.subr.mxu0 0.0
    %684 = vmatpush1.msra.mxu0 0.0
    %685 = vmatprep.subr.mxu0 0.0
    %686 = vmatpush1.msra.mxu0 0.0
    %687 = vmatprep.subr.mxu0 0.0
    %688 = vmatpush1.msra.mxu0 0.0
    %689 = vmatprep.subr.mxu0 0.0
    %690 = vmatpush1.msra.mxu0 0.0
    %691 = vmatprep.subr.mxu0 0.0
    %692 = vmatpush1.msra.mxu0 0.0
    %693 = vmatprep.mubr.f32.mxu0 0.0
    %694 = vmatmul.mubr.f32.gmra.mrb[0].mxu0 %v134
    %v695 = vpop.f32.mrb[0].mxu0
    %v696 = vadd.f32 0.0, %v695
    %v697 = vpop.f32.mrb[0].mxu0
    %v698 = vadd.f32 0.0, %v697
    %699 = vdwg.mxu0
    %v700 = vadd.f32 %v490, %v625
    %v701 = vadd.f32 %v491, %v627
    %v702 = vadd.f32 %v492, %v696
    %v703 = vadd.f32 %v493, %v698
    %v704 = vmul.f32 %v700, 0.5
    %v705 = vtanh.pop %v704
    %v706 = vadd.f32 %v705, 1.0
    %v707 = vmul.f32 %v706, 0.5
    %v708 = vmul.f32 %v701, 0.5
    %v709 = vtanh.pop %v708
    %v710 = vadd.f32 %v709, 1.0
    %v711 = vmul.f32 %v710, 0.5
    %v712 = vtanh.pop %v702
    %v713 = vmul.f32 %v703, 0.5
    %v714 = vtanh.pop %v713
    %v715 = vadd.f32 %v714, 1.0
    %v716 = vmul.f32 %v715, 0.5
    %v717 = vmul.f32 %v711, %v135
    %v718 = vmul.f32 %v707, %v712
    %v719 = vadd.f32 %v717, %v718
    %v720 = vtanh.pop %v719
    %v721 = vmul.f32 %v716, %v720
    %722 = vst [vmem:[#allocation3] sm:$0xff] %v721
    %s723 = smul.u32 1, 4
    %s724 = smul.addr %s723, 8
    %s725 = scalar_lea.vmem [#allocation2], %s724
    %v726 = vld [vmem:[%s725] sm:$0xff]
    %v727 = vld [vmem:[%s725 + $0x8] sm:$0xff]
    %v728 = vld [vmem:[%s725 + $0x10] sm:$0xff]
    %v729 = vld [vmem:[%s725 + $0x18] sm:$0xff]
    %v730 = vld [vmem:[#allocation4] sm:$0xff]
    %v731 = vld [vmem:[#allocation4 + $0x8] sm:$0xff]
    %v732 = vld [vmem:[#allocation4 + $0x10] sm:$0xff]
    %v733 = vld [vmem:[#allocation4 + $0x18] sm:$0xff]
    %v734 = vld [vmem:[#allocation4 + $0x28] sm:$0xff]
    %v735 = vld [vmem:[#allocation4 + $0x30] sm:$0xff]
    %v736 = vld [vmem:[#allocation4 + $0x38] sm:$0xff]
    %v737 = vld [vmem:[#allocation4 + $0x40] sm:$0xff]
    %v738 = vld [vmem:[#allocation4 + $0x50] sm:$0xff]
    %v739 = vld [vmem:[#allocation4 + $0x58] sm:$0xff]
    %v740 = vld [vmem:[#allocation4 + $0x60] sm:$0xff]
    %v741 = vld [vmem:[#allocation4 + $0x68] sm:$0xff]
    %v742 = vld [vmem:[#allocation4 + $0x78] sm:$0xff]
    %v743 = vld [vmem:[#allocation4 + $0x80] sm:$0xff]
    %v744 = vld [vmem:[#allocation4 + $0x88] sm:$0xff]
    %v745 = vld [vmem:[#allocation4 + $0x90] sm:$0xff]
    %v746 = vld [vmem:[#allocation4 + $0xa0] sm:$0xff]
    %v747 = vld [vmem:[#allocation4 + $0xa8] sm:$0xff]
    %v748 = vld [vmem:[#allocation4 + $0xb0] sm:$0xff]
    %v749 = vld [vmem:[#allocation4 + $0xb8] sm:$0xff]
    %v750 = vld [vmem:[#allocation4 + $0xc8] sm:$0xff]
    %v751 = vld [vmem:[#allocation4 + $0xd0] sm:$0xff]
    %v752 = vld [vmem:[#allocation4 + $0xd8] sm:$0xff]
    %v753 = vld [vmem:[#allocation4 + $0xe0] sm:$0xff]
    %v754 = vld [vmem:[#allocation4 + $0xf0] sm:$0xff]
    %v755 = vld [vmem:[#allocation4 + $0xf8] sm:$0xff]
    %v756 = vld [vmem:[#allocation4 + $0x100] sm:$0xff]
    %v757 = vld [vmem:[#allocation4 + $0x108] sm:$0xff]
    %v758 = vld [vmem:[#allocation4 + $0x118] sm:$0xff]
    %v759 = vld [vmem:[#allocation4 + $0x120] sm:$0xff]
    %v760 = vld [vmem:[#allocation4 + $0x128] sm:$0xff]
    %v761 = vld [vmem:[#allocation4 + $0x130] sm:$0xff]
    %v762 = vld [vmem:[#allocation4 + $0x140] sm:$0xff]
    %v763 = vld [vmem:[#allocation4 + $0x148] sm:$0xff]
    %v764 = vld [vmem:[#allocation4 + $0x150] sm:$0xff]
    %v765 = vld [vmem:[#allocation4 + $0x158] sm:$0xff]
    %v766 = vld [vmem:[#allocation4 + $0x168] sm:$0xff]
    %v767 = vld [vmem:[#allocation4 + $0x170] sm:$0xff]
    %v768 = vld [vmem:[#allocation4 + $0x178] sm:$0xff]
    %v769 = vld [vmem:[#allocation4 + $0x180] sm:$0xff]
    %v770 = vld [vmem:[#allocation4 + $0x190] sm:$0xff]
    %v771 = vld [vmem:[#allocation4 + $0x198] sm:$0xff]
    %v772 = vld [vmem:[#allocation4 + $0x1a0] sm:$0xff]
    %v773 = vld [vmem:[#allocation4 + $0x1a8] sm:$0xff]
    %v774 = vld [vmem:[#allocation4 + $0x1b8] sm:$0xff]
    %v775 = vld [vmem:[#allocation4 + $0x1c0] sm:$0xff]
    %v776 = vld [vmem:[#allocation4 + $0x1c8] sm:$0xff]
    %v777 = vld [vmem:[#allocation4 + $0x1d0] sm:$0xff]
    %v778 = vld [vmem:[#allocation4 + $0x1e0] sm:$0xff]
    %v779 = vld [vmem:[#allocation4 + $0x1e8] sm:$0xff]
    %v780 = vld [vmem:[#allocation4 + $0x1f0] sm:$0xff]
    %v781 = vld [vmem:[#allocation4 + $0x1f8] sm:$0xff]
    %v782 = vld [vmem:[#allocation4 + $0x208] sm:$0xff]
    %v783 = vld [vmem:[#allocation4 + $0x210] sm:$0xff]
    %v784 = vld [vmem:[#allocation4 + $0x218] sm:$0xff]
    %v785 = vld [vmem:[#allocation4 + $0x220] sm:$0xff]
    %v786 = vld [vmem:[#allocation4 + $0x230] sm:$0xff]
    %v787 = vld [vmem:[#allocation4 + $0x238] sm:$0xff]
    %v788 = vld [vmem:[#allocation4 + $0x240] sm:$0xff]
    %v789 = vld [vmem:[#allocation4 + $0x248] sm:$0xff]
    %v790 = vld [vmem:[#allocation4 + $0x258] sm:$0xff]
    %v791 = vld [vmem:[#allocation4 + $0x260] sm:$0xff]
    %v792 = vld [vmem:[#allocation4 + $0x268] sm:$0xff]
    %v793 = vld [vmem:[#allocation4 + $0x270] sm:$0xff]
    %794 = vmatprep.subr.mxu0 %v731
    %795 = vmatpush1.msra.mxu0 %v730
    %796 = vmatprep.subr.mxu0 %v735
    %797 = vmatpush1.msra.mxu0 %v734
    %798 = vmatprep.subr.mxu0 %v739
    %799 = vmatpush1.msra.mxu0 %v738
    %800 = vmatprep.subr.mxu0 %v743
    %801 = vmatpush1.msra.mxu0 %v742
    %802 = vmatprep.subr.mxu0 %v747
    %803 = vmatpush1.msra.mxu0 %v746
    %804 = vmatprep.subr.mxu0 %v751
    %805 = vmatpush1.msra.mxu0 %v750
    %806 = vmatprep.subr.mxu0 %v755
    %807 = vmatpush1.msra.mxu0 %v754
    %808 = vmatprep.subr.mxu0 %v759
    %809 = vmatpush1.msra.mxu0 %v758
    %810 = vmatprep.subr.mxu0 %v763
    %811 = vmatpush1.msra.mxu0 %v762
    %812 = vmatprep.subr.mxu0 %v767
    %813 = vmatpush1.msra.mxu0 %v766
    %814 = vmatprep.subr.mxu0 %v771
    %815 = vmatpush1.msra.mxu0 %v770
    %816 = vmatprep.subr.mxu0 %v775
    %817 = vmatpush1.msra.mxu0 %v774
    %818 = vmatprep.subr.mxu0 %v779
    %819 = vmatpush1.msra.mxu0 %v778
    %820 = vmatprep.subr.mxu0 %v783
    %821 = vmatpush1.msra.mxu0 %v782
    %822 = vmatprep.subr.mxu0 %v787
    %823 = vmatpush1.msra.mxu0 %v786
    %824 = vmatprep.subr.mxu0 %v791
    %825 = vmatpush1.msra.mxu0 %v790
    %826 = vmatprep.subr.mxu0 0.0
    %827 = vmatpush1.msra.mxu0 0.0
    %828 = vmatprep.subr.mxu0 0.0
    %829 = vmatpush1.msra.mxu0 0.0
    %830 = vmatprep.subr.mxu0 0.0
    %831 = vmatpush1.msra.mxu0 0.0
    %832 = vmatprep.subr.mxu0 0.0
    %833 = vmatpush1.msra.mxu0 0.0
    %834 = vmatprep.subr.mxu0 0.0
    %835 = vmatpush1.msra.mxu0 0.0
    %836 = vmatprep.subr.mxu0 0.0
    %837 = vmatpush1.msra.mxu0 0.0
    %838 = vmatprep.subr.mxu0 0.0
    %839 = vmatpush1.msra.mxu0 0.0
    %840 = vmatprep.subr.mxu0 0.0
    %841 = vmatpush1.msra.mxu0 0.0
    %842 = vmatprep.subr.mxu0 0.0
    %843 = vmatpush1.msra.mxu0 0.0
    %844 = vmatprep.subr.mxu0 0.0
    %845 = vmatpush1.msra.mxu0 0.0
    %846 = vmatprep.subr.mxu0 0.0
    %847 = vmatpush1.msra.mxu0 0.0
    %848 = vmatprep.subr.mxu0 0.0
    %849 = vmatpush1.msra.mxu0 0.0
    %850 = vmatprep.subr.mxu0 0.0
    %851 = vmatpush1.msra.mxu0 0.0
    %852 = vmatprep.subr.mxu0 0.0
    %853 = vmatpush1.msra.mxu0 0.0
    %854 = vmatprep.subr.mxu0 0.0
    %855 = vmatpush1.msra.mxu0 0.0
    %856 = vmatprep.subr.mxu0 0.0
    %857 = vmatpush1.msra.mxu0 0.0
    %858 = vmatprep.mubr.f32.mxu0 0.0
    %859 = vmatmul.mubr.f32.gmra.mrb[0].mxu0 %v721
    %v860 = vpop.f32.mrb[0].mxu0
    %v861 = vadd.f32 0.0, %v860
    %v862 = vpop.f32.mrb[0].mxu0
    %v863 = vadd.f32 0.0, %v862
    %864 = vdwg.mxu0
    %865 = vmatprep.subr.mxu0 %v733
    %866 = vmatpush1.msra.mxu0 %v732
    %867 = vmatprep.subr.mxu0 %v737
    %868 = vmatpush1.msra.mxu0 %v736
    %869 = vmatprep.subr.mxu0 %v741
    %870 = vmatpush1.msra.mxu0 %v740
    %871 = vmatprep.subr.mxu0 %v745
    %872 = vmatpush1.msra.mxu0 %v744
    %873 = vmatprep.subr.mxu0 %v749
    %874 = vmatpush1.msra.mxu0 %v748
    %875 = vmatprep.subr.mxu0 %v753
    %876 = vmatpush1.msra.mxu0 %v752
    %877 = vmatprep.subr.mxu0 %v757
    %878 = vmatpush1.msra.mxu0 %v756
    %879 = vmatprep.subr.mxu0 %v761
    %880 = vmatpush1.msra.mxu0 %v760
    %881 = vmatprep.subr.mxu0 %v765
    %882 = vmatpush1.msra.mxu0 %v764
    %883 = vmatprep.subr.mxu0 %v769
    %884 = vmatpush1.msra.mxu0 %v768
    %885 = vmatprep.subr.mxu0 %v773
    %886 = vmatpush1.msra.mxu0 %v772
    %887 = vmatprep.subr.mxu0 %v777
    %888 = vmatpush1.msra.mxu0 %v776
    %889 = vmatprep.subr.mxu0 %v781
    %890 = vmatpush1.msra.mxu0 %v780
    %891 = vmatprep.subr.mxu0 %v785
    %892 = vmatpush1.msra.mxu0 %v784
    %893 = vmatprep.subr.mxu0 %v789
    %894 = vmatpush1.msra.mxu0 %v788
    %895 = vmatprep.subr.mxu0 %v793
    %896 = vmatpush1.msra.mxu0 %v792
    %897 = vmatprep.subr.mxu0 0.0
    %898 = vmatpush1.msra.mxu0 0.0
    %899 = vmatprep.subr.mxu0 0.0
    %900 = vmatpush1.msra.mxu0 0.0
    %901 = vmatprep.subr.mxu0 0.0
    %902 = vmatpush1.msra.mxu0 0.0
    %903 = vmatprep.subr.mxu0 0.0
    %904 = vmatpush1.msra.mxu0 0.0
    %905 = vmatprep.subr.mxu0 0.0
    %906 = vmatpush1.msra.mxu0 0.0
    %907 = vmatprep.subr.mxu0 0.0
    %908 = vmatpush1.msra.mxu0 0.0
    %909 = vmatprep.subr.mxu0 0.0
    %910 = vmatpush1.msra.mxu0 0.0
    %911 = vmatprep.subr.mxu0 0.0
    %912 = vmatpush1.msra.mxu0 0.0
    %913 = vmatprep.subr.mxu0 0.0
    %914 = vmatpush1.msra.mxu0 0.0
    %915 = vmatprep.subr.mxu0 0.0
    %916 = vmatpush1.msra.mxu0 0.0
    %917 = vmatprep.subr.mxu0 0.0
    %918 = vmatpush1.msra.mxu0 0.0
    %919 = vmatprep.subr.mxu0 0.0
    %920 = vmatpush1.msra.mxu0 0.0
    %921 = vmatprep.subr.mxu0 0.0
    %922 = vmatpush1.msra.mxu0 0.0
    %923 = vmatprep.subr.mxu0 0.0
    %924 = vmatpush1.msra.mxu0 0.0
    %925 = vmatprep.subr.mxu0 0.0
    %926 = vmatpush1.msra.mxu0 0.0
    %927 = vmatprep.subr.mxu0 0.0
    %928 = vmatpush1.msra.mxu0 0.0
    %929 = vmatprep.mubr.f32.mxu0 0.0
    %930 = vmatmul.mubr.f32.gmra.mrb[0].mxu0 %v721
    %v931 = vpop.f32.mrb[0].mxu0
    %v932 = vadd.f32 0.0, %v931
    %v933 = vpop.f32.mrb[0].mxu0
    %v934 = vadd.f32 0.0, %v933
    %935 = vdwg.mxu0
    %v936 = vadd.f32 %v726, %v861
    %v937 = vadd.f32 %v727, %v863
    %v938 = vadd.f32 %v728, %v932
    %v939 = vadd.f32 %v729, %v934
    %v940 = vmul.f32 %v936, 0.5
    %v941 = vtanh.pop %v940
    %v942 = vadd.f32 %v941, 1.0
    %v943 = vmul.f32 %v942, 0.5
    %v944 = vmul.f32 %v937, 0.5
    %v945 = vtanh.pop %v944
    %v946 = vadd.f32 %v945, 1.0
    %v947 = vmul.f32 %v946, 0.5
    %v948 = vtanh.pop %v938
    %v949 = vmul.f32 %v939, 0.5
    %v950 = vtanh.pop %v949
    %v951 = vadd.f32 %v950, 1.0
    %v952 = vmul.f32 %v951, 0.5
    %v953 = vmul.f32 %v947, %v719
    %v954 = vmul.f32 %v943, %v948
    %v955 = vadd.f32 %v953, %v954
    %v956 = vtanh.pop %v955
    %v957 = vmul.f32 %v952, %v956
    %s958 = scalar_lea.vmem [#allocation3], 8
    %959 = vst [vmem:[%s958] sm:$0xff] %v957
    %s960 = smul.u32 2, 4
    %s961 = smul.addr %s960, 8
    %s962 = scalar_lea.vmem [#allocation2], %s961
    %v963 = vld [vmem:[%s962] sm:$0xff]
    %v964 = vld [vmem:[%s962 + $0x8] sm:$0xff]
    %v965 = vld [vmem:[%s962 + $0x10] sm:$0xff]
    %v966 = vld [vmem:[%s962 + $0x18] sm:$0xff]
    %v967 = vld [vmem:[#allocation4] sm:$0xff]
    %v968 = vld [vmem:[#allocation4 + $0x8] sm:$0xff]
    %v969 = vld [vmem:[#allocation4 + $0x10] sm:$0xff]
    %v970 = vld [vmem:[#allocation4 + $0x18] sm:$0xff]
    %v971 = vld [vmem:[#allocation4 + $0x28] sm:$0xff]
    %v972 = vld [vmem:[#allocation4 + $0x30] sm:$0xff]
    %v973 = vld [vmem:[#allocation4 + $0x38] sm:$0xff]
    %v974 = vld [vmem:[#allocation4 + $0x40] sm:$0xff]
    %v975 = vld [vmem:[#allocation4 + $0x50] sm:$0xff]
    %v976 = vld [vmem:[#allocation4 + $0x58] sm:$0xff]
    %v977 = vld [vmem:[#allocation4 + $0x60] sm:$0xff]
    %v978 = vld [vmem:[#allocation4 + $0x68] sm:$0xff]
    %v979 = vld [vmem:[#allocation4 + $0x78] sm:$0xff]
    %v980 = vld [vmem:[#allocation4 + $0x80] sm:$0xff]
    %v981 = vld [vmem:[#allocation4 + $0x88] sm:$0xff]
    %v982 = vld [vmem:[#allocation4 + $0x90] sm:$0xff]
    %v983 = vld [vmem:[#allocation4 + $0xa0] sm:$0xff]
    %v984 = vld [vmem:[#allocation4 + $0xa8] sm:$0xff]
    %v985 = vld [vmem:[#allocation4 + $0xb0] sm:$0xff]
    %v986 = vld [vmem:[#allocation4 + $0xb8] sm:$0xff]
    %v987 = vld [vmem:[#allocation4 + $0xc8] sm:$0xff]
    %v988 = vld [vmem:[#allocation4 + $0xd0] sm:$0xff]
    %v989 = vld [vmem:[#allocation4 + $0xd8] sm:$0xff]
    %v990 = vld [vmem:[#allocation4 + $0xe0] sm:$0xff]
    %v991 = vld [vmem:[#allocation4 + $0xf0] sm:$0xff]
    %v992 = vld [vmem:[#allocation4 + $0xf8] sm:$0xff]
    %v993 = vld [vmem:[#allocation4 + $0x100] sm:$0xff]
    %v994 = vld [vmem:[#allocation4 + $0x108] sm:$0xff]
    %v995 = vld [vmem:[#allocation4 + $0x118] sm:$0xff]
    %v996 = vld [vmem:[#allocation4 + $0x120] sm:$0xff]
    %v997 = vld [vmem:[#allocation4 + $0x128] sm:$0xff]
    %v998 = vld [vmem:[#allocation4 + $0x130] sm:$0xff]
    %v999 = vld [vmem:[#allocation4 + $0x140] sm:$0xff]
    %v1000 = vld [vmem:[#allocation4 + $0x148] sm:$0xff]
    %v1001 = vld [vmem:[#allocation4 + $0x150] sm:$0xff]
    %v1002 = vld [vmem:[#allocation4 + $0x158] sm:$0xff]
    %v1003 = vld [vmem:[#allocation4 + $0x168] sm:$0xff]
    %v1004 = vld [vmem:[#allocation4 + $0x170] sm:$0xff]
    %v1005 = vld [vmem:[#allocation4 + $0x178] sm:$0xff]
    %v1006 = vld [vmem:[#allocation4 + $0x180] sm:$0xff]
    %v1007 = vld [vmem:[#allocation4 + $0x190] sm:$0xff]
    %v1008 = vld [vmem:[#allocation4 + $0x198] sm:$0xff]
    %v1009 = vld [vmem:[#allocation4 + $0x1a0] sm:$0xff]
    %v1010 = vld [vmem:[#allocation4 + $0x1a8] sm:$0xff]
    %v1011 = vld [vmem:[#allocation4 + $0x1b8] sm:$0xff]
    %v1012 = vld [vmem:[#allocation4 + $0x1c0] sm:$0xff]
    %v1013 = vld [vmem:[#allocation4 + $0x1c8] sm:$0xff]
    %v1014 = vld [vmem:[#allocation4 + $0x1d0] sm:$0xff]
    %v1015 = vld [vmem:[#allocation4 + $0x1e0] sm:$0xff]
    %v1016 = vld [vmem:[#allocation4 + $0x1e8] sm:$0xff]
    %v1017 = vld [vmem:[#allocation4 + $0x1f0] sm:$0xff]
    %v1018 = vld [vmem:[#allocation4 + $0x1f8] sm:$0xff]
    %v1019 = vld [vmem:[#allocation4 + $0x208] sm:$0xff]
    %v1020 = vld [vmem:[#allocation4 + $0x210] sm:$0xff]
    %v1021 = vld [vmem:[#allocation4 + $0x218] sm:$0xff]
    %v1022 = vld [vmem:[#allocation4 + $0x220] sm:$0xff]
    %v1023 = vld [vmem:[#allocation4 + $0x230] sm:$0xff]
    %v1024 = vld [vmem:[#allocation4 + $0x238] sm:$0xff]
    %v1025 = vld [vmem:[#allocation4 + $0x240] sm:$0xff]
    %v1026 = vld [vmem:[#allocation4 + $0x248] sm:$0xff]
    %v1027 = vld [vmem:[#allocation4 + $0x258] sm:$0xff]
    %v1028 = vld [vmem:[#allocation4 + $0x260] sm:$0xff]
    %v1029 = vld [vmem:[#allocation4 + $0x268] sm:$0xff]
    %v1030 = vld [vmem:[#allocation4 + $0x270] sm:$0xff]
    %1031 = vmatprep.subr.mxu0 %v968
    %1032 = vmatpush1.msra.mxu0 %v967
    %1033 = vmatprep.subr.mxu0 %v972
    %1034 = vmatpush1.msra.mxu0 %v971
    %1035 = vmatprep.subr.mxu0 %v976
    %1036 = vmatpush1.msra.mxu0 %v975
    %1037 = vmatprep.subr.mxu0 %v980
    %1038 = vmatpush1.msra.mxu0 %v979
    %1039 = vmatprep.subr.mxu0 %v984
    %1040 = vmatpush1.msra.mxu0 %v983
    %1041 = vmatprep.subr.mxu0 %v988
    %1042 = vmatpush1.msra.mxu0 %v987
    %1043 = vmatprep.subr.mxu0 %v992
    %1044 = vmatpush1.msra.mxu0 %v991
    %1045 = vmatprep.subr.mxu0 %v996
    %1046 = vmatpush1.msra.mxu0 %v995
    %1047 = vmatprep.subr.mxu0 %v1000
    %1048 = vmatpush1.msra.mxu0 %v999
    %1049 = vmatprep.subr.mxu0 %v1004
    %1050 = vmatpush1.msra.mxu0 %v1003
    %1051 = vmatprep.subr.mxu0 %v1008
    %1052 = vmatpush1.msra.mxu0 %v1007
    %1053 = vmatprep.subr.mxu0 %v1012
    %1054 = vmatpush1.msra.mxu0 %v1011
    %1055 = vmatprep.subr.mxu0 %v1016
    %1056 = vmatpush1.msra.mxu0 %v1015
    %1057 = vmatprep.subr.mxu0 %v1020
    %1058 = vmatpush1.msra.mxu0 %v1019
    %1059 = vmatprep.subr.mxu0 %v1024
    %1060 = vmatpush1.msra.mxu0 %v1023
    %1061 = vmatprep.subr.mxu0 %v1028
    %1062 = vmatpush1.msra.mxu0 %v1027
    %1063 = vmatprep.subr.mxu0 0.0
    %1064 = vmatpush1.msra.mxu0 0.0
    %1065 = vmatprep.subr.mxu0 0.0
    %1066 = vmatpush1.msra.mxu0 0.0
    %1067 = vmatprep.subr.mxu0 0.0
    %1068 = vmatpush1.msra.mxu0 0.0
    %1069 = vmatprep.subr.mxu0 0.0
    %1070 = vmatpush1.msra.mxu0 0.0
    %1071 = vmatprep.subr.mxu0 0.0
    %1072 = vmatpush1.msra.mxu0 0.0
    %1073 = vmatprep.subr.mxu0 0.0
    %1074 = vmatpush1.msra.mxu0 0.0
    %1075 = vmatprep.subr.mxu0 0.0
    %1076 = vmatpush1.msra.mxu0 0.0
    %1077 = vmatprep.subr.mxu0 0.0
    %1078 = vmatpush1.msra.mxu0 0.0
    %1079 = vmatprep.subr.mxu0 0.0
    %1080 = vmatpush1.msra.mxu0 0.0
    %1081 = vmatprep.subr.mxu0 0.0
    %1082 = vmatpush1.msra.mxu0 0.0
    %1083 = vmatprep.subr.mxu0 0.0
    %1084 = vmatpush1.msra.mxu0 0.0
    %1085 = vmatprep.subr.mxu0 0.0
    %1086 = vmatpush1.msra.mxu0 0.0
    %1087 = vmatprep.subr.mxu0 0.0
    %1088 = vmatpush1.msra.mxu0 0.0
    %1089 = vmatprep.subr.mxu0 0.0
    %1090 = vmatpush1.msra.mxu0 0.0
    %1091 = vmatprep.subr.mxu0 0.0
    %1092 = vmatpush1.msra.mxu0 0.0
    %1093 = vmatprep.subr.mxu0 0.0
    %1094 = vmatpush1.msra.mxu0 0.0
    %1095 = vmatprep.mubr.f32.mxu0 0.0
    %1096 = vmatmul.mubr.f32.gmra.mrb[0].mxu0 %v957
    %v1097 = vpop.f32.mrb[0].mxu0
    %v1098 = vadd.f32 0.0, %v1097
    %v1099 = vpop.f32.mrb[0].mxu0
    %v1100 = vadd.f32 0.0, %v1099
    %1101 = vdwg.mxu0
    %1102 = vmatprep.subr.mxu0 %v970
    %1103 = vmatpush1.msra.mxu0 %v969
    %1104 = vmatprep.subr.mxu0 %v974
    %1105 = vmatpush1.msra.mxu0 %v973
    %1106 = vmatprep.subr.mxu0 %v978
    %1107 = vmatpush1.msra.mxu0 %v977
    %1108 = vmatprep.subr.mxu0 %v982
    %1109 = vmatpush1.msra.mxu0 %v981
    %1110 = vmatprep.subr.mxu0 %v986
    %1111 = vmatpush1.msra.mxu0 %v985
    %1112 = vmatprep.subr.mxu0 %v990
    %1113 = vmatpush1.msra.mxu0 %v989
    %1114 = vmatprep.subr.mxu0 %v994
    %1115 = vmatpush1.msra.mxu0 %v993
    %1116 = vmatprep.subr.mxu0 %v998
    %1117 = vmatpush1.msra.mxu0 %v997
    %1118 = vmatprep.subr.mxu0 %v1002
    %1119 = vmatpush1.msra.mxu0 %v1001
    %1120 = vmatprep.subr.mxu0 %v1006
    %1121 = vmatpush1.msra.mxu0 %v1005
    %1122 = vmatprep.subr.mxu0 %v1010
    %1123 = vmatpush1.msra.mxu0 %v1009
    %1124 = vmatprep.subr.mxu0 %v1014
    %1125 = vmatpush1.msra.mxu0 %v1013
    %1126 = vmatprep.subr.mxu0 %v1018
    %1127 = vmatpush1.msra.mxu0 %v1017
    %1128 = vmatprep.subr.mxu0 %v1022
    %1129 = vmatpush1.msra.mxu0 %v1021
    %1130 = vmatprep.subr.mxu0 %v1026
    %1131 = vmatpush1.msra.mxu0 %v1025
    %1132 = vmatprep.subr.mxu0 %v1030
    %1133 = vmatpush1.msra.mxu0 %v1029
    %1134 = vmatprep.subr.mxu0 0.0
    %1135 = vmatpush1.msra.mxu0 0.0
    %1136 = vmatprep.subr.mxu0 0.0
    %1137 = vmatpush1.msra.mxu0 0.0
    %1138 = vmatprep.subr.mxu0 0.0
    %1139 = vmatpush1.msra.mxu0 0.0
    %1140 = vmatprep.subr.mxu0 0.0
    %1141 = vmatpush1.msra.mxu0 0.0
    %1142 = vmatprep.subr.mxu0 0.0
    %1143 = vmatpush1.msra.mxu0 0.0
    %1144 = vmatprep.subr.mxu0 0.0
    %1145 = vmatpush1.msra.mxu0 0.0
    %1146 = vmatprep.subr.mxu0 0.0
    %1147 = vmatpush1.msra.mxu0 0.0
    %1148 = vmatprep.subr.mxu0 0.0
    %1149 = vmatpush1.msra.mxu0 0.0
    %1150 = vmatprep.subr.mxu0 0.0
    %1151 = vmatpush1.msra.mxu0 0.0
    %1152 = vmatprep.subr.mxu0 0.0
    %1153 = vmatpush1.msra.mxu0 0.0
    %1154 = vmatprep.subr.mxu0 0.0
    %1155 = vmatpush1.msra.mxu0 0.0
    %1156 = vmatprep.subr.mxu0 0.0
    %1157 = vmatpush1.msra.mxu0 0.0
    %1158 = vmatprep.subr.mxu0 0.0
    %1159 = vmatpush1.msra.mxu0 0.0
    %1160 = vmatprep.subr.mxu0 0.0
    %1161 = vmatpush1.msra.mxu0 0.0
    %1162 = vmatprep.subr.mxu0 0.0
    %1163 = vmatpush1.msra.mxu0 0.0
    %1164 = vmatprep.subr.mxu0 0.0
    %1165 = vmatpush1.msra.mxu0 0.0
    %1166 = vmatprep.mubr.f32.mxu0 0.0
    %1167 = vmatmul.mubr.f32.gmra.mrb[0].mxu0 %v957
    %v1168 = vpop.f32.mrb[0].mxu0
    %v1169 = vadd.f32 0.0, %v1168
    %v1170 = vpop.f32.mrb[0].mxu0
    %v1171 = vadd.f32 0.0, %v1170
    %1172 = vdwg.mxu0
    %v1173 = vadd.f32 %v963, %v1098
    %v1174 = vadd.f32 %v964, %v1100
    %v1175 = vadd.f32 %v965, %v1169
    %v1176 = vadd.f32 %v966, %v1171
    %v1177 = vmul.f32 %v1173, 0.5
    %v1178 = vtanh.pop %v1177
    %v1179 = vadd.f32 %v1178, 1.0
    %v1180 = vmul.f32 %v1179, 0.5
    %v1181 = vmul.f32 %v1174, 0.5
    %v1182 = vtanh.pop %v1181
    %v1183 = vadd.f32 %v1182, 1.0
    %v1184 = vmul.f32 %v1183, 0.5
    %v1185 = vtanh.pop %v1175
    %v1186 = vmul.f32 %v1176, 0.5
    %v1187 = vtanh.pop %v1186
    %v1188 = vadd.f32 %v1187, 1.0
    %v1189 = vmul.f32 %v1188, 0.5
    %v1190 = vmul.f32 %v1184, %v955
    %v1191 = vmul.f32 %v1180, %v1185
    %v1192 = vadd.f32 %v1190, %v1191
    %v1193 = vtanh.pop %v1192
    %v1194 = vmul.f32 %v1189, %v1193
    %s1195 = scalar_lea.vmem [#allocation3], 16
    %1196 = vst [vmem:[%s1195] sm:$0xff] %v1194
    %s1197 = smul.u32 3, 4
    %s1198 = smul.addr %s1197, 8
    %s1199 = scalar_lea.vmem [#allocation2], %s1198
    %v1200 = vld [vmem:[%s1199] sm:$0xff]
    %v1201 = vld [vmem:[%s1199 + $0x8] sm:$0xff]
    %v1202 = vld [vmem:[%s1199 + $0x10] sm:$0xff]
    %v1203 = vld [vmem:[%s1199 + $0x18] sm:$0xff]
    %v1204 = vld [vmem:[#allocation4] sm:$0xff]
    %v1205 = vld [vmem:[#allocation4 + $0x8] sm:$0xff]
    %v1206 = vld [vmem:[#allocation4 + $0x10] sm:$0xff]
    %v1207 = vld [vmem:[#allocation4 + $0x18] sm:$0xff]
    %v1208 = vld [vmem:[#allocation4 + $0x28] sm:$0xff]
    %v1209 = vld [vmem:[#allocation4 + $0x30] sm:$0xff]
    %v1210 = vld [vmem:[#allocation4 + $0x38] sm:$0xff]
    %v1211 = vld [vmem:[#allocation4 + $0x40] sm:$0xff]
    %v1212 = vld [vmem:[#allocation4 + $0x50] sm:$0xff]
    %v1213 = vld [vmem:[#allocation4 + $0x58] sm:$0xff]
    %v1214 = vld [vmem:[#allocation4 + $0x60] sm:$0xff]
    %v1215 = vld [vmem:[#allocation4 + $0x68] sm:$0xff]
    %v1216 = vld [vmem:[#allocation4 + $0x78] sm:$0xff]
    %v1217 = vld [vmem:[#allocation4 + $0x80] sm:$0xff]
    %v1218 = vld [vmem:[#allocation4 + $0x88] sm:$0xff]
    %v1219 = vld [vmem:[#allocation4 + $0x90] sm:$0xff]
    %v1220 = vld [vmem:[#allocation4 + $0xa0] sm:$0xff]
    %v1221 = vld [vmem:[#allocation4 + $0xa8] sm:$0xff]
    %v1222 = vld [vmem:[#allocation4 + $0xb0] sm:$0xff]
    %v1223 = vld [vmem:[#allocation4 + $0xb8] sm:$0xff]
    %v1224 = vld [vmem:[#allocation4 + $0xc8] sm:$0xff]
    %v1225 = vld [vmem:[#allocation4 + $0xd0] sm:$0xff]
    %v1226 = vld [vmem:[#allocation4 + $0xd8] sm:$0xff]
    %v1227 = vld [vmem:[#allocation4 + $0xe0] sm:$0xff]
    %v1228 = vld [vmem:[#allocation4 + $0xf0] sm:$0xff]
    %v1229 = vld [vmem:[#allocation4 + $0xf8] sm:$0xff]
    %v1230 = vld [vmem:[#allocation4 + $0x100] sm:$0xff]
    %v1231 = vld [vmem:[#allocation4 + $0x108] sm:$0xff]
    %v1232 = vld [vmem:[#allocation4 + $0x118] sm:$0xff]
    %v1233 = vld [vmem:[#allocation4 + $0x120] sm:$0xff]
    %v1234 = vld [vmem:[#allocation4 + $0x128] sm:$0xff]
    %v1235 = vld [vmem:[#allocation4 + $0x130] sm:$0xff]
    %v1236 = vld [vmem:[#allocation4 + $0x140] sm:$0xff]
    %v1237 = vld [vmem:[#allocation4 + $0x148] sm:$0xff]
    %v1238 = vld [vmem:[#allocation4 + $0x150] sm:$0xff]
    %v1239 = vld [vmem:[#allocation4 + $0x158] sm:$0xff]
    %v1240 = vld [vmem:[#allocation4 + $0x168] sm:$0xff]
    %v1241 = vld [vmem:[#allocation4 + $0x170] sm:$0xff]
    %v1242 = vld [vmem:[#allocation4 + $0x178] sm:$0xff]
    %v1243 = vld [vmem:[#allocation4 + $0x180] sm:$0xff]
    %v1244 = vld [vmem:[#allocation4 + $0x190] sm:$0xff]
    %v1245 = vld [vmem:[#allocation4 + $0x198] sm:$0xff]
    %v1246 = vld [vmem:[#allocation4 + $0x1a0] sm:$0xff]
    %v1247 = vld [vmem:[#allocation4 + $0x1a8] sm:$0xff]
    %v1248 = vld [vmem:[#allocation4 + $0x1b8] sm:$0xff]
    %v1249 = vld [vmem:[#allocation4 + $0x1c0] sm:$0xff]
    %v1250 = vld [vmem:[#allocation4 + $0x1c8] sm:$0xff]
    %v1251 = vld [vmem:[#allocation4 + $0x1d0] sm:$0xff]
    %v1252 = vld [vmem:[#allocation4 + $0x1e0] sm:$0xff]
    %v1253 = vld [vmem:[#allocation4 + $0x1e8] sm:$0xff]
    %v1254 = vld [vmem:[#allocation4 + $0x1f0] sm:$0xff]
    %v1255 = vld [vmem:[#allocation4 + $0x1f8] sm:$0xff]
    %v1256 = vld [vmem:[#allocation4 + $0x208] sm:$0xff]
    %v1257 = vld [vmem:[#allocation4 + $0x210] sm:$0xff]
    %v1258 = vld [vmem:[#allocation4 + $0x218] sm:$0xff]
    %v1259 = vld [vmem:[#allocation4 + $0x220] sm:$0xff]
    %v1260 = vld [vmem:[#allocation4 + $0x230] sm:$0xff]
    %v1261 = vld [vmem:[#allocation4 + $0x238] sm:$0xff]
    %v1262 = vld [vmem:[#allocation4 + $0x240] sm:$0xff]
    %v1263 = vld [vmem:[#allocation4 + $0x248] sm:$0xff]
    %v1264 = vld [vmem:[#allocation4 + $0x258] sm:$0xff]
    %v1265 = vld [vmem:[#allocation4 + $0x260] sm:$0xff]
    %v1266 = vld [vmem:[#allocation4 + $0x268] sm:$0xff]
    %v1267 = vld [vmem:[#allocation4 + $0x270] sm:$0xff]
    %1268 = vmatprep.subr.mxu0 %v1205
    %1269 = vmatpush1.msra.mxu0 %v1204
    %1270 = vmatprep.subr.mxu0 %v1209
    %1271 = vmatpush1.msra.mxu0 %v1208
    %1272 = vmatprep.subr.mxu0 %v1213
    %1273 = vmatpush1.msra.mxu0 %v1212
    %1274 = vmatprep.subr.mxu0 %v1217
    %1275 = vmatpush1.msra.mxu0 %v1216
    %1276 = vmatprep.subr.mxu0 %v1221
    %1277 = vmatpush1.msra.mxu0 %v1220
    %1278 = vmatprep.subr.mxu0 %v1225
    %1279 = vmatpush1.msra.mxu0 %v1224
    %1280 = vmatprep.subr.mxu0 %v1229
    %1281 = vmatpush1.msra.mxu0 %v1228
    %1282 = vmatprep.subr.mxu0 %v1233
    %1283 = vmatpush1.msra.mxu0 %v1232
    %1284 = vmatprep.subr.mxu0 %v1237
    %1285 = vmatpush1.msra.mxu0 %v1236
    %1286 = vmatprep.subr.mxu0 %v1241
    %1287 = vmatpush1.msra.mxu0 %v1240
    %1288 = vmatprep.subr.mxu0 %v1245
    %1289 = vmatpush1.msra.mxu0 %v1244
    %1290 = vmatprep.subr.mxu0 %v1249
    %1291 = vmatpush1.msra.mxu0 %v1248
    %1292 = vmatprep.subr.mxu0 %v1253
    %1293 = vmatpush1.msra.mxu0 %v1252
    %1294 = vmatprep.subr.mxu0 %v1257
    %1295 = vmatpush1.msra.mxu0 %v1256
    %1296 = vmatprep.subr.mxu0 %v1261
    %1297 = vmatpush1.msra.mxu0 %v1260
    %1298 = vmatprep.subr.mxu0 %v1265
    %1299 = vmatpush1.msra.mxu0 %v1264
    %1300 = vmatprep.subr.mxu0 0.0
    %1301 = vmatpush1.msra.mxu0 0.0
    %1302 = vmatprep.subr.mxu0 0.0
    %1303 = vmatpush1.msra.mxu0 0.0
    %1304 = vmatprep.subr.mxu0 0.0
    %1305 = vmatpush1.msra.mxu0 0.0
    %1306 = vmatprep.subr.mxu0 0.0
    %1307 = vmatpush1.msra.mxu0 0.0
    %1308 = vmatprep.subr.mxu0 0.0
    %1309 = vmatpush1.msra.mxu0 0.0
    %1310 = vmatprep.subr.mxu0 0.0
    %1311 = vmatpush1.msra.mxu0 0.0
    %1312 = vmatprep.subr.mxu0 0.0
    %1313 = vmatpush1.msra.mxu0 0.0
    %1314 = vmatprep.subr.mxu0 0.0
    %1315 = vmatpush1.msra.mxu0 0.0
    %1316 = vmatprep.subr.mxu0 0.0
    %1317 = vmatpush1.msra.mxu0 0.0
    %1318 = vmatprep.subr.mxu0 0.0
    %1319 = vmatpush1.msra.mxu0 0.0
    %1320 = vmatprep.subr.mxu0 0.0
    %1321 = vmatpush1.msra.mxu0 0.0
    %1322 = vmatprep.subr.mxu0 0.0
    %1323 = vmatpush1.msra.mxu0 0.0
    %1324 = vmatprep.subr.mxu0 0.0
    %1325 = vmatpush1.msra.mxu0 0.0
    %1326 = vmatprep.subr.mxu0 0.0
    %1327 = vmatpush1.msra.mxu0 0.0
    %1328 = vmatprep.subr.mxu0 0.0
    %1329 = vmatpush1.msra.mxu0 0.0
    %1330 = vmatprep.subr.mxu0 0.0
    %1331 = vmatpush1.msra.mxu0 0.0
    %1332 = vmatprep.mubr.f32.mxu0 0.0
    %1333 = vmatmul.mubr.f32.gmra.mrb[0].mxu0 %v1194
    %v1334 = vpop.f32.mrb[0].mxu0
    %v1335 = vadd.f32 0.0, %v1334
    %v1336 = vpop.f32.mrb[0].mxu0
    %v1337 = vadd.f32 0.0, %v1336
    %1338 = vdwg.mxu0
    %1339 = vmatprep.subr.mxu0 %v1207
    %1340 = vmatpush1.msra.mxu0 %v1206
    %1341 = vmatprep.subr.mxu0 %v1211
    %1342 = vmatpush1.msra.mxu0 %v1210
    %1343 = vmatprep.subr.mxu0 %v1215
    %1344 = vmatpush1.msra.mxu0 %v1214
    %1345 = vmatprep.subr.mxu0 %v1219
    %1346 = vmatpush1.msra.mxu0 %v1218
    %1347 = vmatprep.subr.mxu0 %v1223
    %1348 = vmatpush1.msra.mxu0 %v1222
    %1349 = vmatprep.subr.mxu0 %v1227
    %1350 = vmatpush1.msra.mxu0 %v1226
    %1351 = vmatprep.subr.mxu0 %v1231
    %1352 = vmatpush1.msra.mxu0 %v1230
    %1353 = vmatprep.subr.mxu0 %v1235
    %1354 = vmatpush1.msra.mxu0 %v1234
    %1355 = vmatprep.subr.mxu0 %v1239
    %1356 = vmatpush1.msra.mxu0 %v1238
    %1357 = vmatprep.subr.mxu0 %v1243
    %1358 = vmatpush1.msra.mxu0 %v1242
    %1359 = vmatprep.subr.mxu0 %v1247
    %1360 = vmatpush1.msra.mxu0 %v1246
    %1361 = vmatprep.subr.mxu0 %v1251
    %1362 = vmatpush1.msra.mxu0 %v1250
    %1363 = vmatprep.subr.mxu0 %v1255
    %1364 = vmatpush1.msra.mxu0 %v1254
    %1365 = vmatprep.subr.mxu0 %v1259
    %1366 = vmatpush1.msra.mxu0 %v1258
    %1367 = vmatprep.subr.mxu0 %v1263
    %1368 = vmatpush1.msra.mxu0 %v1262
    %1369 = vmatprep.subr.mxu0 %v1267
    %1370 = vmatpush1.msra.mxu0 %v1266
    %1371 = vmatprep.subr.mxu0 0.0
    %1372 = vmatpush1.msra.mxu0 0.0
    %1373 = vmatprep.subr.mxu0 0.0
    %1374 = vmatpush1.msra.mxu0 0.0
    %1375 = vmatprep.subr.mxu0 0.0
    %1376 = vmatpush1.msra.mxu0 0.0
    %1377 = vmatprep.subr.mxu0 0.0
    %1378 = vmatpush1.msra.mxu0 0.0
    %1379 = vmatprep.subr.mxu0 0.0
    %1380 = vmatpush1.msra.mxu0 0.0
    %1381 = vmatprep.subr.mxu0 0.0
    %1382 = vmatpush1.msra.mxu0 0.0
    %1383 = vmatprep.subr.mxu0 0.0
    %1384 = vmatpush1.msra.mxu0 0.0
    %1385 = vmatprep.subr.mxu0 0.0
    %1386 = vmatpush1.msra.mxu0 0.0
    %1387 = vmatprep.subr.mxu0 0.0
    %1388 = vmatpush1.msra.mxu0 0.0
    %1389 = vmatprep.subr.mxu0 0.0
    %1390 = vmatpush1.msra.mxu0 0.0
    %1391 = vmatprep.subr.mxu0 0.0
    %1392 = vmatpush1.msra.mxu0 0.0
    %1393 = vmatprep.subr.mxu0 0.0
    %1394 = vmatpush1.msra.mxu0 0.0
    %1395 = vmatprep.subr.mxu0 0.0
    %1396 = vmatpush1.msra.mxu0 0.0
    %1397 = vmatprep.subr.mxu0 0.0
    %1398 = vmatpush1.msra.mxu0 0.0
    %1399 = vmatprep.subr.mxu0 0.0
    %1400 = vmatpush1.msra.mxu0 0.0
    %1401 = vmatprep.subr.mxu0 0.0
    %1402 = vmatpush1.msra.mxu0 0.0
    %1403 = vmatprep.mubr.f32.mxu0 0.0
    %1404 = vmatmul.mubr.f32.gmra.mrb[0].mxu0 %v1194
    %v1405 = vpop.f32.mrb[0].mxu0
    %v1406 = vadd.f32 0.0, %v1405
    %v1407 = vpop.f32.mrb[0].mxu0
    %v1408 = vadd.f32 0.0, %v1407
    %1409 = vdwg.mxu0
    %v1410 = vadd.f32 %v1200, %v1335
    %v1411 = vadd.f32 %v1201, %v1337
    %v1412 = vadd.f32 %v1202, %v1406
    %v1413 = vadd.f32 %v1203, %v1408
    %v1414 = vmul.f32 %v1410, 0.5
    %v1415 = vtanh.pop %v1414
    %v1416 = vadd.f32 %v1415, 1.0
    %v1417 = vmul.f32 %v1416, 0.5
    %v1418 = vmul.f32 %v1411, 0.5
    %v1419 = vtanh.pop %v1418
    %v1420 = vadd.f32 %v1419, 1.0
    %v1421 = vmul.f32 %v1420, 0.5
    %v1422 = vtanh.pop %v1412
    %v1423 = vmul.f32 %v1413, 0.5
    %v1424 = vtanh.pop %v1423
    %v1425 = vadd.f32 %v1424, 1.0
    %v1426 = vmul.f32 %v1425, 0.5
    %v1427 = vmul.f32 %v1421, %v1192
    %v1428 = vmul.f32 %v1417, %v1422
    %v1429 = vadd.f32 %v1427, %v1428
    %v1430 = vtanh.pop %v1429
    %v1431 = vmul.f32 %v1426, %v1430
    %s1432 = scalar_lea.vmem [#allocation3], 24
    %1433 = vst [vmem:[%s1432] sm:$0xff] %v1431
    %s1434 = smul.u32 4, 4
    %s1435 = smul.addr %s1434, 8
    %s1436 = scalar_lea.vmem [#allocation2], %s1435
    %v1437 = vld [vmem:[%s1436] sm:$0xff]
    %v1438 = vld [vmem:[%s1436 + $0x8] sm:$0xff]
    %v1439 = vld [vmem:[%s1436 + $0x10] sm:$0xff]
    %v1440 = vld [vmem:[%s1436 + $0x18] sm:$0xff]
    %v1441 = vld [vmem:[#allocation4] sm:$0xff]
    %v1442 = vld [vmem:[#allocation4 + $0x8] sm:$0xff]
    %v1443 = vld [vmem:[#allocation4 + $0x10] sm:$0xff]
    %v1444 = vld [vmem:[#allocation4 + $0x18] sm:$0xff]
    %v1445 = vld [vmem:[#allocation4 + $0x28] sm:$0xff]
    %v1446 = vld [vmem:[#allocation4 + $0x30] sm:$0xff]
    %v1447 = vld [vmem:[#allocation4 + $0x38] sm:$0xff]
    %v1448 = vld [vmem:[#allocation4 + $0x40] sm:$0xff]
    %v1449 = vld [vmem:[#allocation4 + $0x50] sm:$0xff]
    %v1450 = vld [vmem:[#allocation4 + $0x58] sm:$0xff]
    %v1451 = vld [vmem:[#allocation4 + $0x60] sm:$0xff]
    %v1452 = vld [vmem:[#allocation4 + $0x68] sm:$0xff]
    %v1453 = vld [vmem:[#allocation4 + $0x78] sm:$0xff]
    %v1454 = vld [vmem:[#allocation4 + $0x80] sm:$0xff]
    %v1455 = vld [vmem:[#allocation4 + $0x88] sm:$0xff]
    %v1456 = vld [vmem:[#allocation4 + $0x90] sm:$0xff]
    %v1457 = vld [vmem:[#allocation4 + $0xa0] sm:$0xff]
    %v1458 = vld [vmem:[#allocation4 + $0xa8] sm:$0xff]
    %v1459 = vld [vmem:[#allocation4 + $0xb0] sm:$0xff]
    %v1460 = vld [vmem:[#allocation4 + $0xb8] sm:$0xff]
    %v1461 = vld [vmem:[#allocation4 + $0xc8] sm:$0xff]
    %v1462 = vld [vmem:[#allocation4 + $0xd0] sm:$0xff]
    %v1463 = vld [vmem:[#allocation4 + $0xd8] sm:$0xff]
    %v1464 = vld [vmem:[#allocation4 + $0xe0] sm:$0xff]
    %v1465 = vld [vmem:[#allocation4 + $0xf0] sm:$0xff]
    %v1466 = vld [vmem:[#allocation4 + $0xf8] sm:$0xff]
    %v1467 = vld [vmem:[#allocation4 + $0x100] sm:$0xff]
    %v1468 = vld [vmem:[#allocation4 + $0x108] sm:$0xff]
    %v1469 = vld [vmem:[#allocation4 + $0x118] sm:$0xff]
    %v1470 = vld [vmem:[#allocation4 + $0x120] sm:$0xff]
    %v1471 = vld [vmem:[#allocation4 + $0x128] sm:$0xff]
    %v1472 = vld [vmem:[#allocation4 + $0x130] sm:$0xff]
    %v1473 = vld [vmem:[#allocation4 + $0x140] sm:$0xff]
    %v1474 = vld [vmem:[#allocation4 + $0x148] sm:$0xff]
    %v1475 = vld [vmem:[#allocation4 + $0x150] sm:$0xff]
    %v1476 = vld [vmem:[#allocation4 + $0x158] sm:$0xff]
    %v1477 = vld [vmem:[#allocation4 + $0x168] sm:$0xff]
    %v1478 = vld [vmem:[#allocation4 + $0x170] sm:$0xff]
    %v1479 = vld [vmem:[#allocation4 + $0x178] sm:$0xff]
    %v1480 = vld [vmem:[#allocation4 + $0x180] sm:$0xff]
    %v1481 = vld [vmem:[#allocation4 + $0x190] sm:$0xff]
    %v1482 = vld [vmem:[#allocation4 + $0x198] sm:$0xff]
    %v1483 = vld [vmem:[#allocation4 + $0x1a0] sm:$0xff]
    %v1484 = vld [vmem:[#allocation4 + $0x1a8] sm:$0xff]
    %v1485 = vld [vmem:[#allocation4 + $0x1b8] sm:$0xff]
    %v1486 = vld [vmem:[#allocation4 + $0x1c0] sm:$0xff]
    %v1487 = vld [vmem:[#allocation4 + $0x1c8] sm:$0xff]
    %v1488 = vld [vmem:[#allocation4 + $0x1d0] sm:$0xff]
    %v1489 = vld [vmem:[#allocation4 + $0x1e0] sm:$0xff]
    %v1490 = vld [vmem:[#allocation4 + $0x1e8] sm:$0xff]
    %v1491 = vld [vmem:[#allocation4 + $0x1f0] sm:$0xff]
    %v1492 = vld [vmem:[#allocation4 + $0x1f8] sm:$0xff]
    %v1493 = vld [vmem:[#allocation4 + $0x208] sm:$0xff]
    %v1494 = vld [vmem:[#allocation4 + $0x210] sm:$0xff]
    %v1495 = vld [vmem:[#allocation4 + $0x218] sm:$0xff]
    %v1496 = vld [vmem:[#allocation4 + $0x220] sm:$0xff]
    %v1497 = vld [vmem:[#allocation4 + $0x230] sm:$0xff]
    %v1498 = vld [vmem:[#allocation4 + $0x238] sm:$0xff]
    %v1499 = vld [vmem:[#allocation4 + $0x240] sm:$0xff]
    %v1500 = vld [vmem:[#allocation4 + $0x248] sm:$0xff]
    %v1501 = vld [vmem:[#allocation4 + $0x258] sm:$0xff]
    %v1502 = vld [vmem:[#allocation4 + $0x260] sm:$0xff]
    %v1503 = vld [vmem:[#allocation4 + $0x268] sm:$0xff]
    %v1504 = vld [vmem:[#allocation4 + $0x270] sm:$0xff]
    %1505 = vmatprep.subr.mxu0 %v1442
    %1506 = vmatpush1.msra.mxu0 %v1441
    %1507 = vmatprep.subr.mxu0 %v1446
    %1508 = vmatpush1.msra.mxu0 %v1445
    %1509 = vmatprep.subr.mxu0 %v1450
    %1510 = vmatpush1.msra.mxu0 %v1449
    %1511 = vmatprep.subr.mxu0 %v1454
    %1512 = vmatpush1.msra.mxu0 %v1453
    %1513 = vmatprep.subr.mxu0 %v1458
    %1514 = vmatpush1.msra.mxu0 %v1457
    %1515 = vmatprep.subr.mxu0 %v1462
    %1516 = vmatpush1.msra.mxu0 %v1461
    %1517 = vmatprep.subr.mxu0 %v1466
    %1518 = vmatpush1.msra.mxu0 %v1465
    %1519 = vmatprep.subr.mxu0 %v1470
    %1520 = vmatpush1.msra.mxu0 %v1469
    %1521 = vmatprep.subr.mxu0 %v1474
    %1522 = vmatpush1.msra.mxu0 %v1473
    %1523 = vmatprep.subr.mxu0 %v1478
    %1524 = vmatpush1.msra.mxu0 %v1477
    %1525 = vmatprep.subr.mxu0 %v1482
    %1526 = vmatpush1.msra.mxu0 %v1481
    %1527 = vmatprep.subr.mxu0 %v1486
    %1528 = vmatpush1.msra.mxu0 %v1485
    %1529 = vmatprep.subr.mxu0 %v1490
    %1530 = vmatpush1.msra.mxu0 %v1489
    %1531 = vmatprep.subr.mxu0 %v1494
    %1532 = vmatpush1.msra.mxu0 %v1493
    %1533 = vmatprep.subr.mxu0 %v1498
    %1534 = vmatpush1.msra.mxu0 %v1497
    %1535 = vmatprep.subr.mxu0 %v1502
    %1536 = vmatpush1.msra.mxu0 %v1501
    %1537 = vmatprep.subr.mxu0 0.0
    %1538 = vmatpush1.msra.mxu0 0.0
    %1539 = vmatprep.subr.mxu0 0.0
    %1540 = vmatpush1.msra.mxu0 0.0
    %1541 = vmatprep.subr.mxu0 0.0
    %1542 = vmatpush1.msra.mxu0 0.0
    %1543 = vmatprep.subr.mxu0 0.0
    %1544 = vmatpush1.msra.mxu0 0.0
    %1545 = vmatprep.subr.mxu0 0.0
    %1546 = vmatpush1.msra.mxu0 0.0
    %1547 = vmatprep.subr.mxu0 0.0
    %1548 = vmatpush1.msra.mxu0 0.0
    %1549 = vmatprep.subr.mxu0 0.0
    %1550 = vmatpush1.msra.mxu0 0.0
    %1551 = vmatprep.subr.mxu0 0.0
    %1552 = vmatpush1.msra.mxu0 0.0
    %1553 = vmatprep.subr.mxu0 0.0
    %1554 = vmatpush1.msra.mxu0 0.0
    %1555 = vmatprep.subr.mxu0 0.0
    %1556 = vmatpush1.msra.mxu0 0.0
    %1557 = vmatprep.subr.mxu0 0.0
    %1558 = vmatpush1.msra.mxu0 0.0
    %1559 = vmatprep.subr.mxu0 0.0
    %1560 = vmatpush1.msra.mxu0 0.0
    %1561 = vmatprep.subr.mxu0 0.0
    %1562 = vmatpush1.msra.mxu0 0.0
    %1563 = vmatprep.subr.mxu0 0.0
    %1564 = vmatpush1.msra.mxu0 0.0
    %1565 = vmatprep.subr.mxu0 0.0
    %1566 = vmatpush1.msra.mxu0 0.0
    %1567 = vmatprep.subr.mxu0 0.0
    %1568 = vmatpush1.msra.mxu0 0.0
    %1569 = vmatprep.mubr.f32.mxu0 0.0
    %1570 = vmatmul.mubr.f32.gmra.mrb[0].mxu0 %v1431
    %v1571 = vpop.f32.mrb[0].mxu0
    %v1572 = vadd.f32 0.0, %v1571
    %v1573 = vpop.f32.mrb[0].mxu0
    %v1574 = vadd.f32 0.0, %v1573
    %1575 = vdwg.mxu0
    %1576 = vmatprep.subr.mxu0 %v1444
    %1577 = vmatpush1.msra.mxu0 %v1443
    %1578 = vmatprep.subr.mxu0 %v1448
    %1579 = vmatpush1.msra.mxu0 %v1447
    %1580 = vmatprep.subr.mxu0 %v1452
    %1581 = vmatpush1.msra.mxu0 %v1451
    %1582 = vmatprep.subr.mxu0 %v1456
    %1583 = vmatpush1.msra.mxu0 %v1455
    %1584 = vmatprep.subr.mxu0 %v1460
    %1585 = vmatpush1.msra.mxu0 %v1459
    %1586 = vmatprep.subr.mxu0 %v1464
    %1587 = vmatpush1.msra.mxu0 %v1463
    %1588 = vmatprep.subr.mxu0 %v1468
    %1589 = vmatpush1.msra.mxu0 %v1467
    %1590 = vmatprep.subr.mxu0 %v1472
    %1591 = vmatpush1.msra.mxu0 %v1471
    %1592 = vmatprep.subr.mxu0 %v1476
    %1593 = vmatpush1.msra.mxu0 %v1475
    %1594 = vmatprep.subr.mxu0 %v1480
    %1595 = vmatpush1.msra.mxu0 %v1479
    %1596 = vmatprep.subr.mxu0 %v1484
    %1597 = vmatpush1.msra.mxu0 %v1483
    %1598 = vmatprep.subr.mxu0 %v1488
    %1599 = vmatpush1.msra.mxu0 %v1487
    %1600 = vmatprep.subr.mxu0 %v1492
    %1601 = vmatpush1.msra.mxu0 %v1491
    %1602 = vmatprep.subr.mxu0 %v1496
    %1603 = vmatpush1.msra.mxu0 %v1495
    %1604 = vmatprep.subr.mxu0 %v1500
    %1605 = vmatpush1.msra.mxu0 %v1499
    %1606 = vmatprep.subr.mxu0 %v1504
    %1607 = vmatpush1.msra.mxu0 %v1503
    %1608 = vmatprep.subr.mxu0 0.0
    %1609 = vmatpush1.msra.mxu0 0.0
    %1610 = vmatprep.subr.mxu0 0.0
    %1611 = vmatpush1.msra.mxu0 0.0
    %1612 = vmatprep.subr.mxu0 0.0
    %1613 = vmatpush1.msra.mxu0 0.0
    %1614 = vmatprep.subr.mxu0 0.0
    %1615 = vmatpush1.msra.mxu0 0.0
    %1616 = vmatprep.subr.mxu0 0.0
    %1617 = vmatpush1.msra.mxu0 0.0
    %1618 = vmatprep.subr.mxu0 0.0
    %1619 = vmatpush1.msra.mxu0 0.0
    %1620 = vmatprep.subr.mxu0 0.0
    %1621 = vmatpush1.msra.mxu0 0.0
    %1622 = vmatprep.subr.mxu0 0.0
    %1623 = vmatpush1.msra.mxu0 0.0
    %1624 = vmatprep.subr.mxu0 0.0
    %1625 = vmatpush1.msra.mxu0 0.0
    %1626 = vmatprep.subr.mxu0 0.0
    %1627 = vmatpush1.msra.mxu0 0.0
    %1628 = vmatprep.subr.mxu0 0.0
    %1629 = vmatpush1.msra.mxu0 0.0
    %1630 = vmatprep.subr.mxu0 0.0
    %1631 = vmatpush1.msra.mxu0 0.0
    %1632 = vmatprep.subr.mxu0 0.0
    %1633 = vmatpush1.msra.mxu0 0.0
    %1634 = vmatprep.subr.mxu0 0.0
    %1635 = vmatpush1.msra.mxu0 0.0
    %1636 = vmatprep.subr.mxu0 0.0
    %1637 = vmatpush1.msra.mxu0 0.0
    %1638 = vmatprep.subr.mxu0 0.0
    %1639 = vmatpush1.msra.mxu0 0.0
    %1640 = vmatprep.mubr.f32.mxu0 0.0
    %1641 = vmatmul.mubr.f32.gmra.mrb[0].mxu0 %v1431
    %v1642 = vpop.f32.mrb[0].mxu0
    %v1643 = vadd.f32 0.0, %v1642
    %v1644 = vpop.f32.mrb[0].mxu0
    %v1645 = vadd.f32 0.0, %v1644
    %1646 = vdwg.mxu0
    %v1647 = vadd.f32 %v1437, %v1572
    %v1648 = vadd.f32 %v1438, %v1574
    %v1649 = vadd.f32 %v1439, %v1643
    %v1650 = vadd.f32 %v1440, %v1645
    %v1651 = vmul.f32 %v1647, 0.5
    %v1652 = vtanh.pop %v1651
    %v1653 = vadd.f32 %v1652, 1.0
    %v1654 = vmul.f32 %v1653, 0.5
    %v1655 = vmul.f32 %v1648, 0.5
    %v1656 = vtanh.pop %v1655
    %v1657 = vadd.f32 %v1656, 1.0
    %v1658 = vmul.f32 %v1657, 0.5
    %v1659 = vtanh.pop %v1649
    %v1660 = vmul.f32 %v1650, 0.5
    %v1661 = vtanh.pop %v1660
    %v1662 = vadd.f32 %v1661, 1.0
    %v1663 = vmul.f32 %v1662, 0.5
    %v1664 = vmul.f32 %v1658, %v1429
    %v1665 = vmul.f32 %v1654, %v1659
    %v1666 = vadd.f32 %v1664, %v1665
    %v1667 = vtanh.pop %v1666
    %v1668 = vmul.f32 %v1663, %v1667
    %s1669 = scalar_lea.vmem [#allocation3], 32
    %1670 = vst [vmem:[%s1669] sm:$0xff] %v1668
    %s1671 = smul.u32 5, 4
    %s1672 = smul.addr %s1671, 8
    %s1673 = scalar_lea.vmem [#allocation2], %s1672
    %v1674 = vld [vmem:[%s1673] sm:$0xff]
    %v1675 = vld [vmem:[%s1673 + $0x8] sm:$0xff]
    %v1676 = vld [vmem:[%s1673 + $0x10] sm:$0xff]
    %v1677 = vld [vmem:[%s1673 + $0x18] sm:$0xff]
    %v1678 = vld [vmem:[#allocation4] sm:$0xff]
    %v1679 = vld [vmem:[#allocation4 + $0x8] sm:$0xff]
    %v1680 = vld [vmem:[#allocation4 + $0x10] sm:$0xff]
    %v1681 = vld [vmem:[#allocation4 + $0x18] sm:$0xff]
    %v1682 = vld [vmem:[#allocation4 + $0x28] sm:$0xff]
    %v1683 = vld [vmem:[#allocation4 + $0x30] sm:$0xff]
    %v1684 = vld [vmem:[#allocation4 + $0x38] sm:$0xff]
    %v1685 = vld [vmem:[#allocation4 + $0x40] sm:$0xff]
    %v1686 = vld [vmem:[#allocation4 + $0x50] sm:$0xff]
    %v1687 = vld [vmem:[#allocation4 + $0x58] sm:$0xff]
    %v1688 = vld [vmem:[#allocation4 + $0x60] sm:$0xff]
    %v1689 = vld [vmem:[#allocation4 + $0x68] sm:$0xff]
    %v1690 = vld [vmem:[#allocation4 + $0x78] sm:$0xff]
    %v1691 = vld [vmem:[#allocation4 + $0x80] sm:$0xff]
    %v1692 = vld [vmem:[#allocation4 + $0x88] sm:$0xff]
    %v1693 = vld [vmem:[#allocation4 + $0x90] sm:$0xff]
    %v1694 = vld [vmem:[#allocation4 + $0xa0] sm:$0xff]
    %v1695 = vld [vmem:[#allocation4 + $0xa8] sm:$0xff]
    %v1696 = vld [vmem:[#allocation4 + $0xb0] sm:$0xff]
    %v1697 = vld [vmem:[#allocation4 + $0xb8] sm:$0xff]
    %v1698 = vld [vmem:[#allocation4 + $0xc8] sm:$0xff]
    %v1699 = vld [vmem:[#allocation4 + $0xd0] sm:$0xff]
    %v1700 = vld [vmem:[#allocation4 + $0xd8] sm:$0xff]
    %v1701 = vld [vmem:[#allocation4 + $0xe0] sm:$0xff]
    %v1702 = vld [vmem:[#allocation4 + $0xf0] sm:$0xff]
    %v1703 = vld [vmem:[#allocation4 + $0xf8] sm:$0xff]
    %v1704 = vld [vmem:[#allocation4 + $0x100] sm:$0xff]
    %v1705 = vld [vmem:[#allocation4 + $0x108] sm:$0xff]
    %v1706 = vld [vmem:[#allocation4 + $0x118] sm:$0xff]
    %v1707 = vld [vmem:[#allocation4 + $0x120] sm:$0xff]
    %v1708 = vld [vmem:[#allocation4 + $0x128] sm:$0xff]
    %v1709 = vld [vmem:[#allocation4 + $0x130] sm:$0xff]
    %v1710 = vld [vmem:[#allocation4 + $0x140] sm:$0xff]
    %v1711 = vld [vmem:[#allocation4 + $0x148] sm:$0xff]
    %v1712 = vld [vmem:[#allocation4 + $0x150] sm:$0xff]
    %v1713 = vld [vmem:[#allocation4 + $0x158] sm:$0xff]
    %v1714 = vld [vmem:[#allocation4 + $0x168] sm:$0xff]
    %v1715 = vld [vmem:[#allocation4 + $0x170] sm:$0xff]
    %v1716 = vld [vmem:[#allocation4 + $0x178] sm:$0xff]
    %v1717 = vld [vmem:[#allocation4 + $0x180] sm:$0xff]
    %v1718 = vld [vmem:[#allocation4 + $0x190] sm:$0xff]
    %v1719 = vld [vmem:[#allocation4 + $0x198] sm:$0xff]
    %v1720 = vld [vmem:[#allocation4 + $0x1a0] sm:$0xff]
    %v1721 = vld [vmem:[#allocation4 + $0x1a8] sm:$0xff]
    %v1722 = vld [vmem:[#allocation4 + $0x1b8] sm:$0xff]
    %v1723 = vld [vmem:[#allocation4 + $0x1c0] sm:$0xff]
    %v1724 = vld [vmem:[#allocation4 + $0x1c8] sm:$0xff]
    %v1725 = vld [vmem:[#allocation4 + $0x1d0] sm:$0xff]
    %v1726 = vld [vmem:[#allocation4 + $0x1e0] sm:$0xff]
    %v1727 = vld [vmem:[#allocation4 + $0x1e8] sm:$0xff]
    %v1728 = vld [vmem:[#allocation4 + $0x1f0] sm:$0xff]
    %v1729 = vld [vmem:[#allocation4 + $0x1f8] sm:$0xff]
    %v1730 = vld [vmem:[#allocation4 + $0x208] sm:$0xff]
    %v1731 = vld [vmem:[#allocation4 + $0x210] sm:$0xff]
    %v1732 = vld [vmem:[#allocation4 + $0x218] sm:$0xff]
    %v1733 = vld [vmem:[#allocation4 + $0x220] sm:$0xff]
    %v1734 = vld [vmem:[#allocation4 + $0x230] sm:$0xff]
    %v1735 = vld [vmem:[#allocation4 + $0x238] sm:$0xff]
    %v1736 = vld [vmem:[#allocation4 + $0x240] sm:$0xff]
    %v1737 = vld [vmem:[#allocation4 + $0x248] sm:$0xff]
    %v1738 = vld [vmem:[#allocation4 + $0x258] sm:$0xff]
    %v1739 = vld [vmem:[#allocation4 + $0x260] sm:$0xff]
    %v1740 = vld [vmem:[#allocation4 + $0x268] sm:$0xff]
    %v1741 = vld [vmem:[#allocation4 + $0x270] sm:$0xff]
    %1742 = vmatprep.subr.mxu0 %v1679
    %1743 = vmatpush1.msra.mxu0 %v1678
    %1744 = vmatprep.subr.mxu0 %v1683
    %1745 = vmatpush1.msra.mxu0 %v1682
    %1746 = vmatprep.subr.mxu0 %v1687
    %1747 = vmatpush1.msra.mxu0 %v1686
    %1748 = vmatprep.subr.mxu0 %v1691
    %1749 = vmatpush1.msra.mxu0 %v1690
    %1750 = vmatprep.subr.mxu0 %v1695
    %1751 = vmatpush1.msra.mxu0 %v1694
    %1752 = vmatprep.subr.mxu0 %v1699
    %1753 = vmatpush1.msra.mxu0 %v1698
    %1754 = vmatprep.subr.mxu0 %v1703
    %1755 = vmatpush1.msra.mxu0 %v1702
    %1756 = vmatprep.subr.mxu0 %v1707
    %1757 = vmatpush1.msra.mxu0 %v1706
    %1758 = vmatprep.subr.mxu0 %v1711
    %1759 = vmatpush1.msra.mxu0 %v1710
    %1760 = vmatprep.subr.mxu0 %v1715
    %1761 = vmatpush1.msra.mxu0 %v1714
    %1762 = vmatprep.subr.mxu0 %v1719
    %1763 = vmatpush1.msra.mxu0 %v1718
    %1764 = vmatprep.subr.mxu0 %v1723
    %1765 = vmatpush1.msra.mxu0 %v1722
    %1766 = vmatprep.subr.mxu0 %v1727
    %1767 = vmatpush1.msra.mxu0 %v1726
    %1768 = vmatprep.subr.mxu0 %v1731
    %1769 = vmatpush1.msra.mxu0 %v1730
    %1770 = vmatprep.subr.mxu0 %v1735
    %1771 = vmatpush1.msra.mxu0 %v1734
    %1772 = vmatprep.subr.mxu0 %v1739
    %1773 = vmatpush1.msra.mxu0 %v1738
    %1774 = vmatprep.subr.mxu0 0.0
    %1775 = vmatpush1.msra.mxu0 0.0
    %1776 = vmatprep.subr.mxu0 0.0
    %1777 = vmatpush1.msra.mxu0 0.0
    %1778 = vmatprep.subr.mxu0 0.0
    %1779 = vmatpush1.msra.mxu0 0.0
    %1780 = vmatprep.subr.mxu0 0.0
    %1781 = vmatpush1.msra.mxu0 0.0
    %1782 = vmatprep.subr.mxu0 0.0
    %1783 = vmatpush1.msra.mxu0 0.0
    %1784 = vmatprep.subr.mxu0 0.0
    %1785 = vmatpush1.msra.mxu0 0.0
    %1786 = vmatprep.subr.mxu0 0.0
    %1787 = vmatpush1.msra.mxu0 0.0
    %1788 = vmatprep.subr.mxu0 0.0
    %1789 = vmatpush1.msra.mxu0 0.0
    %1790 = vmatprep.subr.mxu0 0.0
    %1791 = vmatpush1.msra.mxu0 0.0
    %1792 = vmatprep.subr.mxu0 0.0
    %1793 = vmatpush1.msra.mxu0 0.0
    %1794 = vmatprep.subr.mxu0 0.0
    %1795 = vmatpush1.msra.mxu0 0.0
    %1796 = vmatprep.subr.mxu0 0.0
    %1797 = vmatpush1.msra.mxu0 0.0
    %1798 = vmatprep.subr.mxu0 0.0
    %1799 = vmatpush1.msra.mxu0 0.0
    %1800 = vmatprep.subr.mxu0 0.0
    %1801 = vmatpush1.msra.mxu0 0.0
    %1802 = vmatprep.subr.mxu0 0.0
    %1803 = vmatpush1.msra.mxu0 0.0
    %1804 = vmatprep.subr.mxu0 0.0
    %1805 = vmatpush1.msra.mxu0 0.0
    %1806 = vmatprep.mubr.f32.mxu0 0.0
    %1807 = vmatmul.mubr.f32.gmra.mrb[0].mxu0 %v1668
    %v1808 = vpop.f32.mrb[0].mxu0
    %v1809 = vadd.f32 0.0, %v1808
    %v1810 = vpop.f32.mrb[0].mxu0
    %v1811 = vadd.f32 0.0, %v1810
    %1812 = vdwg.mxu0
    %1813 = vmatprep.subr.mxu0 %v1681
    %1814 = vmatpush1.msra.mxu0 %v1680
    %1815 = vmatprep.subr.mxu0 %v1685
    %1816 = vmatpush1.msra.mxu0 %v1684
    %1817 = vmatprep.subr.mxu0 %v1689
    %1818 = vmatpush1.msra.mxu0 %v1688
    %1819 = vmatprep.subr.mxu0 %v1693
    %1820 = vmatpush1.msra.mxu0 %v1692
    %1821 = vmatprep.subr.mxu0 %v1697
    %1822 = vmatpush1.msra.mxu0 %v1696
    %1823 = vmatprep.subr.mxu0 %v1701
    %1824 = vmatpush1.msra.mxu0 %v1700
    %1825 = vmatprep.subr.mxu0 %v1705
    %1826 = vmatpush1.msra.mxu0 %v1704
    %1827 = vmatprep.subr.mxu0 %v1709
    %1828 = vmatpush1.msra.mxu0 %v1708
    %1829 = vmatprep.subr.mxu0 %v1713
    %1830 = vmatpush1.msra.mxu0 %v1712
    %1831 = vmatprep.subr.mxu0 %v1717
    %1832 = vmatpush1.msra.mxu0 %v1716
    %1833 = vmatprep.subr.mxu0 %v1721
    %1834 = vmatpush1.msra.mxu0 %v1720
    %1835 = vmatprep.subr.mxu0 %v1725
    %1836 = vmatpush1.msra.mxu0 %v1724
    %1837 = vmatprep.subr.mxu0 %v1729
    %1838 = vmatpush1.msra.mxu0 %v1728
    %1839 = vmatprep.subr.mxu0 %v1733
    %1840 = vmatpush1.msra.mxu0 %v1732
    %1841 = vmatprep.subr.mxu0 %v1737
    %1842 = vmatpush1.msra.mxu0 %v1736
    %1843 = vmatprep.subr.mxu0 %v1741
    %1844 = vmatpush1.msra.mxu0 %v1740
    %1845 = vmatprep.subr.mxu0 0.0
    %1846 = vmatpush1.msra.mxu0 0.0
    %1847 = vmatprep.subr.mxu0 0.0
    %1848 = vmatpush1.msra.mxu0 0.0
    %1849 = vmatprep.subr.mxu0 0.0
    %1850 = vmatpush1.msra.mxu0 0.0
    %1851 = vmatprep.subr.mxu0 0.0
    %1852 = vmatpush1.msra.mxu0 0.0
    %1853 = vmatprep.subr.mxu0 0.0
    %1854 = vmatpush1.msra.mxu0 0.0
    %1855 = vmatprep.subr.mxu0 0.0
    %1856 = vmatpush1.msra.mxu0 0.0
    %1857 = vmatprep.subr.mxu0 0.0
    %1858 = vmatpush1.msra.mxu0 0.0
    %1859 = vmatprep.subr.mxu0 0.0
    %1860 = vmatpush1.msra.mxu0 0.0
    %1861 = vmatprep.subr.mxu0 0.0
    %1862 = vmatpush1.msra.mxu0 0.0
    %1863 = vmatprep.subr.mxu0 0.0
    %1864 = vmatpush1.msra.mxu0 0.0
    %1865 = vmatprep.subr.mxu0 0.0
    %1866 = vmatpush1.msra.mxu0 0.0
    %1867 = vmatprep.subr.mxu0 0.0
    %1868 = vmatpush1.msra.mxu0 0.0
    %1869 = vmatprep.subr.mxu0 0.0
    %1870 = vmatpush1.msra.mxu0 0.0
    %1871 = vmatprep.subr.mxu0 0.0
    %1872 = vmatpush1.msra.mxu0 0.0
    %1873 = vmatprep.subr.mxu0 0.0
    %1874 = vmatpush1.msra.mxu0 0.0
    %1875 = vmatprep.subr.mxu0 0.0
    %1876 = vmatpush1.msra.mxu0 0.0
    %1877 = vmatprep.mubr.f32.mxu0 0.0
    %1878 = vmatmul.mubr.f32.gmra.mrb[0].mxu0 %v1668
    %v1879 = vpop.f32.mrb[0].mxu0
    %v1880 = vadd.f32 0.0, %v1879
    %v1881 = vpop.f32.mrb[0].mxu0
    %v1882 = vadd.f32 0.0, %v1881
    %1883 = vdwg.mxu0
    %v1884 = vadd.f32 %v1674, %v1809
    %v1885 = vadd.f32 %v1675, %v1811
    %v1886 = vadd.f32 %v1676, %v1880
    %v1887 = vadd.f32 %v1677, %v1882
    %v1888 = vmul.f32 %v1884, 0.5
    %v1889 = vtanh.pop %v1888
    %v1890 = vadd.f32 %v1889, 1.0
    %v1891 = vmul.f32 %v1890, 0.5
    %v1892 = vmul.f32 %v1885, 0.5
    %v1893 = vtanh.pop %v1892
    %v1894 = vadd.f32 %v1893, 1.0
    %v1895 = vmul.f32 %v1894, 0.5
    %v1896 = vtanh.pop %v1886
    %v1897 = vmul.f32 %v1887, 0.5
    %v1898 = vtanh.pop %v1897
    %v1899 = vadd.f32 %v1898, 1.0
    %v1900 = vmul.f32 %v1899, 0.5
    %v1901 = vmul.f32 %v1895, %v1666
    %v1902 = vmul.f32 %v1891, %v1896
    %v1903 = vadd.f32 %v1901, %v1902
    %v1904 = vtanh.pop %v1903
    %v1905 = vmul.f32 %v1900, %v1904
    %s1906 = scalar_lea.vmem [#allocation3], 40
    %1907 = vst [vmem:[%s1906] sm:$0xff] %v1905
    %s1908 = smul.u32 6, 4
    %s1909 = smul.addr %s1908, 8
    %s1910 = scalar_lea.vmem [#allocation2], %s1909
    %v1911 = vld [vmem:[%s1910] sm:$0xff]
    %v1912 = vld [vmem:[%s1910 + $0x8] sm:$0xff]
    %v1913 = vld [vmem:[%s1910 + $0x10] sm:$0xff]
    %v1914 = vld [vmem:[%s1910 + $0x18] sm:$0xff]
    %v1915 = vld [vmem:[#allocation4] sm:$0xff]
    %v1916 = vld [vmem:[#allocation4 + $0x8] sm:$0xff]
    %v1917 = vld [vmem:[#allocation4 + $0x10] sm:$0xff]
    %v1918 = vld [vmem:[#allocation4 + $0x18] sm:$0xff]
    %v1919 = vld [vmem:[#allocation4 + $0x28] sm:$0xff]
    %v1920 = vld [vmem:[#allocation4 + $0x30] sm:$0xff]
    %v1921 = vld [vmem:[#allocation4 + $0x38] sm:$0xff]
    %v1922 = vld [vmem:[#allocation4 + $0x40] sm:$0xff]
    %v1923 = vld [vmem:[#allocation4 + $0x50] sm:$0xff]
    %v1924 = vld [vmem:[#allocation4 + $0x58] sm:$0xff]
    %v1925 = vld [vmem:[#allocation4 + $0x60] sm:$0xff]
    %v1926 = vld [vmem:[#allocation4 + $0x68] sm:$0xff]
    %v1927 = vld [vmem:[#allocation4 + $0x78] sm:$0xff]
    %v1928 = vld [vmem:[#allocation4 + $0x80] sm:$0xff]
    %v1929 = vld [vmem:[#allocation4 + $0x88] sm:$0xff]
    %v1930 = vld [vmem:[#allocation4 + $0x90] sm:$0xff]
    %v1931 = vld [vmem:[#allocation4 + $0xa0] sm:$0xff]
    %v1932 = vld [vmem:[#allocation4 + $0xa8] sm:$0xff]
    %v1933 = vld [vmem:[#allocation4 + $0xb0] sm:$0xff]
    %v1934 = vld [vmem:[#allocation4 + $0xb8] sm:$0xff]
    %v1935 = vld [vmem:[#allocation4 + $0xc8] sm:$0xff]
    %v1936 = vld [vmem:[#allocation4 + $0xd0] sm:$0xff]
    %v1937 = vld [vmem:[#allocation4 + $0xd8] sm:$0xff]
    %v1938 = vld [vmem:[#allocation4 + $0xe0] sm:$0xff]
    %v1939 = vld [vmem:[#allocation4 + $0xf0] sm:$0xff]
    %v1940 = vld [vmem:[#allocation4 + $0xf8] sm:$0xff]
    %v1941 = vld [vmem:[#allocation4 + $0x100] sm:$0xff]
    %v1942 = vld [vmem:[#allocation4 + $0x108] sm:$0xff]
    %v1943 = vld [vmem:[#allocation4 + $0x118] sm:$0xff]
    %v1944 = vld [vmem:[#allocation4 + $0x120] sm:$0xff]
    %v1945 = vld [vmem:[#allocation4 + $0x128] sm:$0xff]
    %v1946 = vld [vmem:[#allocation4 + $0x130] sm:$0xff]
    %v1947 = vld [vmem:[#allocation4 + $0x140] sm:$0xff]
    %v1948 = vld [vmem:[#allocation4 + $0x148] sm:$0xff]
    %v1949 = vld [vmem:[#allocation4 + $0x150] sm:$0xff]
    %v1950 = vld [vmem:[#allocation4 + $0x158] sm:$0xff]
    %v1951 = vld [vmem:[#allocation4 + $0x168] sm:$0xff]
    %v1952 = vld [vmem:[#allocation4 + $0x170] sm:$0xff]
    %v1953 = vld [vmem:[#allocation4 + $0x178] sm:$0xff]
    %v1954 = vld [vmem:[#allocation4 + $0x180] sm:$0xff]
    %v1955 = vld [vmem:[#allocation4 + $0x190] sm:$0xff]
    %v1956 = vld [vmem:[#allocation4 + $0x198] sm:$0xff]
    %v1957 = vld [vmem:[#allocation4 + $0x1a0] sm:$0xff]
    %v1958 = vld [vmem:[#allocation4 + $0x1a8] sm:$0xff]
    %v1959 = vld [vmem:[#allocation4 + $0x1b8] sm:$0xff]
    %v1960 = vld [vmem:[#allocation4 + $0x1c0] sm:$0xff]
    %v1961 = vld [vmem:[#allocation4 + $0x1c8] sm:$0xff]
    %v1962 = vld [vmem:[#allocation4 + $0x1d0] sm:$0xff]
    %v1963 = vld [vmem:[#allocation4 + $0x1e0] sm:$0xff]
    %v1964 = vld [vmem:[#allocation4 + $0x1e8] sm:$0xff]
    %v1965 = vld [vmem:[#allocation4 + $0x1f0] sm:$0xff]
    %v1966 = vld [vmem:[#allocation4 + $0x1f8] sm:$0xff]
    %v1967 = vld [vmem:[#allocation4 + $0x208] sm:$0xff]
    %v1968 = vld [vmem:[#allocation4 + $0x210] sm:$0xff]
    %v1969 = vld [vmem:[#allocation4 + $0x218] sm:$0xff]
    %v1970 = vld [vmem:[#allocation4 + $0x220] sm:$0xff]
    %v1971 = vld [vmem:[#allocation4 + $0x230] sm:$0xff]
    %v1972 = vld [vmem:[#allocation4 + $0x238] sm:$0xff]
    %v1973 = vld [vmem:[#allocation4 + $0x240] sm:$0xff]
    %v1974 = vld [vmem:[#allocation4 + $0x248] sm:$0xff]
    %v1975 = vld [vmem:[#allocation4 + $0x258] sm:$0xff]
    %v1976 = vld [vmem:[#allocation4 + $0x260] sm:$0xff]
    %v1977 = vld [vmem:[#allocation4 + $0x268] sm:$0xff]
    %v1978 = vld [vmem:[#allocation4 + $0x270] sm:$0xff]
    %1979 = vmatprep.subr.mxu0 %v1916
    %1980 = vmatpush1.msra.mxu0 %v1915
    %1981 = vmatprep.subr.mxu0 %v1920
    %1982 = vmatpush1.msra.mxu0 %v1919
    %1983 = vmatprep.subr.mxu0 %v1924
    %1984 = vmatpush1.msra.mxu0 %v1923
    %1985 = vmatprep.subr.mxu0 %v1928
    %1986 = vmatpush1.msra.mxu0 %v1927
    %1987 = vmatprep.subr.mxu0 %v1932
    %1988 = vmatpush1.msra.mxu0 %v1931
    %1989 = vmatprep.subr.mxu0 %v1936
    %1990 = vmatpush1.msra.mxu0 %v1935
    %1991 = vmatprep.subr.mxu0 %v1940
    %1992 = vmatpush1.msra.mxu0 %v1939
    %1993 = vmatprep.subr.mxu0 %v1944
    %1994 = vmatpush1.msra.mxu0 %v1943
    %1995 = vmatprep.subr.mxu0 %v1948
    %1996 = vmatpush1.msra.mxu0 %v1947
    %1997 = vmatprep.subr.mxu0 %v1952
    %1998 = vmatpush1.msra.mxu0 %v1951
    %1999 = vmatprep.subr.mxu0 %v1956
    %2000 = vmatpush1.msra.mxu0 %v1955
    %2001 = vmatprep.subr.mxu0 %v1960
    %2002 = vmatpush1.msra.mxu0 %v1959
    %2003 = vmatprep.subr.mxu0 %v1964
    %2004 = vmatpush1.msra.mxu0 %v1963
    %2005 = vmatprep.subr.mxu0 %v1968
    %2006 = vmatpush1.msra.mxu0 %v1967
    %2007 = vmatprep.subr.mxu0 %v1972
    %2008 = vmatpush1.msra.mxu0 %v1971
    %2009 = vmatprep.subr.mxu0 %v1976
    %2010 = vmatpush1.msra.mxu0 %v1975
    %2011 = vmatprep.subr.mxu0 0.0
    %2012 = vmatpush1.msra.mxu0 0.0
    %2013 = vmatprep.subr.mxu0 0.0
    %2014 = vmatpush1.msra.mxu0 0.0
    %2015 = vmatprep.subr.mxu0 0.0
    %2016 = vmatpush1.msra.mxu0 0.0
    %2017 = vmatprep.subr.mxu0 0.0
    %2018 = vmatpush1.msra.mxu0 0.0
    %2019 = vmatprep.subr.mxu0 0.0
    %2020 = vmatpush1.msra.mxu0 0.0
    %2021 = vmatprep.subr.mxu0 0.0
    %2022 = vmatpush1.msra.mxu0 0.0
    %2023 = vmatprep.subr.mxu0 0.0
    %2024 = vmatpush1.msra.mxu0 0.0
    %2025 = vmatprep.subr.mxu0 0.0
    %2026 = vmatpush1.msra.mxu0 0.0
    %2027 = vmatprep.subr.mxu0 0.0
    %2028 = vmatpush1.msra.mxu0 0.0
    %2029 = vmatprep.subr.mxu0 0.0
    %2030 = vmatpush1.msra.mxu0 0.0
    %2031 = vmatprep.subr.mxu0 0.0
    %2032 = vmatpush1.msra.mxu0 0.0
    %2033 = vmatprep.subr.mxu0 0.0
    %2034 = vmatpush1.msra.mxu0 0.0
    %2035 = vmatprep.subr.mxu0 0.0
    %2036 = vmatpush1.msra.mxu0 0.0
    %2037 = vmatprep.subr.mxu0 0.0
    %2038 = vmatpush1.msra.mxu0 0.0
    %2039 = vmatprep.subr.mxu0 0.0
    %2040 = vmatpush1.msra.mxu0 0.0
    %2041 = vmatprep.subr.mxu0 0.0
    %2042 = vmatpush1.msra.mxu0 0.0
    %2043 = vmatprep.mubr.f32.mxu0 0.0
    %2044 = vmatmul.mubr.f32.gmra.mrb[0].mxu0 %v1905
    %v2045 = vpop.f32.mrb[0].mxu0
    %v2046 = vadd.f32 0.0, %v2045
    %v2047 = vpop.f32.mrb[0].mxu0
    %v2048 = vadd.f32 0.0, %v2047
    %2049 = vdwg.mxu0
    %2050 = vmatprep.subr.mxu0 %v1918
    %2051 = vmatpush1.msra.mxu0 %v1917
    %2052 = vmatprep.subr.mxu0 %v1922
    %2053 = vmatpush1.msra.mxu0 %v1921
    %2054 = vmatprep.subr.mxu0 %v1926
    %2055 = vmatpush1.msra.mxu0 %v1925
    %2056 = vmatprep.subr.mxu0 %v1930
    %2057 = vmatpush1.msra.mxu0 %v1929
    %2058 = vmatprep.subr.mxu0 %v1934
    %2059 = vmatpush1.msra.mxu0 %v1933
    %2060 = vmatprep.subr.mxu0 %v1938
    %2061 = vmatpush1.msra.mxu0 %v1937
    %2062 = vmatprep.subr.mxu0 %v1942
    %2063 = vmatpush1.msra.mxu0 %v1941
    %2064 = vmatprep.subr.mxu0 %v1946
    %2065 = vmatpush1.msra.mxu0 %v1945
    %2066 = vmatprep.subr.mxu0 %v1950
    %2067 = vmatpush1.msra.mxu0 %v1949
    %2068 = vmatprep.subr.mxu0 %v1954
    %2069 = vmatpush1.msra.mxu0 %v1953
    %2070 = vmatprep.subr.mxu0 %v1958
    %2071 = vmatpush1.msra.mxu0 %v1957
    %2072 = vmatprep.subr.mxu0 %v1962
    %2073 = vmatpush1.msra.mxu0 %v1961
    %2074 = vmatprep.subr.mxu0 %v1966
    %2075 = vmatpush1.msra.mxu0 %v1965
    %2076 = vmatprep.subr.mxu0 %v1970
    %2077 = vmatpush1.msra.mxu0 %v1969
    %2078 = vmatprep.subr.mxu0 %v1974
    %2079 = vmatpush1.msra.mxu0 %v1973
    %2080 = vmatprep.subr.mxu0 %v1978
    %2081 = vmatpush1.msra.mxu0 %v1977
    %2082 = vmatprep.subr.mxu0 0.0
    %2083 = vmatpush1.msra.mxu0 0.0
    %2084 = vmatprep.subr.mxu0 0.0
    %2085 = vmatpush1.msra.mxu0 0.0
    %2086 = vmatprep.subr.mxu0 0.0
    %2087 = vmatpush1.msra.mxu0 0.0
    %2088 = vmatprep.subr.mxu0 0.0
    %2089 = vmatpush1.msra.mxu0 0.0
    %2090 = vmatprep.subr.mxu0 0.0
    %2091 = vmatpush1.msra.mxu0 0.0
    %2092 = vmatprep.subr.mxu0 0.0
    %2093 = vmatpush1.msra.mxu0 0.0
    %2094 = vmatprep.subr.mxu0 0.0
    %2095 = vmatpush1.msra.mxu0 0.0
    %2096 = vmatprep.subr.mxu0 0.0
    %2097 = vmatpush1.msra.mxu0 0.0
    %2098 = vmatprep.subr.mxu0 0.0
    %2099 = vmatpush1.msra.mxu0 0.0
    %2100 = vmatprep.subr.mxu0 0.0
    %2101 = vmatpush1.msra.mxu0 0.0
    %2102 = vmatprep.subr.mxu0 0.0
    %2103 = vmatpush1.msra.mxu0 0.0
    %2104 = vmatprep.subr.mxu0 0.0
    %2105 = vmatpush1.msra.mxu0 0.0
    %2106 = vmatprep.subr.mxu0 0.0
    %2107 = vmatpush1.msra.mxu0 0.0
    %2108 = vmatprep.subr.mxu0 0.0
    %2109 = vmatpush1.msra.mxu0 0.0
    %2110 = vmatprep.subr.mxu0 0.0
    %2111 = vmatpush1.msra.mxu0 0.0
    %2112 = vmatprep.subr.mxu0 0.0
    %2113 = vmatpush1.msra.mxu0 0.0
    %2114 = vmatprep.mubr.f32.mxu0 0.0
    %2115 = vmatmul.mubr.f32.gmra.mrb[0].mxu0 %v1905
    %v2116 = vpop.f32.mrb[0].mxu0
    %v2117 = vadd.f32 0.0, %v2116
    %v2118 = vpop.f32.mrb[0].mxu0
    %v2119 = vadd.f32 0.0, %v2118
    %2120 = vdwg.mxu0
    %v2121 = vadd.f32 %v1911, %v2046
    %v2122 = vadd.f32 %v1912, %v2048
    %v2123 = vadd.f32 %v1913, %v2117
    %v2124 = vadd.f32 %v1914, %v2119
    %v2125 = vmul.f32 %v2121, 0.5
    %v2126 = vtanh.pop %v2125
    %v2127 = vadd.f32 %v2126, 1.0
    %v2128 = vmul.f32 %v2127, 0.5
    %v2129 = vmul.f32 %v2122, 0.5
    %v2130 = vtanh.pop %v2129
    %v2131 = vadd.f32 %v2130, 1.0
    %v2132 = vmul.f32 %v2131, 0.5
    %v2133 = vtanh.pop %v2123
    %v2134 = vmul.f32 %v2124, 0.5
    %v2135 = vtanh.pop %v2134
    %v2136 = vadd.f32 %v2135, 1.0
    %v2137 = vmul.f32 %v2136, 0.5
    %v2138 = vmul.f32 %v2132, %v1903
    %v2139 = vmul.f32 %v2128, %v2133
    %v2140 = vadd.f32 %v2138, %v2139
    %v2141 = vtanh.pop %v2140
    %v2142 = vmul.f32 %v2137, %v2141
    %s2143 = scalar_lea.vmem [#allocation3], 48
    %2144 = vst [vmem:[%s2143] sm:$0xff] %v2142
    %s2145 = smul.u32 7, 4
    %s2146 = smul.addr %s2145, 8
    %s2147 = scalar_lea.vmem [#allocation2], %s2146
    %v2148 = vld [vmem:[%s2147] sm:$0xff]
    %v2149 = vld [vmem:[%s2147 + $0x8] sm:$0xff]
    %v2150 = vld [vmem:[%s2147 + $0x10] sm:$0xff]
    %v2151 = vld [vmem:[%s2147 + $0x18] sm:$0xff]
    %v2152 = vld [vmem:[#allocation4] sm:$0xff]
    %v2153 = vld [vmem:[#allocation4 + $0x8] sm:$0xff]
    %v2154 = vld [vmem:[#allocation4 + $0x10] sm:$0xff]
    %v2155 = vld [vmem:[#allocation4 + $0x18] sm:$0xff]
    %v2156 = vld [vmem:[#allocation4 + $0x28] sm:$0xff]
    %v2157 = vld [vmem:[#allocation4 + $0x30] sm:$0xff]
    %v2158 = vld [vmem:[#allocation4 + $0x38] sm:$0xff]
    %v2159 = vld [vmem:[#allocation4 + $0x40] sm:$0xff]
    %v2160 = vld [vmem:[#allocation4 + $0x50] sm:$0xff]
    %v2161 = vld [vmem:[#allocation4 + $0x58] sm:$0xff]
    %v2162 = vld [vmem:[#allocation4 + $0x60] sm:$0xff]
    %v2163 = vld [vmem:[#allocation4 + $0x68] sm:$0xff]
    %v2164 = vld [vmem:[#allocation4 + $0x78] sm:$0xff]
    %v2165 = vld [vmem:[#allocation4 + $0x80] sm:$0xff]
    %v2166 = vld [vmem:[#allocation4 + $0x88] sm:$0xff]
    %v2167 = vld [vmem:[#allocation4 + $0x90] sm:$0xff]
    %v2168 = vld [vmem:[#allocation4 + $0xa0] sm:$0xff]
    %v2169 = vld [vmem:[#allocation4 + $0xa8] sm:$0xff]
    %v2170 = vld [vmem:[#allocation4 + $0xb0] sm:$0xff]
    %v2171 = vld [vmem:[#allocation4 + $0xb8] sm:$0xff]
    %v2172 = vld [vmem:[#allocation4 + $0xc8] sm:$0xff]
    %v2173 = vld [vmem:[#allocation4 + $0xd0] sm:$0xff]
    %v2174 = vld [vmem:[#allocation4 + $0xd8] sm:$0xff]
    %v2175 = vld [vmem:[#allocation4 + $0xe0] sm:$0xff]
    %v2176 = vld [vmem:[#allocation4 + $0xf0] sm:$0xff]
    %v2177 = vld [vmem:[#allocation4 + $0xf8] sm:$0xff]
    %v2178 = vld [vmem:[#allocation4 + $0x100] sm:$0xff]
    %v2179 = vld [vmem:[#allocation4 + $0x108] sm:$0xff]
    %v2180 = vld [vmem:[#allocation4 + $0x118] sm:$0xff]
    %v2181 = vld [vmem:[#allocation4 + $0x120] sm:$0xff]
    %v2182 = vld [vmem:[#allocation4 + $0x128] sm:$0xff]
    %v2183 = vld [vmem:[#allocation4 + $0x130] sm:$0xff]
    %v2184 = vld [vmem:[#allocation4 + $0x140] sm:$0xff]
    %v2185 = vld [vmem:[#allocation4 + $0x148] sm:$0xff]
    %v2186 = vld [vmem:[#allocation4 + $0x150] sm:$0xff]
    %v2187 = vld [vmem:[#allocation4 + $0x158] sm:$0xff]
    %v2188 = vld [vmem:[#allocation4 + $0x168] sm:$0xff]
    %v2189 = vld [vmem:[#allocation4 + $0x170] sm:$0xff]
    %v2190 = vld [vmem:[#allocation4 + $0x178] sm:$0xff]
    %v2191 = vld [vmem:[#allocation4 + $0x180] sm:$0xff]
    %v2192 = vld [vmem:[#allocation4 + $0x190] sm:$0xff]
    %v2193 = vld [vmem:[#allocation4 + $0x198] sm:$0xff]
    %v2194 = vld [vmem:[#allocation4 + $0x1a0] sm:$0xff]
    %v2195 = vld [vmem:[#allocation4 + $0x1a8] sm:$0xff]
    %v2196 = vld [vmem:[#allocation4 + $0x1b8] sm:$0xff]
    %v2197 = vld [vmem:[#allocation4 + $0x1c0] sm:$0xff]
    %v2198 = vld [vmem:[#allocation4 + $0x1c8] sm:$0xff]
    %v2199 = vld [vmem:[#allocation4 + $0x1d0] sm:$0xff]
    %v2200 = vld [vmem:[#allocation4 + $0x1e0] sm:$0xff]
    %v2201 = vld [vmem:[#allocation4 + $0x1e8] sm:$0xff]
    %v2202 = vld [vmem:[#allocation4 + $0x1f0] sm:$0xff]
    %v2203 = vld [vmem:[#allocation4 + $0x1f8] sm:$0xff]
    %v2204 = vld [vmem:[#allocation4 + $0x208] sm:$0xff]
    %v2205 = vld [vmem:[#allocation4 + $0x210] sm:$0xff]
    %v2206 = vld [vmem:[#allocation4 + $0x218] sm:$0xff]
    %v2207 = vld [vmem:[#allocation4 + $0x220] sm:$0xff]
    %v2208 = vld [vmem:[#allocation4 + $0x230] sm:$0xff]
    %v2209 = vld [vmem:[#allocation4 + $0x238] sm:$0xff]
    %v2210 = vld [vmem:[#allocation4 + $0x240] sm:$0xff]
    %v2211 = vld [vmem:[#allocation4 + $0x248] sm:$0xff]
    %v2212 = vld [vmem:[#allocation4 + $0x258] sm:$0xff]
    %v2213 = vld [vmem:[#allocation4 + $0x260] sm:$0xff]
    %v2214 = vld [vmem:[#allocation4 + $0x268] sm:$0xff]
    %v2215 = vld [vmem:[#allocation4 + $0x270] sm:$0xff]
    %2216 = vmatprep.subr.mxu0 %v2153
    %2217 = vmatpush1.msra.mxu0 %v2152
    %2218 = vmatprep.subr.mxu0 %v2157
    %2219 = vmatpush1.msra.mxu0 %v2156
    %2220 = vmatprep.subr.mxu0 %v2161
    %2221 = vmatpush1.msra.mxu0 %v2160
    %2222 = vmatprep.subr.mxu0 %v2165
    %2223 = vmatpush1.msra.mxu0 %v2164
    %2224 = vmatprep.subr.mxu0 %v2169
    %2225 = vmatpush1.msra.mxu0 %v2168
    %2226 = vmatprep.subr.mxu0 %v2173
    %2227 = vmatpush1.msra.mxu0 %v2172
    %2228 = vmatprep.subr.mxu0 %v2177
    %2229 = vmatpush1.msra.mxu0 %v2176
    %2230 = vmatprep.subr.mxu0 %v2181
    %2231 = vmatpush1.msra.mxu0 %v2180
    %2232 = vmatprep.subr.mxu0 %v2185
    %2233 = vmatpush1.msra.mxu0 %v2184
    %2234 = vmatprep.subr.mxu0 %v2189
    %2235 = vmatpush1.msra.mxu0 %v2188
    %2236 = vmatprep.subr.mxu0 %v2193
    %2237 = vmatpush1.msra.mxu0 %v2192
    %2238 = vmatprep.subr.mxu0 %v2197
    %2239 = vmatpush1.msra.mxu0 %v2196
    %2240 = vmatprep.subr.mxu0 %v2201
    %2241 = vmatpush1.msra.mxu0 %v2200
    %2242 = vmatprep.subr.mxu0 %v2205
    %2243 = vmatpush1.msra.mxu0 %v2204
    %2244 = vmatprep.subr.mxu0 %v2209
    %2245 = vmatpush1.msra.mxu0 %v2208
    %2246 = vmatprep.subr.mxu0 %v2213
    %2247 = vmatpush1.msra.mxu0 %v2212
    %2248 = vmatprep.subr.mxu0 0.0
    %2249 = vmatpush1.msra.mxu0 0.0
    %2250 = vmatprep.subr.mxu0 0.0
    %2251 = vmatpush1.msra.mxu0 0.0
    %2252 = vmatprep.subr.mxu0 0.0
    %2253 = vmatpush1.msra.mxu0 0.0
    %2254 = vmatprep.subr.mxu0 0.0
    %2255 = vmatpush1.msra.mxu0 0.0
    %2256 = vmatprep.subr.mxu0 0.0
    %2257 = vmatpush1.msra.mxu0 0.0
    %2258 = vmatprep.subr.mxu0 0.0
    %2259 = vmatpush1.msra.mxu0 0.0
    %2260 = vmatprep.subr.mxu0 0.0
    %2261 = vmatpush1.msra.mxu0 0.0
    %2262 = vmatprep.subr.mxu0 0.0
    %2263 = vmatpush1.msra.mxu0 0.0
    %2264 = vmatprep.subr.mxu0 0.0
    %2265 = vmatpush1.msra.mxu0 0.0
    %2266 = vmatprep.subr.mxu0 0.0
    %2267 = vmatpush1.msra.mxu0 0.0
    %2268 = vmatprep.subr.mxu0 0.0
    %2269 = vmatpush1.msra.mxu0 0.0
    %2270 = vmatprep.subr.mxu0 0.0
    %2271 = vmatpush1.msra.mxu0 0.0
    %2272 = vmatprep.subr.mxu0 0.0
    %2273 = vmatpush1.msra.mxu0 0.0
    %2274 = vmatprep.subr.mxu0 0.0
    %2275 = vmatpush1.msra.mxu0 0.0
    %2276 = vmatprep.subr.mxu0 0.0
    %2277 = vmatpush1.msra.mxu0 0.0
    %2278 = vmatprep.subr.mxu0 0.0
    %2279 = vmatpush1.msra.mxu0 0.0
    %2280 = vmatprep.mubr.f32.mxu0 0.0
    %2281 = vmatmul.mubr.f32.gmra.mrb[0].mxu0 %v2142
    %v2282 = vpop.f32.mrb[0].mxu0
    %v2283 = vadd.f32 0.0, %v2282
    %v2284 = vpop.f32.mrb[0].mxu0
    %v2285 = vadd.f32 0.0, %v2284
    %2286 = vdwg.mxu0
    %2287 = vmatprep.subr.mxu0 %v2155
    %2288 = vmatpush1.msra.mxu0 %v2154
    %2289 = vmatprep.subr.mxu0 %v2159
    %2290 = vmatpush1.msra.mxu0 %v2158
    %2291 = vmatprep.subr.mxu0 %v2163
    %2292 = vmatpush1.msra.mxu0 %v2162
    %2293 = vmatprep.subr.mxu0 %v2167
    %2294 = vmatpush1.msra.mxu0 %v2166
    %2295 = vmatprep.subr.mxu0 %v2171
    %2296 = vmatpush1.msra.mxu0 %v2170
    %2297 = vmatprep.subr.mxu0 %v2175
    %2298 = vmatpush1.msra.mxu0 %v2174
    %2299 = vmatprep.subr.mxu0 %v2179
    %2300 = vmatpush1.msra.mxu0 %v2178
    %2301 = vmatprep.subr.mxu0 %v2183
    %2302 = vmatpush1.msra.mxu0 %v2182
    %2303 = vmatprep.subr.mxu0 %v2187
    %2304 = vmatpush1.msra.mxu0 %v2186
    %2305 = vmatprep.subr.mxu0 %v2191
    %2306 = vmatpush1.msra.mxu0 %v2190
    %2307 = vmatprep.subr.mxu0 %v2195
    %2308 = vmatpush1.msra.mxu0 %v2194
    %2309 = vmatprep.subr.mxu0 %v2199
    %2310 = vmatpush1.msra.mxu0 %v2198
    %2311 = vmatprep.subr.mxu0 %v2203
    %2312 = vmatpush1.msra.mxu0 %v2202
    %2313 = vmatprep.subr.mxu0 %v2207
    %2314 = vmatpush1.msra.mxu0 %v2206
    %2315 = vmatprep.subr.mxu0 %v2211
    %2316 = vmatpush1.msra.mxu0 %v2210
    %2317 = vmatprep.subr.mxu0 %v2215
    %2318 = vmatpush1.msra.mxu0 %v2214
    %2319 = vmatprep.subr.mxu0 0.0
    %2320 = vmatpush1.msra.mxu0 0.0
    %2321 = vmatprep.subr.mxu0 0.0
    %2322 = vmatpush1.msra.mxu0 0.0
    %2323 = vmatprep.subr.mxu0 0.0
    %2324 = vmatpush1.msra.mxu0 0.0
    %2325 = vmatprep.subr.mxu0 0.0
    %2326 = vmatpush1.msra.mxu0 0.0
    %2327 = vmatprep.subr.mxu0 0.0
    %2328 = vmatpush1.msra.mxu0 0.0
    %2329 = vmatprep.subr.mxu0 0.0
    %2330 = vmatpush1.msra.mxu0 0.0
    %2331 = vmatprep.subr.mxu0 0.0
    %2332 = vmatpush1.msra.mxu0 0.0
    %2333 = vmatprep.subr.mxu0 0.0
    %2334 = vmatpush1.msra.mxu0 0.0
    %2335 = vmatprep.subr.mxu0 0.0
    %2336 = vmatpush1.msra.mxu0 0.0
    %2337 = vmatprep.subr.mxu0 0.0
    %2338 = vmatpush1.msra.mxu0 0.0
    %2339 = vmatprep.subr.mxu0 0.0
    %2340 = vmatpush1.msra.mxu0 0.0
    %2341 = vmatprep.subr.mxu0 0.0
    %2342 = vmatpush1.msra.mxu0 0.0
    %2343 = vmatprep.subr.mxu0 0.0
    %2344 = vmatpush1.msra.mxu0 0.0
    %2345 = vmatprep.subr.mxu0 0.0
    %2346 = vmatpush1.msra.mxu0 0.0
    %2347 = vmatprep.subr.mxu0 0.0
    %2348 = vmatpush1.msra.mxu0 0.0
    %2349 = vmatprep.subr.mxu0 0.0
    %2350 = vmatpush1.msra.mxu0 0.0
    %2351 = vmatprep.mubr.f32.mxu0 0.0
    %2352 = vmatmul.mubr.f32.gmra.mrb[0].mxu0 %v2142
    %v2353 = vpop.f32.mrb[0].mxu0
    %v2354 = vadd.f32 0.0, %v2353
    %v2355 = vpop.f32.mrb[0].mxu0
    %v2356 = vadd.f32 0.0, %v2355
    %2357 = vdwg.mxu0
    %v2358 = vadd.f32 %v2148, %v2283
    %v2359 = vadd.f32 %v2149, %v2285
    %v2360 = vadd.f32 %v2150, %v2354
    %v2361 = vadd.f32 %v2151, %v2356
    %v2362 = vmul.f32 %v2358, 0.5
    %v2363 = vtanh.pop %v2362
    %v2364 = vadd.f32 %v2363, 1.0
    %v2365 = vmul.f32 %v2364, 0.5
    %v2366 = vmul.f32 %v2359, 0.5
    %v2367 = vtanh.pop %v2366
    %v2368 = vadd.f32 %v2367, 1.0
    %v2369 = vmul.f32 %v2368, 0.5
    %v2370 = vtanh.pop %v2360
    %v2371 = vmul.f32 %v2361, 0.5
    %v2372 = vtanh.pop %v2371
    %v2373 = vadd.f32 %v2372, 1.0
    %v2374 = vmul.f32 %v2373, 0.5
    %v2375 = vmul.f32 %v2369, %v2140
    %v2376 = vmul.f32 %v2365, %v2370
    %v2377 = vadd.f32 %v2375, %v2376
    %v2378 = vtanh.pop %v2377
    %v2379 = vmul.f32 %v2374, %v2378
    %s2380 = scalar_lea.vmem [#allocation3], 56
    %2381 = vst [vmem:[%s2380] sm:$0xff] %v2379
    %s2382 = smul.u32 8, 4
    %s2383 = smul.addr %s2382, 8
    %s2384 = scalar_lea.vmem [#allocation2], %s2383
    %v2385 = vld [vmem:[%s2384] sm:$0xff]
    %v2386 = vld [vmem:[%s2384 + $0x8] sm:$0xff]
    %v2387 = vld [vmem:[%s2384 + $0x10] sm:$0xff]
    %v2388 = vld [vmem:[%s2384 + $0x18] sm:$0xff]
    %v2389 = vld [vmem:[#allocation4] sm:$0xff]
    %v2390 = vld [vmem:[#allocation4 + $0x8] sm:$0xff]
    %v2391 = vld [vmem:[#allocation4 + $0x10] sm:$0xff]
    %v2392 = vld [vmem:[#allocation4 + $0x18] sm:$0xff]
    %v2393 = vld [vmem:[#allocation4 + $0x28] sm:$0xff]
    %v2394 = vld [vmem:[#allocation4 + $0x30] sm:$0xff]
    %v2395 = vld [vmem:[#allocation4 + $0x38] sm:$0xff]
    %v2396 = vld [vmem:[#allocation4 + $0x40] sm:$0xff]
    %v2397 = vld [vmem:[#allocation4 + $0x50] sm:$0xff]
    %v2398 = vld [vmem:[#allocation4 + $0x58] sm:$0xff]
    %v2399 = vld [vmem:[#allocation4 + $0x60] sm:$0xff]
    %v2400 = vld [vmem:[#allocation4 + $0x68] sm:$0xff]
    %v2401 = vld [vmem:[#allocation4 + $0x78] sm:$0xff]
    %v2402 = vld [vmem:[#allocation4 + $0x80] sm:$0xff]
    %v2403 = vld [vmem:[#allocation4 + $0x88] sm:$0xff]
    %v2404 = vld [vmem:[#allocation4 + $0x90] sm:$0xff]
    %v2405 = vld [vmem:[#allocation4 + $0xa0] sm:$0xff]
    %v2406 = vld [vmem:[#allocation4 + $0xa8] sm:$0xff]
    %v2407 = vld [vmem:[#allocation4 + $0xb0] sm:$0xff]
    %v2408 = vld [vmem:[#allocation4 + $0xb8] sm:$0xff]
    %v2409 = vld [vmem:[#allocation4 + $0xc8] sm:$0xff]
    %v2410 = vld [vmem:[#allocation4 + $0xd0] sm:$0xff]
    %v2411 = vld [vmem:[#allocation4 + $0xd8] sm:$0xff]
    %v2412 = vld [vmem:[#allocation4 + $0xe0] sm:$0xff]
    %v2413 = vld [vmem:[#allocation4 + $0xf0] sm:$0xff]
    %v2414 = vld [vmem:[#allocation4 + $0xf8] sm:$0xff]
    %v2415 = vld [vmem:[#allocation4 + $0x100] sm:$0xff]
    %v2416 = vld [vmem:[#allocation4 + $0x108] sm:$0xff]
    %v2417 = vld [vmem:[#allocation4 + $0x118] sm:$0xff]
    %v2418 = vld [vmem:[#allocation4 + $0x120] sm:$0xff]
    %v2419 = vld [vmem:[#allocation4 + $0x128] sm:$0xff]
    %v2420 = vld [vmem:[#allocation4 + $0x130] sm:$0xff]
    %v2421 = vld [vmem:[#allocation4 + $0x140] sm:$0xff]
    %v2422 = vld [vmem:[#allocation4 + $0x148] sm:$0xff]
    %v2423 = vld [vmem:[#allocation4 + $0x150] sm:$0xff]
    %v2424 = vld [vmem:[#allocation4 + $0x158] sm:$0xff]
    %v2425 = vld [vmem:[#allocation4 + $0x168] sm:$0xff]
    %v2426 = vld [vmem:[#allocation4 + $0x170] sm:$0xff]
    %v2427 = vld [vmem:[#allocation4 + $0x178] sm:$0xff]
    %v2428 = vld [vmem:[#allocation4 + $0x180] sm:$0xff]
    %v2429 = vld [vmem:[#allocation4 + $0x190] sm:$0xff]
    %v2430 = vld [vmem:[#allocation4 + $0x198] sm:$0xff]
    %v2431 = vld [vmem:[#allocation4 + $0x1a0] sm:$0xff]
    %v2432 = vld [vmem:[#allocation4 + $0x1a8] sm:$0xff]
    %v2433 = vld [vmem:[#allocation4 + $0x1b8] sm:$0xff]
    %v2434 = vld [vmem:[#allocation4 + $0x1c0] sm:$0xff]
    %v2435 = vld [vmem:[#allocation4 + $0x1c8] sm:$0xff]
    %v2436 = vld [vmem:[#allocation4 + $0x1d0] sm:$0xff]
    %v2437 = vld [vmem:[#allocation4 + $0x1e0] sm:$0xff]
    %v2438 = vld [vmem:[#allocation4 + $0x1e8] sm:$0xff]
    %v2439 = vld [vmem:[#allocation4 + $0x1f0] sm:$0xff]
    %v2440 = vld [vmem:[#allocation4 + $0x1f8] sm:$0xff]
    %v2441 = vld [vmem:[#allocation4 + $0x208] sm:$0xff]
    %v2442 = vld [vmem:[#allocation4 + $0x210] sm:$0xff]
    %v2443 = vld [vmem:[#allocation4 + $0x218] sm:$0xff]
    %v2444 = vld [vmem:[#allocation4 + $0x220] sm:$0xff]
    %v2445 = vld [vmem:[#allocation4 + $0x230] sm:$0xff]
    %v2446 = vld [vmem:[#allocation4 + $0x238] sm:$0xff]
    %v2447 = vld [vmem:[#allocation4 + $0x240] sm:$0xff]
    %v2448 = vld [vmem:[#allocation4 + $0x248] sm:$0xff]
    %v2449 = vld [vmem:[#allocation4 + $0x258] sm:$0xff]
    %v2450 = vld [vmem:[#allocation4 + $0x260] sm:$0xff]
    %v2451 = vld [vmem:[#allocation4 + $0x268] sm:$0xff]
    %v2452 = vld [vmem:[#allocation4 + $0x270] sm:$0xff]
    %2453 = vmatprep.subr.mxu0 %v2390
    %2454 = vmatpush1.msra.mxu0 %v2389
    %2455 = vmatprep.subr.mxu0 %v2394
    %2456 = vmatpush1.msra.mxu0 %v2393
    %2457 = vmatprep.subr.mxu0 %v2398
    %2458 = vmatpush1.msra.mxu0 %v2397
    %2459 = vmatprep.subr.mxu0 %v2402
    %2460 = vmatpush1.msra.mxu0 %v2401
    %2461 = vmatprep.subr.mxu0 %v2406
    %2462 = vmatpush1.msra.mxu0 %v2405
    %2463 = vmatprep.subr.mxu0 %v2410
    %2464 = vmatpush1.msra.mxu0 %v2409
    %2465 = vmatprep.subr.mxu0 %v2414
    %2466 = vmatpush1.msra.mxu0 %v2413
    %2467 = vmatprep.subr.mxu0 %v2418
    %2468 = vmatpush1.msra.mxu0 %v2417
    %2469 = vmatprep.subr.mxu0 %v2422
    %2470 = vmatpush1.msra.mxu0 %v2421
    %2471 = vmatprep.subr.mxu0 %v2426
    %2472 = vmatpush1.msra.mxu0 %v2425
    %2473 = vmatprep.subr.mxu0 %v2430
    %2474 = vmatpush1.msra.mxu0 %v2429
    %2475 = vmatprep.subr.mxu0 %v2434
    %2476 = vmatpush1.msra.mxu0 %v2433
    %2477 = vmatprep.subr.mxu0 %v2438
    %2478 = vmatpush1.msra.mxu0 %v2437
    %2479 = vmatprep.subr.mxu0 %v2442
    %2480 = vmatpush1.msra.mxu0 %v2441
    %2481 = vmatprep.subr.mxu0 %v2446
    %2482 = vmatpush1.msra.mxu0 %v2445
    %2483 = vmatprep.subr.mxu0 %v2450
    %2484 = vmatpush1.msra.mxu0 %v2449
    %2485 = vmatprep.subr.mxu0 0.0
    %2486 = vmatpush1.msra.mxu0 0.0
    %2487 = vmatprep.subr.mxu0 0.0
    %2488 = vmatpush1.msra.mxu0 0.0
    %2489 = vmatprep.subr.mxu0 0.0
    %2490 = vmatpush1.msra.mxu0 0.0
    %2491 = vmatprep.subr.mxu0 0.0
    %2492 = vmatpush1.msra.mxu0 0.0
    %2493 = vmatprep.subr.mxu0 0.0
    %2494 = vmatpush1.msra.mxu0 0.0
    %2495 = vmatprep.subr.mxu0 0.0
    %2496 = vmatpush1.msra.mxu0 0.0
    %2497 = vmatprep.subr.mxu0 0.0
    %2498 = vmatpush1.msra.mxu0 0.0
    %2499 = vmatprep.subr.mxu0 0.0
    %2500 = vmatpush1.msra.mxu0 0.0
    %2501 = vmatprep.subr.mxu0 0.0
    %2502 = vmatpush1.msra.mxu0 0.0
    %2503 = vmatprep.subr.mxu0 0.0
    %2504 = vmatpush1.msra.mxu0 0.0
    %2505 = vmatprep.subr.mxu0 0.0
    %2506 = vmatpush1.msra.mxu0 0.0
    %2507 = vmatprep.subr.mxu0 0.0
    %2508 = vmatpush1.msra.mxu0 0.0
    %2509 = vmatprep.subr.mxu0 0.0
    %2510 = vmatpush1.msra.mxu0 0.0
    %2511 = vmatprep.subr.mxu0 0.0
    %2512 = vmatpush1.msra.mxu0 0.0
    %2513 = vmatprep.subr.mxu0 0.0
    %2514 = vmatpush1.msra.mxu0 0.0
    %2515 = vmatprep.subr.mxu0 0.0
    %2516 = vmatpush1.msra.mxu0 0.0
    %2517 = vmatprep.mubr.f32.mxu0 0.0
    %2518 = vmatmul.mubr.f32.gmra.mrb[0].mxu0 %v2379
    %v2519 = vpop.f32.mrb[0].mxu0
    %v2520 = vadd.f32 0.0, %v2519
    %v2521 = vpop.f32.mrb[0].mxu0
    %v2522 = vadd.f32 0.0, %v2521
    %2523 = vdwg.mxu0
    %2524 = vmatprep.subr.mxu0 %v2392
    %2525 = vmatpush1.msra.mxu0 %v2391
    %2526 = vmatprep.subr.mxu0 %v2396
    %2527 = vmatpush1.msra.mxu0 %v2395
    %2528 = vmatprep.subr.mxu0 %v2400
    %2529 = vmatpush1.msra.mxu0 %v2399
    %2530 = vmatprep.subr.mxu0 %v2404
    %2531 = vmatpush1.msra.mxu0 %v2403
    %2532 = vmatprep.subr.mxu0 %v2408
    %2533 = vmatpush1.msra.mxu0 %v2407
    %2534 = vmatprep.subr.mxu0 %v2412
    %2535 = vmatpush1.msra.mxu0 %v2411
    %2536 = vmatprep.subr.mxu0 %v2416
    %2537 = vmatpush1.msra.mxu0 %v2415
    %2538 = vmatprep.subr.mxu0 %v2420
    %2539 = vmatpush1.msra.mxu0 %v2419
    %2540 = vmatprep.subr.mxu0 %v2424
    %2541 = vmatpush1.msra.mxu0 %v2423
    %2542 = vmatprep.subr.mxu0 %v2428
    %2543 = vmatpush1.msra.mxu0 %v2427
    %2544 = vmatprep.subr.mxu0 %v2432
    %2545 = vmatpush1.msra.mxu0 %v2431
    %2546 = vmatprep.subr.mxu0 %v2436
    %2547 = vmatpush1.msra.mxu0 %v2435
    %2548 = vmatprep.subr.mxu0 %v2440
    %2549 = vmatpush1.msra.mxu0 %v2439
    %2550 = vmatprep.subr.mxu0 %v2444
    %2551 = vmatpush1.msra.mxu0 %v2443
    %2552 = vmatprep.subr.mxu0 %v2448
    %2553 = vmatpush1.msra.mxu0 %v2447
    %2554 = vmatprep.subr.mxu0 %v2452
    %2555 = vmatpush1.msra.mxu0 %v2451
    %2556 = vmatprep.subr.mxu0 0.0
    %2557 = vmatpush1.msra.mxu0 0.0
    %2558 = vmatprep.subr.mxu0 0.0
    %2559 = vmatpush1.msra.mxu0 0.0
    %2560 = vmatprep.subr.mxu0 0.0
    %2561 = vmatpush1.msra.mxu0 0.0
    %2562 = vmatprep.subr.mxu0 0.0
    %2563 = vmatpush1.msra.mxu0 0.0
    %2564 = vmatprep.subr.mxu0 0.0
    %2565 = vmatpush1.msra.mxu0 0.0
    %2566 = vmatprep.subr.mxu0 0.0
    %2567 = vmatpush1.msra.mxu0 0.0
    %2568 = vmatprep.subr.mxu0 0.0
    %2569 = vmatpush1.msra.mxu0 0.0
    %2570 = vmatprep.subr.mxu0 0.0
    %2571 = vmatpush1.msra.mxu0 0.0
    %2572 = vmatprep.subr.mxu0 0.0
    %2573 = vmatpush1.msra.mxu0 0.0
    %2574 = vmatprep.subr.mxu0 0.0
    %2575 = vmatpush1.msra.mxu0 0.0
    %2576 = vmatprep.subr.mxu0 0.0
    %2577 = vmatpush1.msra.mxu0 0.0
    %2578 = vmatprep.subr.mxu0 0.0
    %2579 = vmatpush1.msra.mxu0 0.0
    %2580 = vmatprep.subr.mxu0 0.0
    %2581 = vmatpush1.msra.mxu0 0.0
    %2582 = vmatprep.subr.mxu0 0.0
    %2583 = vmatpush1.msra.mxu0 0.0
    %2584 = vmatprep.subr.mxu0 0.0
    %2585 = vmatpush1.msra.mxu0 0.0
    %2586 = vmatprep.subr.mxu0 0.0
    %2587 = vmatpush1.msra.mxu0 0.0
    %2588 = vmatprep.mubr.f32.mxu0 0.0
    %2589 = vmatmul.mubr.f32.gmra.mrb[0].mxu0 %v2379
    %v2590 = vpop.f32.mrb[0].mxu0
    %v2591 = vadd.f32 0.0, %v2590
    %v2592 = vpop.f32.mrb[0].mxu0
    %v2593 = vadd.f32 0.0, %v2592
    %2594 = vdwg.mxu0
    %v2595 = vadd.f32 %v2385, %v2520
    %v2596 = vadd.f32 %v2386, %v2522
    %v2597 = vadd.f32 %v2387, %v2591
    %v2598 = vadd.f32 %v2388, %v2593
    %v2599 = vmul.f32 %v2595, 0.5
    %v2600 = vtanh.pop %v2599
    %v2601 = vadd.f32 %v2600, 1.0
    %v2602 = vmul.f32 %v2601, 0.5
    %v2603 = vmul.f32 %v2596, 0.5
    %v2604 = vtanh.pop %v2603
    %v2605 = vadd.f32 %v2604, 1.0
    %v2606 = vmul.f32 %v2605, 0.5
    %v2607 = vtanh.pop %v2597
    %v2608 = vmul.f32 %v2598, 0.5
    %v2609 = vtanh.pop %v2608
    %v2610 = vadd.f32 %v2609, 1.0
    %v2611 = vmul.f32 %v2610, 0.5
    %v2612 = vmul.f32 %v2606, %v2377
    %v2613 = vmul.f32 %v2602, %v2607
    %v2614 = vadd.f32 %v2612, %v2613
    %v2615 = vtanh.pop %v2614
    %v2616 = vmul.f32 %v2611, %v2615
    %s2617 = scalar_lea.vmem [#allocation3], 64
    %2618 = vst [vmem:[%s2617] sm:$0xff] %v2616
    %2619 = vst [vmem:[%s5] sm:$0xff] %v2616
    %2620 = vst [vmem:[%s6] sm:$0xff] %v2614
    %v2621 = vld [vmem:[#allocation3] sm:$0xff]
    %v2622 = vld [vmem:[#allocation3 + $0x8] sm:$0xff]
    %v2623 = vld [vmem:[#allocation3 + $0x10] sm:$0xff]
    %v2624 = vld [vmem:[#allocation3 + $0x18] sm:$0xff]
    %v2625 = vld [vmem:[#allocation3 + $0x20] sm:$0xff]
    %v2626 = vld [vmem:[#allocation3 + $0x28] sm:$0xff]
    %v2627 = vld [vmem:[#allocation3 + $0x30] sm:$0xff]
    %v2628 = vld [vmem:[#allocation3 + $0x38] sm:$0xff]
    %v2629 = vld [vmem:[#allocation3 + $0x40] sm:$0xff]
    %v2630 = vld [vmem:[#allocation4 + $0x20] sm:$0xff]
    %v2631 = vld [vmem:[#allocation4 + $0x48] sm:$0xff]
    %v2632 = vld [vmem:[#allocation4 + $0x70] sm:$0xff]
    %v2633 = vld [vmem:[#allocation4 + $0x98] sm:$0xff]
    %v2634 = vld [vmem:[#allocation4 + $0xc0] sm:$0xff]
    %v2635 = vld [vmem:[#allocation4 + $0xe8] sm:$0xff]
    %v2636 = vld [vmem:[#allocation4 + $0x110] sm:$0xff]
    %v2637 = vld [vmem:[#allocation4 + $0x138] sm:$0xff]
    %v2638 = vld [vmem:[#allocation4 + $0x160] sm:$0xff]
    %v2639 = vld [vmem:[#allocation4 + $0x188] sm:$0xff]
    %v2640 = vld [vmem:[#allocation4 + $0x1b0] sm:$0xff]
    %v2641 = vld [vmem:[#allocation4 + $0x1d8] sm:$0xff]
    %v2642 = vld [vmem:[#allocation4 + $0x200] sm:$0xff]
    %v2643 = vld [vmem:[#allocation4 + $0x228] sm:$0xff]
    %v2644 = vld [vmem:[#allocation4 + $0x250] sm:$0xff]
    %v2645 = vld [vmem:[#allocation4 + $0x278] sm:$0xff]
    %v2647 = vlaneseq
    %v2648 = vshrl.u32 %v2647, 7
    %v2649 = vsub.s32 0, %v2648
    %v2650 = vrot.slane %v36, %v2649
    %2652 = vmatprep.subr.mxu0 0.0
    %2653 = vmatpush1.msra.mxu0 %v2630
    %2654 = vmatprep.subr.mxu0 0.0
    %2655 = vmatpush1.msra.mxu0 %v2631
    %2656 = vmatprep.subr.mxu0 0.0
    %2657 = vmatpush1.msra.mxu0 %v2632
    %2658 = vmatprep.subr.mxu0 0.0
    %2659 = vmatpush1.msra.mxu0 %v2633
    %2660 = vmatprep.subr.mxu0 0.0
    %2661 = vmatpush1.msra.mxu0 %v2634
    %2662 = vmatprep.subr.mxu0 0.0
    %2663 = vmatpush1.msra.mxu0 %v2635
    %2664 = vmatprep.subr.mxu0 0.0
    %2665 = vmatpush1.msra.mxu0 %v2636
    %2666 = vmatprep.subr.mxu0 0.0
    %2667 = vmatpush1.msra.mxu0 %v2637
    %2668 = vmatprep.subr.mxu0 0.0
    %2669 = vmatpush1.msra.mxu0 %v2638
    %2670 = vmatprep.subr.mxu0 0.0
    %2671 = vmatpush1.msra.mxu0 %v2639
    %2672 = vmatprep.subr.mxu0 0.0
    %2673 = vmatpush1.msra.mxu0 %v2640
    %2674 = vmatprep.subr.mxu0 0.0
    %2675 = vmatpush1.msra.mxu0 %v2641
    %2676 = vmatprep.subr.mxu0 0.0
    %2677 = vmatpush1.msra.mxu0 %v2642
    %2678 = vmatprep.subr.mxu0 0.0
    %2679 = vmatpush1.msra.mxu0 %v2643
    %2680 = vmatprep.subr.mxu0 0.0
    %2681 = vmatpush1.msra.mxu0 %v2644
    %2682 = vmatprep.subr.mxu0 0.0
    %2683 = vmatpush1.msra.mxu0 %v2645
    %2684 = vmatprep.subr.mxu0 0.0
    %2685 = vmatpush1.msra.mxu0 0.0
    %2686 = vmatprep.subr.mxu0 0.0
    %2687 = vmatpush1.msra.mxu0 0.0
    %2688 = vmatprep.subr.mxu0 0.0
    %2689 = vmatpush1.msra.mxu0 0.0
    %2690 = vmatprep.subr.mxu0 0.0
    %2691 = vmatpush1.msra.mxu0 0.0
    %2692 = vmatprep.subr.mxu0 0.0
    %2693 = vmatpush1.msra.mxu0 0.0
    %2694 = vmatprep.subr.mxu0 0.0
    %2695 = vmatpush1.msra.mxu0 0.0
    %2696 = vmatprep.subr.mxu0 0.0
    %2697 = vmatpush1.msra.mxu0 0.0
    %2698 = vmatprep.subr.mxu0 0.0
    %2699 = vmatpush1.msra.mxu0 0.0
    %2700 = vmatprep.subr.mxu0 0.0
    %2701 = vmatpush1.msra.mxu0 0.0
    %2702 = vmatprep.subr.mxu0 0.0
    %2703 = vmatpush1.msra.mxu0 0.0
    %2704 = vmatprep.subr.mxu0 0.0
    %2705 = vmatpush1.msra.mxu0 0.0
    %2706 = vmatprep.subr.mxu0 0.0
    %2707 = vmatpush1.msra.mxu0 0.0
    %2708 = vmatprep.subr.mxu0 0.0
    %2709 = vmatpush1.msra.mxu0 0.0
    %2710 = vmatprep.subr.mxu0 0.0
    %2711 = vmatpush1.msra.mxu0 0.0
    %2712 = vmatprep.subr.mxu0 0.0
    %2713 = vmatpush1.msra.mxu0 0.0
    %2714 = vmatprep.subr.mxu0 0.0
    %2715 = vmatpush1.msra.mxu0 0.0
    %2716 = vmatprep.mubr.f32.mxu0 0.0
    %2717 = vmatmul.mubr.f32.gmra.mrb[0].mxu0 %v2621
    %v2718 = vpop.f32.mrb[0].mxu0
    %v2719 = vadd.f32 %v2650, %v2718
    %v2720 = vpop.f32.mrb[0].mxu0
    %2721 = vmatprep.mubr.f32.mxu0 0.0
    %2722 = vmatmul.mubr.f32.gmra.mrb[0].mxu0 %v2622
    %v2723 = vpop.f32.mrb[0].mxu0
    %v2724 = vadd.f32 %v2650, %v2723
    %v2725 = vpop.f32.mrb[0].mxu0
    %2726 = vmatprep.mubr.f32.mxu0 0.0
    %2727 = vmatmul.mubr.f32.gmra.mrb[0].mxu0 %v2623
    %v2728 = vpop.f32.mrb[0].mxu0
    %v2729 = vadd.f32 %v2650, %v2728
    %v2730 = vpop.f32.mrb[0].mxu0
    %2731 = vmatprep.mubr.f32.mxu0 0.0
    %2732 = vmatmul.mubr.f32.gmra.mrb[0].mxu0 %v2624
    %v2733 = vpop.f32.mrb[0].mxu0
    %v2734 = vadd.f32 %v2650, %v2733
    %v2735 = vpop.f32.mrb[0].mxu0
    %2736 = vmatprep.mubr.f32.mxu0 0.0
    %2737 = vmatmul.mubr.f32.gmra.mrb[0].mxu0 %v2625
    %v2738 = vpop.f32.mrb[0].mxu0
    %v2739 = vadd.f32 %v2650, %v2738
    %v2740 = vpop.f32.mrb[0].mxu0
    %2741 = vmatprep.mubr.f32.mxu0 0.0
    %2742 = vmatmul.mubr.f32.gmra.mrb[0].mxu0 %v2626
    %v2743 = vpop.f32.mrb[0].mxu0
    %v2744 = vadd.f32 %v2650, %v2743
    %v2745 = vpop.f32.mrb[0].mxu0
    %2746 = vmatprep.mubr.f32.mxu0 0.0
    %2747 = vmatmul.mubr.f32.gmra.mrb[0].mxu0 %v2627
    %v2748 = vpop.f32.mrb[0].mxu0
    %v2749 = vadd.f32 %v2650, %v2748
    %v2750 = vpop.f32.mrb[0].mxu0
    %2751 = vmatprep.mubr.f32.mxu0 0.0
    %2752 = vmatmul.mubr.f32.gmra.mrb[0].mxu0 %v2628
    %v2753 = vpop.f32.mrb[0].mxu0
    %v2754 = vadd.f32 %v2650, %v2753
    %v2755 = vpop.f32.mrb[0].mxu0
    %2756 = vmatprep.mubr.f32.mxu0 0.0
    %2757 = vmatmul.mubr.f32.gmra.mrb[0].mxu0 %v2629
    %v2758 = vpop.f32.mrb[0].mxu0
    %v2759 = vadd.f32 %v2650, %v2758
    %v2760 = vpop.f32.mrb[0].mxu0
    %2761 = vdwg.mxu0
    %v2762 = vlaneseq
    %v2763 = vand.u32 %v2762, 127
    %vm2764 = vcmp.lt.s32.totalorder %v2763, 8
    %vm2765 = vcmp.ge.s32.totalorder %v2763, 24
    %vm2766 = vcmp.lt.s32.totalorder %v2763, 40
    %vm2767 = vmand %vm2765, %vm2766
    %vm2768 = vcmp.ge.s32.totalorder %v2763, 40
    %vm2769 = vcmp.lt.s32.totalorder %v2763, 48
    %vm2770 = vmand %vm2768, %vm2769
    %vm2771 = vcmp.ge.s32.totalorder %v2763, 48
    %vm2772 = vcmp.lt.s32.totalorder %v2763, 51
    %vm2773 = vmand %vm2771, %vm2772
    %v2774 = vsel %vm2764, %v2719, -inf
    %v2775 = vsel %vm2764, %v2724, -inf
    %v2776 = vsel %vm2764, %v2729, -inf
    %v2777 = vsel %vm2764, %v2734, -inf
    %v2778 = vsel %vm2764, %v2739, -inf
    %v2779 = vsel %vm2764, %v2744, -inf
    %v2780 = vsel %vm2764, %v2749, -inf
    %v2781 = vsel %vm2764, %v2754, -inf
    %v2782 = vsel %vm2764, %v2759, -inf
    %2783 = vmax.xlane.f32.xlu0 %v2774
    %v2784 = vpop.xlane.xlu0 %2783
    %2785 = vmax.xlane.f32.xlu0 %v2775
    %v2786 = vpop.xlane.xlu0 %2785
    %2787 = vmax.xlane.f32.xlu0 %v2776
    %v2788 = vpop.xlane.xlu0 %2787
    %2789 = vmax.xlane.f32.xlu0 %v2777
    %v2790 = vpop.xlane.xlu0 %2789
    %2791 = vmax.xlane.f32.xlu0 %v2778
    %v2792 = vpop.xlane.xlu0 %2791
    %2793 = vmax.xlane.f32.xlu0 %v2779
    %v2794 = vpop.xlane.xlu0 %2793
    %2795 = vmax.xlane.f32.xlu0 %v2780
    %v2796 = vpop.xlane.xlu0 %2795
    %2797 = vmax.xlane.f32.xlu0 %v2781
    %v2798 = vpop.xlane.xlu0 %2797
    %2799 = vmax.xlane.f32.xlu0 %v2782
    %v2800 = vpop.xlane.xlu0 %2799
    %v2801 = vsel %vm2773, %v2719, -inf
    %v2802 = vsel %vm2773, %v2724, -inf
    %v2803 = vsel %vm2773, %v2729, -inf
    %v2804 = vsel %vm2773, %v2734, -inf
    %v2805 = vsel %vm2773, %v2739, -inf
    %v2806 = vsel %vm2773, %v2744, -inf
    %v2807 = vsel %vm2773, %v2749, -inf
    %v2808 = vsel %vm2773, %v2754, -inf
    %v2809 = vsel %vm2773, %v2759, -inf
    %2810 = vmax.xlane.f32.xlu0 %v2801
    %v2811 = vpop.xlane.xlu0 %2810
    %2812 = vmax.xlane.f32.xlu0 %v2802
    %v2813 = vpop.xlane.xlu0 %2812
    %2814 = vmax.xlane.f32.xlu0 %v2803
    %v2815 = vpop.xlane.xlu0 %2814
    %2816 = vmax.xlane.f32.xlu0 %v2804
    %v2817 = vpop.xlane.xlu0 %2816
    %2818 = vmax.xlane.f32.xlu0 %v2805
    %v2819 = vpop.xlane.xlu0 %2818
    %2820 = vmax.xlane.f32.xlu0 %v2806
    %v2821 = vpop.xlane.xlu0 %2820
    %2822 = vmax.xlane.f32.xlu0 %v2807
    %v2823 = vpop.xlane.xlu0 %2822
    %2824 = vmax.xlane.f32.xlu0 %v2808
    %v2825 = vpop.xlane.xlu0 %2824
    %2826 = vmax.xlane.f32.xlu0 %v2809
    %v2827 = vpop.xlane.xlu0 %2826
    %v2828 = vsel %vm2773, %v2811, 0.0
    %v2829 = vsel %vm2773, %v2813, 0.0
    %v2830 = vsel %vm2773, %v2815, 0.0
    %v2831 = vsel %vm2773, %v2817, 0.0
    %v2832 = vsel %vm2773, %v2819, 0.0
    %v2833 = vsel %vm2773, %v2821, 0.0
    %v2834 = vsel %vm2773, %v2823, 0.0
    %v2835 = vsel %vm2773, %v2825, 0.0
    %v2836 = vsel %vm2773, %v2827, 0.0
    %v2837 = vsel %vm2764, %v2784, %v2828
    %v2838 = vsel %vm2764, %v2786, %v2829
    %v2839 = vsel %vm2764, %v2788, %v2830
    %v2840 = vsel %vm2764, %v2790, %v2831
    %v2841 = vsel %vm2764, %v2792, %v2832
    %v2842 = vsel %vm2764, %v2794, %v2833
    %v2843 = vsel %vm2764, %v2796, %v2834
    %v2844 = vsel %vm2764, %v2798, %v2835
    %v2845 = vsel %vm2764, %v2800, %v2836
    %v2846 = vsub.f32 %v2719, %v2837
    %v2847 = vsub.f32 %v2724, %v2838
    %v2848 = vsub.f32 %v2729, %v2839
    %v2849 = vsub.f32 %v2734, %v2840
    %v2850 = vsub.f32 %v2739, %v2841
    %v2851 = vsub.f32 %v2744, %v2842
    %v2852 = vsub.f32 %v2749, %v2843
    %v2853 = vsub.f32 %v2754, %v2844
    %v2854 = vsub.f32 %v2759, %v2845
    %v2855 = vmul.f32 %v2846, 1.442695
    %v2856 = vpow.pop %v2855
    %v2857 = vmul.f32 %v2847, 1.442695
    %v2858 = vpow.pop %v2857
    %v2859 = vmul.f32 %v2848, 1.442695
    %v2860 = vpow.pop %v2859
    %v2861 = vmul.f32 %v2849, 1.442695
    %v2862 = vpow.pop %v2861
    %v2863 = vmul.f32 %v2850, 1.442695
    %v2864 = vpow.pop %v2863
    %v2865 = vmul.f32 %v2851, 1.442695
    %v2866 = vpow.pop %v2865
    %v2867 = vmul.f32 %v2852, 1.442695
    %v2868 = vpow.pop %v2867
    %v2869 = vmul.f32 %v2853, 1.442695
    %v2870 = vpow.pop %v2869
    %v2871 = vmul.f32 %v2854, 1.442695
    %v2872 = vpow.pop %v2871
    %v2873 = vsel %vm2764, %v2856, 0.0
    %v2874 = vsel %vm2764, %v2858, 0.0
    %v2875 = vsel %vm2764, %v2860, 0.0
    %v2876 = vsel %vm2764, %v2862, 0.0
    %v2877 = vsel %vm2764, %v2864, 0.0
    %v2878 = vsel %vm2764, %v2866, 0.0
    %v2879 = vsel %vm2764, %v2868, 0.0
    %v2880 = vsel %vm2764, %v2870, 0.0
    %v2881 = vsel %vm2764, %v2872, 0.0
    %2882 = vadd.xlane.f32.xlu0 %v2873
    %v2883 = vpop.xlane.xlu0 %2882
    %2884 = vadd.xlane.f32.xlu0 %v2874
    %v2885 = vpop.xlane.xlu0 %2884
    %2886 = vadd.xlane.f32.xlu0 %v2875
    %v2887 = vpop.xlane.xlu0 %2886
    %2888 = vadd.xlane.f32.xlu0 %v2876
    %v2889 = vpop.xlane.xlu0 %2888
    %2890 = vadd.xlane.f32.xlu0 %v2877
    %v2891 = vpop.xlane.xlu0 %2890
    %2892 = vadd.xlane.f32.xlu0 %v2878
    %v2893 = vpop.xlane.xlu0 %2892
    %2894 = vadd.xlane.f32.xlu0 %v2879
    %v2895 = vpop.xlane.xlu0 %2894
    %2896 = vadd.xlane.f32.xlu0 %v2880
    %v2897 = vpop.xlane.xlu0 %2896
    %2898 = vadd.xlane.f32.xlu0 %v2881
    %v2899 = vpop.xlane.xlu0 %2898
    %v2900 = vsel %vm2773, %v2856, 0.0
    %v2901 = vsel %vm2773, %v2858, 0.0
    %v2902 = vsel %vm2773, %v2860, 0.0
    %v2903 = vsel %vm2773, %v2862, 0.0
    %v2904 = vsel %vm2773, %v2864, 0.0
    %v2905 = vsel %vm2773, %v2866, 0.0
    %v2906 = vsel %vm2773, %v2868, 0.0
    %v2907 = vsel %vm2773, %v2870, 0.0
    %v2908 = vsel %vm2773, %v2872, 0.0
    %2909 = vadd.xlane.f32.xlu0 %v2900
    %v2910 = vpop.xlane.xlu0 %2909
    %2911 = vadd.xlane.f32.xlu0 %v2901
    %v2912 = vpop.xlane.xlu0 %2911
    %2913 = vadd.xlane.f32.xlu0 %v2902
    %v2914 = vpop.xlane.xlu0 %2913
    %2915 = vadd.xlane.f32.xlu0 %v2903
    %v2916 = vpop.xlane.xlu0 %2915
    %2917 = vadd.xlane.f32.xlu0 %v2904
    %v2918 = vpop.xlane.xlu0 %2917
    %2919 = vadd.xlane.f32.xlu0 %v2905
    %v2920 = vpop.xlane.xlu0 %2919
    %2921 = vadd.xlane.f32.xlu0 %v2906
    %v2922 = vpop.xlane.xlu0 %2921
    %2923 = vadd.xlane.f32.xlu0 %v2907
    %v2924 = vpop.xlane.xlu0 %2923
    %2925 = vadd.xlane.f32.xlu0 %v2908
    %v2926 = vpop.xlane.xlu0 %2925
    %v2927 = vsel %vm2767, %v2856, %v2719
    %v2928 = vsel %vm2767, %v2858, %v2724
    %v2929 = vsel %vm2767, %v2860, %v2729
    %v2930 = vsel %vm2767, %v2862, %v2734
    %v2931 = vsel %vm2767, %v2864, %v2739
    %v2932 = vsel %vm2767, %v2866, %v2744
    %v2933 = vsel %vm2767, %v2868, %v2749
    %v2934 = vsel %vm2767, %v2870, %v2754
    %v2935 = vsel %vm2767, %v2872, %v2759
    %v2936 = vtanh.pop %v2719
    %v2937 = vtanh.pop %v2724
    %v2938 = vtanh.pop %v2729
    %v2939 = vtanh.pop %v2734
    %v2940 = vtanh.pop %v2739
    %v2941 = vtanh.pop %v2744
    %v2942 = vtanh.pop %v2749
    %v2943 = vtanh.pop %v2754
    %v2944 = vtanh.pop %v2759
    %v2945 = vsel %vm2770, %v2936, %v2927
    %v2946 = vsel %vm2770, %v2937, %v2928
    %v2947 = vsel %vm2770, %v2938, %v2929
    %v2948 = vsel %vm2770, %v2939, %v2930
    %v2949 = vsel %vm2770, %v2940, %v2931
    %v2950 = vsel %vm2770, %v2941, %v2932
    %v2951 = vsel %vm2770, %v2942, %v2933
    %v2952 = vsel %vm2770, %v2943, %v2934
    %v2953 = vsel %vm2770, %v2944, %v2935
    %v2954 = vrcp.pop %v2883
    %v2955 = vmul.f32 %v2856, %v2954
    %v2956 = vrcp.pop %v2885
    %v2957 = vmul.f32 %v2858, %v2956
    %v2958 = vrcp.pop %v2887
    %v2959 = vmul.f32 %v2860, %v2958
    %v2960 = vrcp.pop %v2889
    %v2961 = vmul.f32 %v2862, %v2960
    %v2962 = vrcp.pop %v2891
    %v2963 = vmul.f32 %v2864, %v2962
    %v2964 = vrcp.pop %v2893
    %v2965 = vmul.f32 %v2866, %v2964
    %v2966 = vrcp.pop %v2895
    %v2967 = vmul.f32 %v2868, %v2966
    %v2968 = vrcp.pop %v2897
    %v2969 = vmul.f32 %v2870, %v2968
    %v2970 = vrcp.pop %v2899
    %v2971 = vmul.f32 %v2872, %v2970
    %v2972 = vsel %vm2764, %v2955, %v2945
    %v2973 = vsel %vm2764, %v2957, %v2946
    %v2974 = vsel %vm2764, %v2959, %v2947
    %v2975 = vsel %vm2764, %v2961, %v2948
    %v2976 = vsel %vm2764, %v2963, %v2949
    %v2977 = vsel %vm2764, %v2965, %v2950
    %v2978 = vsel %vm2764, %v2967, %v2951
    %v2979 = vsel %vm2764, %v2969, %v2952
    %v2980 = vsel %vm2764, %v2971, %v2953
    %v2981 = vrcp.pop %v2910
    %v2982 = vmul.f32 %v2856, %v2981
    %v2983 = vrcp.pop %v2912
    %v2984 = vmul.f32 %v2858, %v2983
    %v2985 = vrcp.pop %v2914
    %v2986 = vmul.f32 %v2860, %v2985
    %v2987 = vrcp.pop %v2916
    %v2988 = vmul.f32 %v2862, %v2987
    %v2989 = vrcp.pop %v2918
    %v2990 = vmul.f32 %v2864, %v2989
    %v2991 = vrcp.pop %v2920
    %v2992 = vmul.f32 %v2866, %v2991
    %v2993 = vrcp.pop %v2922
    %v2994 = vmul.f32 %v2868, %v2993
    %v2995 = vrcp.pop %v2924
    %v2996 = vmul.f32 %v2870, %v2995
    %v2997 = vrcp.pop %v2926
    %v2998 = vmul.f32 %v2872, %v2997
    %v2999 = vsel %vm2773, %v2982, %v2972
    %v3000 = vsel %vm2773, %v2984, %v2973
    %v3001 = vsel %vm2773, %v2986, %v2974
    %v3002 = vsel %vm2773, %v2988, %v2975
    %v3003 = vsel %vm2773, %v2990, %v2976
    %v3004 = vsel %vm2773, %v2992, %v2977
    %v3005 = vsel %vm2773, %v2994, %v2978
    %v3006 = vsel %vm2773, %v2996, %v2979
    %v3007 = vsel %vm2773, %v2998, %v2980
    %3008 = vst [vmem:[%s4] sm:$0xff] %v2999
    %3009 = vst [vmem:[%s4 + $0x8] sm:$0xff] %v3000
    %3010 = vst [vmem:[%s4 + $0x10] sm:$0xff] %v3001
    %3011 = vst [vmem:[%s4 + $0x18] sm:$0xff] %v3002
    %3012 = vst [vmem:[%s4 + $0x20] sm:$0xff] %v3003
    %3013 = vst [vmem:[%s4 + $0x28] sm:$0xff] %v3004
    %3014 = vst [vmem:[%s4 + $0x30] sm:$0xff] %v3005
    %3015 = vst [vmem:[%s4 + $0x38] sm:$0xff] %v3006
    %3016 = vst [vmem:[%s4 + $0x40] sm:$0xff] %v3007
    // Predicated region
    $region22: #{decoder_rnn_forward.1} parent=1 // pred_check
      _
    $region23: #{decoder_rnn_forward.1} parent=1 // pred_check_branch
      %3018 = sbr.rel (0) target = $region25
    $region24: #{decoder_rnn_forward.1} parent=1 // pred_region
      _
    $region25: #{decoder_rnn_forward.1} parent=1 // pred_fallthru
      _
    // Predicated region
    $region26: #{decoder_rnn_forward.1} parent=1 // pred_check
      _
    $region27: #{decoder_rnn_forward.1} parent=1 // pred_check_branch
      %3020 = sbr.rel (0) target = $region29
    $region28: #{decoder_rnn_forward.1} parent=1 // pred_region
      _
    $region29: #{decoder_rnn_forward.1} parent=1 // pred_fallthru
      _
    // Predicated region
    $region30: #{decoder_rnn_forward.1} parent=1 // pred_check
      _
    $region31: #{decoder_rnn_forward.1} parent=1 // pred_check_branch
      %3022 = sbr.rel (0) target = $region33
    $region32: #{decoder_rnn_forward.1} parent=1 // pred_region
      _
    $region33: #{decoder_rnn_forward.1} parent=1 // pred_fallthru
      _
    // Predicated region
    $region34: #{decoder_rnn_forward.1} parent=1 // pred_check
      _
    $region35: #{decoder_rnn_forward.1} parent=1 // pred_check_branch
      %3024 = sbr.rel (0) target = $region37
    $region36: #{decoder_rnn_forward.1} parent=1 // pred_region
      _
    $region37: #{decoder_rnn_forward.1} parent=1 // pred_fallthru
      _
    // Predicated region
    $region38: #{decoder_rnn_forward.1} parent=1 // pred_check
      _
    $region39: #{decoder_rnn_forward.1} parent=1 // pred_check_branch
      %3026 = sbr.rel (0) target = $region41
    $region40: #{decoder_rnn_forward.1} parent=1 // pred_region
      _
    $region41: #{decoder_rnn_forward.1} parent=1 // pred_fallthru
      _
    // Predicated region
    $region42: #{decoder_rnn_forward.1} parent=1 // pred_check
      _
    $region43: #{decoder_rnn_forward.1} parent=1 // pred_check_branch
      %3028 = sbr.rel (0) target = $region45
    $region44: #{decoder_rnn_forward.1} parent=1 // pred_region
      _
    $region45: #{decoder_rnn_forward.1} parent=1 // pred_fallthru
      _
    %3029 = vsyncpa [#allocation5], 1

</llo_original>
